<compile_context>
chip_gen: v5e
topology: v5e:2x2
jax: 0.10.0
libtpu: 0.0.40
codegen_flags: <defaults>
</compile_context>

<pallas_src>
import functools

import jax
import jax.numpy as jnp
import numpy as np
from jax.experimental import pallas as pl
from jax.experimental.pallas import tpu as pltpu


# ----------------------------------------------------------------------------
# Static helpers (numpy, evaluated at trace time)
# ----------------------------------------------------------------------------
def _edge_masks(H, W):
    """(1, H*W) bf16 masks killing horizontal row-wrap for dx = -1 / +1 taps."""
    xs = np.tile(np.arange(W), H)
    ml = (xs >= 1).astype(np.float32).reshape(1, H * W)        # reading x-1
    mr = (xs <= W - 2).astype(np.float32).reshape(1, H * W)    # reading x+1
    return (jnp.asarray(ml, dtype=jnp.bfloat16),
            jnp.asarray(mr, dtype=jnp.bfloat16))


def _nearest_upsample_matrix(H, W, r):
    """(Hc*Wc, H*W) 0/1 matrix (bf16, exact): coarse @ U == nearest upsample."""
    Hc, Wc = H // r, W // r
    ys, xs = np.meshgrid(np.arange(H), np.arange(W), indexing="ij")
    src = ((ys // r) * Wc + (xs // r)).reshape(-1)
    u = np.zeros((Hc * Wc, H * W), np.float32)
    u[src, np.arange(H * W)] = 1.0
    return jnp.asarray(u, dtype=jnp.bfloat16)


def _compiler_params():
    return pltpu.CompilerParams(
        # batch axis is independent -> shards across the 2 TCs on v7x,
        # harmless no-op on single-TC v5e/v6e.
        dimension_semantics=("parallel",),
        vmem_limit_bytes=32 * 1024 * 1024,
    )


# ----------------------------------------------------------------------------
# In-kernel building blocks
# ----------------------------------------------------------------------------
def _conv3x3_one_matmul(in_refs, w, b, m_left, m_right, *, width, length,
                        guard):
    """Zero-padded 3x3 conv (stride 1) over a flattened spatial axis.

    in_refs : list of bf16 VMEM refs, each (C_i, length + 2*guard) with zero
              guard bands, guard >= width + 1.
    w       : (Cout, 9 * sum(C_i)) bf16 folded conv*BN weights (value).
    b       : (Cout, 1) f32 folded bias (value).
    m_left/m_right : (1, length) bf16 masks for the dx=-1 / dx=+1 taps
              (vertical OOB reads land in the zero guard band, so the
              centre-column taps need no mask).
    Returns : (Cout, length) f32.
    """
    pieces = []
    for dy in range(3):
        for dx in range(3):
            off = (dy - 1) * width + (dx - 1)
            s = guard + off
            m = m_left if dx == 0 else (m_right if dx == 2 else None)
            for ref in in_refs:
                piece = ref[:, s:s + length]
                pieces.append(piece if m is None else piece * m)
    # Single (Cout, 9*Cin) x (9*Cin, length) MXU matmul, bf16 operands,
    # f32 accumulation.
    patches = jnp.concatenate(pieces, axis=0)
    return jnp.dot(w, patches, preferred_element_type=jnp.float32) + b


def _softmax_channels(z):
    """Numerically stable softmax over the channel (sublane) axis of (C, L)."""
    z = z - jnp.max(z, axis=0, keepdims=True)
    e = jnp.exp(z)
    return e * pl.reciprocal(jnp.sum(e, axis=0, keepdims=True), approx=False)


# ----------------------------------------------------------------------------
# Fully fused Pallas kernel (one image per grid step)
# ----------------------------------------------------------------------------
def _bede_fused_kernel(xg_ref, xpg_ref,
                       w2_ref, b2_ref, w3_ref, b3_ref, w4_ref, b4_ref,
                       w1p_ref, b1p_ref, we_ref, be_ref, c1b_ref,
                       w5_ref, b5_ref, up_ref,
                       mlf_ref, mrf_ref, mlc_ref, mrc_ref,
                       o_ref,
                       xbf_ref, gated_ref, out2_ref, outk4_ref,
                       *, H, W, r, gin_f, gin_c, gs):
    Wc = W // r
    L = H * W
    Lc = (H // r) * Wc

    # bf16 copy of the guard-banded input: patch pieces are built in bf16,
    # cast once here (guard bands stay zero through the cast).
    xbf_ref[...] = xg_ref[...].astype(jnp.bfloat16)

    # Zero the guard bands of the internal scratch buffers (lane-aligned).
    zg = jnp.zeros((gated_ref.shape[0], gs), jnp.bfloat16)
    for ref in (gated_ref, out2_ref, outk4_ref):
        ref[:, 0:gs] = zg
        ref[:, gs + L:gs + L + gs] = zg

    mlf = mlf_ref[...]
    mrf = mrf_ref[...]
    mlc = mlc_ref[...]
    mrc = mrc_ref[...]

    # --- gate: k2 on pooled x, nearest-upsample, k3 on x, sigmoid product ---
    k2 = _conv3x3_one_matmul([xpg_ref], w2_ref[...], b2_ref[...], mlc, mrc,
                             width=Wc, length=Lc, guard=gin_c)        # (C, Lc)
    # nearest-neighbour upsample fused as an exact 0/1 bf16 matmul
    k2u = jnp.dot(k2.astype(jnp.bfloat16), up_ref[...],
                  preferred_element_type=jnp.float32)                 # (C, L)
    k3 = _conv3x3_one_matmul([xbf_ref], w3_ref[...], b3_ref[...], mlf, mrf,
                             width=W, length=L, guard=gin_f)          # (C, L)
    x = xg_ref[:, gin_f:gin_f + L]       # f32 identity (centre of guarded in)
    g = jax.nn.sigmoid(x + k2u) * jax.nn.sigmoid(x + k3)
    gated_ref[:, gs:gs + L] = g.astype(jnp.bfloat16)

    # --- k4 on gated ---------------------------------------------------------
    k4 = _conv3x3_one_matmul([gated_ref], w4_ref[...], b4_ref[...], mlf, mrf,
                             width=W, length=L, guard=gs)
    outk4_ref[:, gs:gs + L] = k4.astype(jnp.bfloat16)

    # --- branch2: (conv1 ∘ k1) folded + edge 1x1(+ReLU) + channel softmax ---
    xb = xbf_ref[:, gin_f:gin_f + L]                                  # bf16
    edge = jnp.maximum(
        jnp.dot(we_ref[...], xb, preferred_element_type=jnp.float32)
        + be_ref[...], 0.0)                                           # (C, L)
    z = _conv3x3_one_matmul([xbf_ref], w1p_ref[...], b1p_ref[...], mlf, mrf,
                            width=W, length=L, guard=gin_f)
    z = z + jnp.dot(c1b_ref[...], edge.astype(jnp.bfloat16),
                    preferred_element_type=jnp.float32)
    out2_ref[:, gs:gs + L] = _softmax_channels(z).astype(jnp.bfloat16)

    # --- k5 on concat(out2, out), ReLU, channel softmax ----------------------
    y = _conv3x3_one_matmul([out2_ref, outk4_ref], w5_ref[...], b5_ref[...],
                            mlf, mrf, width=W, length=L, guard=gs)
    y = jnp.maximum(y, 0.0)              # Dropout2d = identity in eval mode
    o_ref[...] = _softmax_channels(y)


# ----------------------------------------------------------------------------
# Forward pass
# ----------------------------------------------------------------------------
def bede_forward(x_nchw, params, *, pooling_r):
    N, Cin, H, W = x_nchw.shape
    r = pooling_r
    assert H % r == 0 and W % r == 0, "H, W must be divisible by pooling_r"
    Cout = params["k3_b"].shape[0]
    assert Cin == Cout, "BEDE requires inplanes == planes"

    L = H * W
    Hc, Wc = H // r, W // r
    Lc = Hc * Wc
    gin_f, gin_c = W + 1, Wc + 1               # input guard bands (HBM pads)
    gs = ((W + 1 + 127) // 128) * 128          # lane-aligned scratch guard

    mlf, mrf = _edge_masks(H, W)
    mlc, mrc = _edge_masks(Hc, Wc)
    upmat = _nearest_upsample_matrix(H, W, r)

    # Flattened NCHW views + zero guard bands on the lane (spatial) axis.
    x_flat = x_nchw.reshape(N, Cin, L)
    xg = jnp.pad(x_flat, ((0, 0), (0, 0), (gin_f, gin_f)))
    x_pool = x_nchw.reshape(N, Cin, Hc, r, Wc, r).mean(axis=(3, 5))
    xpg = jnp.pad(x_pool.reshape(N, Cin, Lc),
                  ((0, 0), (0, 0), (gin_c, gin_c))).astype(jnp.bfloat16)

    def im_spec(c, l):
        # per-image block: batch dim squeezed, last two dims = full array dims
        return pl.BlockSpec((None, c, l), lambda n: (n, 0, 0))

    def shared_spec(arr):
        return pl.BlockSpec(arr.shape, lambda n: (0,) * arr.ndim)

    shared = [params["k2_w"], params["k2_b"], params["k3_w"], params["k3_b"],
              params["k4_w"], params["k4_b"], params["k1p_w"], params["k1p_b"],
              params["edge_w"], params["edge_b"], params["c1b_w"],
              params["k5_w"], params["k5_b"], upmat, mlf, mrf, mlc, mrc]

    out = pl.pallas_call(
        functools.partial(_bede_fused_kernel, H=H, W=W, r=r,
                          gin_f=gin_f, gin_c=gin_c, gs=gs),
        out_shape=jax.ShapeDtypeStruct((N, Cout, L), jnp.float32),
        grid=(N,),
        in_specs=[im_spec(Cin, L + 2 * gin_f), im_spec(Cin, Lc + 2 * gin_c)]
                 + [shared_spec(a) for a in shared],
        out_specs=im_spec(Cout, L),
        scratch_shapes=[
            pltpu.VMEM((Cin, L + 2 * gin_f), jnp.bfloat16),   # bf16 x copy
            pltpu.VMEM((Cout, L + 2 * gs), jnp.bfloat16),     # gated
            pltpu.VMEM((Cout, L + 2 * gs), jnp.bfloat16),     # out2 (branch2)
            pltpu.VMEM((Cout, L + 2 * gs), jnp.bfloat16),     # out  (k4)
        ],
        compiler_params=_compiler_params(),
    )(xg, xpg, *shared)

    return out.reshape(N, Cout, H, W)


# ----------------------------------------------------------------------------
# Parameter construction (deterministic, BN folded into conv, eval mode)
# ----------------------------------------------------------------------------
def init_params(inplanes, planes, key):
    keys = iter(jax.random.split(key, 64))
    p = {}
    eps = 1e-5

    def fold_bn(name, cin, cout, k, conv_has_bias=False):
        w = 0.1 * jax.random.normal(next(keys), (cout, cin, k, k), jnp.float32)
        cb = (0.05 * jax.random.normal(next(keys), (cout,), jnp.float32)
              if conv_has_bias else jnp.zeros((cout,), jnp.float32))
        gamma = 1.0 + 0.1 * jax.random.normal(next(keys), (cout,), jnp.float32)
        beta = 0.1 * jax.random.normal(next(keys), (cout,), jnp.float32)
        mean = 0.1 * jax.random.normal(next(keys), (cout,), jnp.float32)
        var = jax.random.uniform(next(keys), (cout,), jnp.float32,
                                 minval=0.5, maxval=1.5)
        scale = gamma / jnp.sqrt(var + eps)
        wf = w * scale[:, None, None, None]
        bf = beta + scale * (cb - mean)
        p[name + "_wref"] = wf            # reference (f32, OIHW) copies
        p[name + "_bref"] = bf
        return wf, bf

    def to_mat3(wf):
        # (Cout, Cin, 3, 3) -> (Cout, 9*Cin), column index = (dy*3+dx)*Cin + c
        cout, cin = wf.shape[0], wf.shape[1]
        return jnp.transpose(wf, (0, 2, 3, 1)).reshape(cout, 9 * cin)

    k1_wf, k1_bf = fold_bn("k1", inplanes, planes, 3)
    k2_wf, k2_bf = fold_bn("k2", inplanes, planes, 3)
    k3_wf, k3_bf = fold_bn("k3", inplanes, planes, 3)
    k4_wf, k4_bf = fold_bn("k4", inplanes, planes, 3)
    k5_wf, k5_bf = fold_bn("k5", 2 * inplanes, planes, 3)
    edge_wf, edge_bf = fold_bn("edge", inplanes, planes, 1, conv_has_bias=True)

    # conv1: plain 1x1 conv with bias (no BN), split over the channel concat.
    w = 0.1 * jax.random.normal(next(keys), (planes, 2 * inplanes, 1, 1),
                                jnp.float32)
    b = 0.05 * jax.random.normal(next(keys), (planes,), jnp.float32)
    p["c1_wref"], p["c1_bref"] = w, b
    c1a = w[:, :planes, 0, 0]            # acts on k1 output
    c1b = w[:, planes:, 0, 0]            # acts on edgeconv output

    # kernel-ready tensors: 3x3 / 1x1 weights in bf16, biases as f32 columns
    p["k2_w"] = to_mat3(k2_wf).astype(jnp.bfloat16)
    p["k2_b"] = k2_bf.reshape(-1, 1)
    p["k3_w"] = to_mat3(k3_wf).astype(jnp.bfloat16)
    p["k3_b"] = k3_bf.reshape(-1, 1)
    p["k4_w"] = to_mat3(k4_wf).astype(jnp.bfloat16)
    p["k4_b"] = k4_bf.reshape(-1, 1)
    p["k5_w"] = to_mat3(k5_wf).astype(jnp.bfloat16)
    p["k5_b"] = k5_bf.reshape(-1, 1)
    # fold conv1's first half (c1a) into k1 (in f32, before the bf16 cast)
    p["k1p_w"] = (c1a @ to_mat3(k1_wf)).astype(jnp.bfloat16)
    p["k1p_b"] = (c1a @ k1_bf + b).reshape(-1, 1)
    p["edge_w"] = edge_wf[:, :, 0, 0].astype(jnp.bfloat16)
    p["edge_b"] = edge_bf.reshape(-1, 1)
    p["c1b_w"] = c1b.astype(jnp.bfloat16)
    return p


# ----------------------------------------------------------------------------
# Pure-JAX reference (eval-mode semantics of the PyTorch module)
# ----------------------------------------------------------------------------
def _reference_forward(x, params, *, pooling_r):
    dn = ("NCHW", "OIHW", "NCHW")
    hi = jax.lax.Precision.HIGHEST

    def conv3x3(v, w, b):
        y = jax.lax.conv_general_dilated(v, w, (1, 1), ((1, 1), (1, 1)),
                                         dimension_numbers=dn, precision=hi)
        return y + b.reshape(1, -1, 1, 1)

    def conv1x1(v, w, b):
        y = jax.lax.conv_general_dilated(v, w, (1, 1), "VALID",
                                         dimension_numbers=dn, precision=hi)
        return y + b.reshape(1, -1, 1, 1)

    N, C, H, W = x.shape
    r = pooling_r
    xp = x.reshape(N, C, H // r, r, W // r, r).mean(axis=(3, 5))
    k2 = conv3x3(xp, params["k2_wref"], params["k2_bref"])
    k2u = jnp.repeat(jnp.repeat(k2, r, axis=2), r, axis=3)
    k3 = conv3x3(x, params["k3_wref"], params["k3_bref"])
    gated = jax.nn.sigmoid(x + k2u) * jax.nn.sigmoid(x + k3)
    out = conv3x3(gated, params["k4_wref"], params["k4_bref"])
    out2 = conv3x3(x, params["k1_wref"], params["k1_bref"])
    edge = jax.nn.relu(conv1x1(x, params["edge_wref"], params["edge_bref"]))
    out2 = conv1x1(jnp.concatenate([out2, edge], axis=1),
                   params["c1_wref"], params["c1_bref"])
    out2 = jax.nn.softmax(out2, axis=1)
    out = conv3x3(jnp.concatenate([out2, out], axis=1),
                  params["k5_wref"], params["k5_bref"])
    out = jax.nn.relu(out)               # Dropout2d is identity in eval mode
    return jax.nn.softmax(out, axis=1)


if __name__ == "__main__":
    inplanes = planes = 4
    N, H, W = 2, 16, 16
    pooling_r = 2  # stride=1, padding=1, dilation=1, groups=1

    key = jax.random.PRNGKey(0)
    kx, kp = jax.random.split(key)
    x = jax.random.normal(kx, (N, inplanes, H, W), jnp.float32)
    params = init_params(inplanes, planes, kp)

    fwd = jax.jit(functools.partial(bede_forward, pooling_r=pooling_r))
    out = fwd(x, params)
    out = jax.block_until_ready(out)

    assert out.shape == (N, planes, H, W), out.shape
    assert bool(jnp.all(jnp.isfinite(out)))
    # softmax over channels -> sums to ~1
    assert bool(jnp.allclose(jnp.sum(out, axis=1), 1.0, atol=2e-2))

    # compare against a pure-JAX f32 reference of the eval-mode module
    ref = _reference_forward(x, params, pooling_r=pooling_r)
    max_err = float(jnp.max(jnp.abs(out - ref)))
    assert max_err < 5e-2, f"max abs error vs reference: {max_err}"

    print("KERNEL_OK")
</pallas_src>

<mosaic_0001>
module attributes {stable_mosaic.version = 11 : i64} {
  func.func @_bede_fused_kernel(%arg0: i32, %arg1: memref<1x4x290xf32, #tpu.memory_space<vmem>>, %arg2: memref<1x4x82xbf16, #tpu.memory_space<vmem>>, %arg3: memref<4x36xbf16, #tpu.memory_space<vmem>>, %arg4: memref<4x1xf32, #tpu.memory_space<vmem>>, %arg5: memref<4x36xbf16, #tpu.memory_space<vmem>>, %arg6: memref<4x1xf32, #tpu.memory_space<vmem>>, %arg7: memref<4x36xbf16, #tpu.memory_space<vmem>>, %arg8: memref<4x1xf32, #tpu.memory_space<vmem>>, %arg9: memref<4x36xbf16, #tpu.memory_space<vmem>>, %arg10: memref<4x1xf32, #tpu.memory_space<vmem>>, %arg11: memref<4x4xbf16, #tpu.memory_space<vmem>>, %arg12: memref<4x1xf32, #tpu.memory_space<vmem>>, %arg13: memref<4x4xbf16, #tpu.memory_space<vmem>>, %arg14: memref<4x72xbf16, #tpu.memory_space<vmem>>, %arg15: memref<4x1xf32, #tpu.memory_space<vmem>>, %arg16: memref<64x256xbf16, #tpu.memory_space<vmem>>, %arg17: memref<1x256xbf16, #tpu.memory_space<vmem>>, %arg18: memref<1x256xbf16, #tpu.memory_space<vmem>>, %arg19: memref<1x64xbf16, #tpu.memory_space<vmem>>, %arg20: memref<1x64xbf16, #tpu.memory_space<vmem>>, %arg21: memref<1x4x256xf32, #tpu.memory_space<vmem>>, %arg22: memref<4x290xbf16, #tpu.memory_space<vmem>>, %arg23: memref<4x512xbf16, #tpu.memory_space<vmem>>, %arg24: memref<4x512xbf16, #tpu.memory_space<vmem>>, %arg25: memref<4x512xbf16, #tpu.memory_space<vmem>>) attributes {dimension_semantics = [#tpu.dimension_semantics<parallel>], iteration_bounds = array<i64: 2>, scalar_prefetch = 0 : i64, scratch_operands = 4 : i64, tpu.core_type = #tpu.core_type<tc>, window_params = [{transform_indices = @transform_0, window_bounds = array<i64: 1, 4, 290>}, {transform_indices = @transform_1, window_bounds = array<i64: 1, 4, 82>}, {pipeline_mode = #tpu.pipeline_mode<synchronous>, transform_indices = @transform_2, window_bounds = array<i64: 4, 36>}, {pipeline_mode = #tpu.pipeline_mode<synchronous>, transform_indices = @transform_3, window_bounds = array<i64: 4, 1>}, {pipeline_mode = #tpu.pipeline_mode<synchronous>, transform_indices = @transform_4, window_bounds = array<i64: 4, 36>}, {pipeline_mode = #tpu.pipeline_mode<synchronous>, transform_indices = @transform_5, window_bounds = array<i64: 4, 1>}, {pipeline_mode = #tpu.pipeline_mode<synchronous>, transform_indices = @transform_6, window_bounds = array<i64: 4, 36>}, {pipeline_mode = #tpu.pipeline_mode<synchronous>, transform_indices = @transform_7, window_bounds = array<i64: 4, 1>}, {pipeline_mode = #tpu.pipeline_mode<synchronous>, transform_indices = @transform_8, window_bounds = array<i64: 4, 36>}, {pipeline_mode = #tpu.pipeline_mode<synchronous>, transform_indices = @transform_9, window_bounds = array<i64: 4, 1>}, {pipeline_mode = #tpu.pipeline_mode<synchronous>, transform_indices = @transform_10, window_bounds = array<i64: 4, 4>}, {pipeline_mode = #tpu.pipeline_mode<synchronous>, transform_indices = @transform_11, window_bounds = array<i64: 4, 1>}, {pipeline_mode = #tpu.pipeline_mode<synchronous>, transform_indices = @transform_12, window_bounds = array<i64: 4, 4>}, {pipeline_mode = #tpu.pipeline_mode<synchronous>, transform_indices = @transform_13, window_bounds = array<i64: 4, 72>}, {pipeline_mode = #tpu.pipeline_mode<synchronous>, transform_indices = @transform_14, window_bounds = array<i64: 4, 1>}, {pipeline_mode = #tpu.pipeline_mode<synchronous>, transform_indices = @transform_15, window_bounds = array<i64: 64, 256>}, {pipeline_mode = #tpu.pipeline_mode<synchronous>, transform_indices = @transform_16, window_bounds = array<i64: 1, 256>}, {pipeline_mode = #tpu.pipeline_mode<synchronous>, transform_indices = @transform_17, window_bounds = array<i64: 1, 256>}, {pipeline_mode = #tpu.pipeline_mode<synchronous>, transform_indices = @transform_18, window_bounds = array<i64: 1, 64>}, {pipeline_mode = #tpu.pipeline_mode<synchronous>, transform_indices = @transform_19, window_bounds = array<i64: 1, 64>}, {transform_indices = @transform_20, window_bounds = array<i64: 1, 4, 256>}]} {
    %c0 = arith.constant 0 : index
    %c0_0 = arith.constant 0 : index
    %c0_1 = arith.constant 0 : index
    %0 = vector.load %arg1[%c0, %c0_0, %c0_1] : memref<1x4x290xf32, #tpu.memory_space<vmem>>, vector<1x4x290xf32>
    %1 = vector.shape_cast %0 : vector<1x4x290xf32> to vector<4x290xf32>
    %2 = arith.truncf %1 : vector<4x290xf32> to vector<4x290xbf16>
    %c0_2 = arith.constant 0 : index
    %c0_3 = arith.constant 0 : index
    %3 = vector.load %arg22[%c0_2, %c0_3] : memref<4x290xbf16, #tpu.memory_space<vmem>>, vector<4x290xbf16>
    tpu.vector_store %arg22[%c0_2, %c0_3], %2 {strides = array<i32>} : memref<4x290xbf16, #tpu.memory_space<vmem>>, vector<4x290xbf16>,
    %cst = arith.constant 0.000000e+00 : bf16
    %4 = vector.broadcast %cst : bf16 to vector<4x128xbf16>
    %c0_4 = arith.constant 0 : index
    %c0_5 = arith.constant 0 : index
    %5 = vector.load %arg23[%c0_4, %c0_5] : memref<4x512xbf16, #tpu.memory_space<vmem>>, vector<4x128xbf16>
    tpu.vector_store %arg23[%c0_4, %c0_5], %4 {strides = array<i32>} : memref<4x512xbf16, #tpu.memory_space<vmem>>, vector<4x128xbf16>,
    %c0_6 = arith.constant 0 : index
    %c384 = arith.constant 384 : index
    %6 = vector.load %arg23[%c0_6, %c384] : memref<4x512xbf16, #tpu.memory_space<vmem>>, vector<4x128xbf16>
    tpu.vector_store %arg23[%c0_6, %c384], %4 {strides = array<i32>} : memref<4x512xbf16, #tpu.memory_space<vmem>>, vector<4x128xbf16>,
    %c0_7 = arith.constant 0 : index
    %c0_8 = arith.constant 0 : index
    %7 = vector.load %arg24[%c0_7, %c0_8] : memref<4x512xbf16, #tpu.memory_space<vmem>>, vector<4x128xbf16>
    tpu.vector_store %arg24[%c0_7, %c0_8], %4 {strides = array<i32>} : memref<4x512xbf16, #tpu.memory_space<vmem>>, vector<4x128xbf16>,
    %c0_9 = arith.constant 0 : index
    %c384_10 = arith.constant 384 : index
    %8 = vector.load %arg24[%c0_9, %c384_10] : memref<4x512xbf16, #tpu.memory_space<vmem>>, vector<4x128xbf16>
    tpu.vector_store %arg24[%c0_9, %c384_10], %4 {strides = array<i32>} : memref<4x512xbf16, #tpu.memory_space<vmem>>, vector<4x128xbf16>,
    %c0_11 = arith.constant 0 : index
    %c0_12 = arith.constant 0 : index
    %9 = vector.load %arg25[%c0_11, %c0_12] : memref<4x512xbf16, #tpu.memory_space<vmem>>, vector<4x128xbf16>
    tpu.vector_store %arg25[%c0_11, %c0_12], %4 {strides = array<i32>} : memref<4x512xbf16, #tpu.memory_space<vmem>>, vector<4x128xbf16>,
    %c0_13 = arith.constant 0 : index
    %c384_14 = arith.constant 384 : index
    %10 = vector.load %arg25[%c0_13, %c384_14] : memref<4x512xbf16, #tpu.memory_space<vmem>>, vector<4x128xbf16>
    tpu.vector_store %arg25[%c0_13, %c384_14], %4 {strides = array<i32>} : memref<4x512xbf16, #tpu.memory_space<vmem>>, vector<4x128xbf16>,
    %c0_15 = arith.constant 0 : index
    %c0_16 = arith.constant 0 : index
    %11 = vector.load %arg17[%c0_15, %c0_16] : memref<1x256xbf16, #tpu.memory_space<vmem>>, vector<1x256xbf16>
    %c0_17 = arith.constant 0 : index
    %c0_18 = arith.constant 0 : index
    %12 = vector.load %arg18[%c0_17, %c0_18] : memref<1x256xbf16, #tpu.memory_space<vmem>>, vector<1x256xbf16>
    %c0_19 = arith.constant 0 : index
    %c0_20 = arith.constant 0 : index
    %13 = vector.load %arg19[%c0_19, %c0_20] : memref<1x64xbf16, #tpu.memory_space<vmem>>, vector<1x64xbf16>
    %c0_21 = arith.constant 0 : index
    %c0_22 = arith.constant 0 : index
    %14 = vector.load %arg20[%c0_21, %c0_22] : memref<1x64xbf16, #tpu.memory_space<vmem>>, vector<1x64xbf16>
    %c0_23 = arith.constant 0 : index
    %c0_24 = arith.constant 0 : index
    %15 = vector.load %arg3[%c0_23, %c0_24] : memref<4x36xbf16, #tpu.memory_space<vmem>>, vector<4x36xbf16>
    %c0_25 = arith.constant 0 : index
    %c0_26 = arith.constant 0 : index
    %16 = vector.load %arg4[%c0_25, %c0_26] : memref<4x1xf32, #tpu.memory_space<vmem>>, vector<4x1xf32>
    %c0_27 = arith.constant 0 : index
    %c0_28 = arith.constant 0 : index
    %c0_29 = arith.constant 0 : index
    %17 = vector.load %arg2[%c0_27, %c0_28, %c0_29] : memref<1x4x82xbf16, #tpu.memory_space<vmem>>, vector<1x4x64xbf16>
    %18 = vector.shape_cast %17 : vector<1x4x64xbf16> to vector<4x64xbf16>
    %19 = vector.broadcast %13 : vector<1x64xbf16> to vector<4x64xbf16>
    %20 = arith.mulf %18, %19 : vector<4x64xbf16>
    %c0_30 = arith.constant 0 : index
    %c0_31 = arith.constant 0 : index
    %c1 = arith.constant 1 : index
    %21 = vector.load %arg2[%c0_30, %c0_31, %c1] : memref<1x4x82xbf16, #tpu.memory_space<vmem>>, vector<1x4x64xbf16>
    %22 = vector.shape_cast %21 : vector<1x4x64xbf16> to vector<4x64xbf16>
    %c0_32 = arith.constant 0 : index
    %c0_33 = arith.constant 0 : index
    %c2 = arith.constant 2 : index
    %23 = vector.load %arg2[%c0_32, %c0_33, %c2] : memref<1x4x82xbf16, #tpu.memory_space<vmem>>, vector<1x4x64xbf16>
    %24 = vector.shape_cast %23 : vector<1x4x64xbf16> to vector<4x64xbf16>
    %25 = vector.broadcast %14 : vector<1x64xbf16> to vector<4x64xbf16>
    %26 = arith.mulf %24, %25 : vector<4x64xbf16>
    %c0_34 = arith.constant 0 : index
    %c0_35 = arith.constant 0 : index
    %c8 = arith.constant 8 : index
    %27 = vector.load %arg2[%c0_34, %c0_35, %c8] : memref<1x4x82xbf16, #tpu.memory_space<vmem>>, vector<1x4x64xbf16>
    %28 = vector.shape_cast %27 : vector<1x4x64xbf16> to vector<4x64xbf16>
    %29 = vector.broadcast %13 : vector<1x64xbf16> to vector<4x64xbf16>
    %30 = arith.mulf %28, %29 : vector<4x64xbf16>
    %c0_36 = arith.constant 0 : index
    %c0_37 = arith.constant 0 : index
    %c9 = arith.constant 9 : index
    %31 = vector.load %arg2[%c0_36, %c0_37, %c9] : memref<1x4x82xbf16, #tpu.memory_space<vmem>>, vector<1x4x64xbf16>
    %32 = vector.shape_cast %31 : vector<1x4x64xbf16> to vector<4x64xbf16>
    %c0_38 = arith.constant 0 : index
    %c0_39 = arith.constant 0 : index
    %c10 = arith.constant 10 : index
    %33 = vector.load %arg2[%c0_38, %c0_39, %c10] : memref<1x4x82xbf16, #tpu.memory_space<vmem>>, vector<1x4x64xbf16>
    %34 = vector.shape_cast %33 : vector<1x4x64xbf16> to vector<4x64xbf16>
    %35 = vector.broadcast %14 : vector<1x64xbf16> to vector<4x64xbf16>
    %36 = arith.mulf %34, %35 : vector<4x64xbf16>
    %c0_40 = arith.constant 0 : index
    %c0_41 = arith.constant 0 : index
    %c16 = arith.constant 16 : index
    %37 = vector.load %arg2[%c0_40, %c0_41, %c16] : memref<1x4x82xbf16, #tpu.memory_space<vmem>>, vector<1x4x64xbf16>
    %38 = vector.shape_cast %37 : vector<1x4x64xbf16> to vector<4x64xbf16>
    %39 = vector.broadcast %13 : vector<1x64xbf16> to vector<4x64xbf16>
    %40 = arith.mulf %38, %39 : vector<4x64xbf16>
    %c0_42 = arith.constant 0 : index
    %c0_43 = arith.constant 0 : index
    %c17 = arith.constant 17 : index
    %41 = vector.load %arg2[%c0_42, %c0_43, %c17] : memref<1x4x82xbf16, #tpu.memory_space<vmem>>, vector<1x4x64xbf16>
    %42 = vector.shape_cast %41 : vector<1x4x64xbf16> to vector<4x64xbf16>
    %c0_44 = arith.constant 0 : index
    %c0_45 = arith.constant 0 : index
    %c18 = arith.constant 18 : index
    %43 = vector.load %arg2[%c0_44, %c0_45, %c18] : memref<1x4x82xbf16, #tpu.memory_space<vmem>>, vector<1x4x64xbf16>
    %44 = vector.shape_cast %43 : vector<1x4x64xbf16> to vector<4x64xbf16>
    %45 = vector.broadcast %14 : vector<1x64xbf16> to vector<4x64xbf16>
    %46 = arith.mulf %44, %45 : vector<4x64xbf16>
    %47 = tpu.concatenate %20, %22, %26, %30, %32, %36, %40, %42, %46 in 0 : vector<4x64xbf16>, vector<4x64xbf16>, vector<4x64xbf16>, vector<4x64xbf16>, vector<4x64xbf16>, vector<4x64xbf16>, vector<4x64xbf16>, vector<4x64xbf16>, vector<4x64xbf16> -> vector<36x64xbf16>
    %cst_46 = arith.constant dense<0.000000e+00> : vector<4x64xf32>
    %48 = tpu.matmul %15, %47, %cst_46 {dimension_numbers = #tpu.dot_dimension_numbers<[1], [0], [0], [1], [0, 0, 1, 1], [], []>} : vector<4x36xbf16>, vector<36x64xbf16>, vector<4x64xf32> -> vector<4x64xf32>
    %49 = vector.broadcast %16 : vector<4x1xf32> to vector<4x64xf32>
    %50 = arith.addf %48, %49 : vector<4x64xf32>
    %51 = arith.truncf %50 : vector<4x64xf32> to vector<4x64xbf16>
    %c0_47 = arith.constant 0 : index
    %c0_48 = arith.constant 0 : index
    %52 = vector.load %arg16[%c0_47, %c0_48] : memref<64x256xbf16, #tpu.memory_space<vmem>>, vector<64x256xbf16>
    %cst_49 = arith.constant dense<0.000000e+00> : vector<4x256xf32>
    %53 = tpu.matmul %51, %52, %cst_49 {dimension_numbers = #tpu.dot_dimension_numbers<[1], [0], [0], [1], [0, 0, 1, 1], [], []>} : vector<4x64xbf16>, vector<64x256xbf16>, vector<4x256xf32> -> vector<4x256xf32>
    %c0_50 = arith.constant 0 : index
    %c0_51 = arith.constant 0 : index
    %54 = vector.load %arg5[%c0_50, %c0_51] : memref<4x36xbf16, #tpu.memory_space<vmem>>, vector<4x36xbf16>
    %c0_52 = arith.constant 0 : index
    %c0_53 = arith.constant 0 : index
    %55 = vector.load %arg6[%c0_52, %c0_53] : memref<4x1xf32, #tpu.memory_space<vmem>>, vector<4x1xf32>
    %c0_54 = arith.constant 0 : index
    %c0_55 = arith.constant 0 : index
    %56 = vector.load %arg22[%c0_54, %c0_55] : memref<4x290xbf16, #tpu.memory_space<vmem>>, vector<4x256xbf16>
    %57 = vector.broadcast %11 : vector<1x256xbf16> to vector<4x256xbf16>
    %58 = arith.mulf %56, %57 : vector<4x256xbf16>
    %c0_56 = arith.constant 0 : index
    %c1_57 = arith.constant 1 : index
    %59 = vector.load %arg22[%c0_56, %c1_57] : memref<4x290xbf16, #tpu.memory_space<vmem>>, vector<4x256xbf16>
    %c0_58 = arith.constant 0 : index
    %c2_59 = arith.constant 2 : index
    %60 = vector.load %arg22[%c0_58, %c2_59] : memref<4x290xbf16, #tpu.memory_space<vmem>>, vector<4x256xbf16>
    %61 = vector.broadcast %12 : vector<1x256xbf16> to vector<4x256xbf16>
    %62 = arith.mulf %60, %61 : vector<4x256xbf16>
    %c0_60 = arith.constant 0 : index
    %c16_61 = arith.constant 16 : index
    %63 = vector.load %arg22[%c0_60, %c16_61] : memref<4x290xbf16, #tpu.memory_space<vmem>>, vector<4x256xbf16>
    %64 = vector.broadcast %11 : vector<1x256xbf16> to vector<4x256xbf16>
    %65 = arith.mulf %63, %64 : vector<4x256xbf16>
    %c0_62 = arith.constant 0 : index
    %c17_63 = arith.constant 17 : index
    %66 = vector.load %arg22[%c0_62, %c17_63] : memref<4x290xbf16, #tpu.memory_space<vmem>>, vector<4x256xbf16>
    %c0_64 = arith.constant 0 : index
    %c18_65 = arith.constant 18 : index
    %67 = vector.load %arg22[%c0_64, %c18_65] : memref<4x290xbf16, #tpu.memory_space<vmem>>, vector<4x256xbf16>
    %68 = vector.broadcast %12 : vector<1x256xbf16> to vector<4x256xbf16>
    %69 = arith.mulf %67, %68 : vector<4x256xbf16>
    %c0_66 = arith.constant 0 : index
    %c32 = arith.constant 32 : index
    %70 = vector.load %arg22[%c0_66, %c32] : memref<4x290xbf16, #tpu.memory_space<vmem>>, vector<4x256xbf16>
    %71 = vector.broadcast %11 : vector<1x256xbf16> to vector<4x256xbf16>
    %72 = arith.mulf %70, %71 : vector<4x256xbf16>
    %c0_67 = arith.constant 0 : index
    %c33 = arith.constant 33 : index
    %73 = vector.load %arg22[%c0_67, %c33] : memref<4x290xbf16, #tpu.memory_space<vmem>>, vector<4x256xbf16>
    %c0_68 = arith.constant 0 : index
    %c34 = arith.constant 34 : index
    %74 = vector.load %arg22[%c0_68, %c34] : memref<4x290xbf16, #tpu.memory_space<vmem>>, vector<4x256xbf16>
    %75 = vector.broadcast %12 : vector<1x256xbf16> to vector<4x256xbf16>
    %76 = arith.mulf %74, %75 : vector<4x256xbf16>
    %77 = tpu.concatenate %58, %59, %62, %65, %66, %69, %72, %73, %76 in 0 : vector<4x256xbf16>, vector<4x256xbf16>, vector<4x256xbf16>, vector<4x256xbf16>, vector<4x256xbf16>, vector<4x256xbf16>, vector<4x256xbf16>, vector<4x256xbf16>, vector<4x256xbf16> -> vector<36x256xbf16>
    %cst_69 = arith.constant dense<0.000000e+00> : vector<4x256xf32>
    %78 = tpu.matmul %54, %77, %cst_69 {dimension_numbers = #tpu.dot_dimension_numbers<[1], [0], [0], [1], [0, 0, 1, 1], [], []>} : vector<4x36xbf16>, vector<36x256xbf16>, vector<4x256xf32> -> vector<4x256xf32>
    %79 = vector.broadcast %55 : vector<4x1xf32> to vector<4x256xf32>
    %80 = arith.addf %78, %79 : vector<4x256xf32>
    %c0_70 = arith.constant 0 : index
    %c0_71 = arith.constant 0 : index
    %c17_72 = arith.constant 17 : index
    %81 = vector.load %arg1[%c0_70, %c0_71, %c17_72] : memref<1x4x290xf32, #tpu.memory_space<vmem>>, vector<1x4x256xf32>
    %82 = vector.shape_cast %81 : vector<1x4x256xf32> to vector<4x256xf32>
    %83 = arith.addf %82, %53 : vector<4x256xf32>
    %84 = arith.negf %83 : vector<4x256xf32>
    %85 = math.exp %84 : vector<4x256xf32>
    %cst_73 = arith.constant 1.000000e+00 : f32
    %86 = vector.broadcast %cst_73 : f32 to vector<4x256xf32>
    %87 = arith.addf %86, %85 : vector<4x256xf32>
    %88 = arith.divf %86, %87 : vector<4x256xf32>
    %89 = arith.addf %82, %80 : vector<4x256xf32>
    %90 = arith.negf %89 : vector<4x256xf32>
    %91 = math.exp %90 : vector<4x256xf32>
    %cst_74 = arith.constant 1.000000e+00 : f32
    %92 = vector.broadcast %cst_74 : f32 to vector<4x256xf32>
    %93 = arith.addf %92, %91 : vector<4x256xf32>
    %94 = arith.divf %92, %93 : vector<4x256xf32>
    %95 = arith.mulf %88, %94 : vector<4x256xf32>
    %96 = arith.truncf %95 : vector<4x256xf32> to vector<4x256xbf16>
    %c0_75 = arith.constant 0 : index
    %c128 = arith.constant 128 : index
    %97 = vector.load %arg23[%c0_75, %c128] : memref<4x512xbf16, #tpu.memory_space<vmem>>, vector<4x256xbf16>
    tpu.vector_store %arg23[%c0_75, %c128], %96 {strides = array<i32>} : memref<4x512xbf16, #tpu.memory_space<vmem>>, vector<4x256xbf16>,
    %c0_76 = arith.constant 0 : index
    %c0_77 = arith.constant 0 : index
    %98 = vector.load %arg7[%c0_76, %c0_77] : memref<4x36xbf16, #tpu.memory_space<vmem>>, vector<4x36xbf16>
    %c0_78 = arith.constant 0 : index
    %c0_79 = arith.constant 0 : index
    %99 = vector.load %arg8[%c0_78, %c0_79] : memref<4x1xf32, #tpu.memory_space<vmem>>, vector<4x1xf32>
    %c0_80 = arith.constant 0 : index
    %c111 = arith.constant 111 : index
    %100 = vector.load %arg23[%c0_80, %c111] : memref<4x512xbf16, #tpu.memory_space<vmem>>, vector<4x256xbf16>
    %101 = vector.broadcast %11 : vector<1x256xbf16> to vector<4x256xbf16>
    %102 = arith.mulf %100, %101 : vector<4x256xbf16>
    %c0_81 = arith.constant 0 : index
    %c112 = arith.constant 112 : index
    %103 = vector.load %arg23[%c0_81, %c112] : memref<4x512xbf16, #tpu.memory_space<vmem>>, vector<4x256xbf16>
    %c0_82 = arith.constant 0 : index
    %c113 = arith.constant 113 : index
    %104 = vector.load %arg23[%c0_82, %c113] : memref<4x512xbf16, #tpu.memory_space<vmem>>, vector<4x256xbf16>
    %105 = vector.broadcast %12 : vector<1x256xbf16> to vector<4x256xbf16>
    %106 = arith.mulf %104, %105 : vector<4x256xbf16>
    %c0_83 = arith.constant 0 : index
    %c127 = arith.constant 127 : index
    %107 = vector.load %arg23[%c0_83, %c127] : memref<4x512xbf16, #tpu.memory_space<vmem>>, vector<4x256xbf16>
    %108 = vector.broadcast %11 : vector<1x256xbf16> to vector<4x256xbf16>
    %109 = arith.mulf %107, %108 : vector<4x256xbf16>
    %c0_84 = arith.constant 0 : index
    %c128_85 = arith.constant 128 : index
    %110 = vector.load %arg23[%c0_84, %c128_85] : memref<4x512xbf16, #tpu.memory_space<vmem>>, vector<4x256xbf16>
    %c0_86 = arith.constant 0 : index
    %c129 = arith.constant 129 : index
    %111 = vector.load %arg23[%c0_86, %c129] : memref<4x512xbf16, #tpu.memory_space<vmem>>, vector<4x256xbf16>
    %112 = vector.broadcast %12 : vector<1x256xbf16> to vector<4x256xbf16>
    %113 = arith.mulf %111, %112 : vector<4x256xbf16>
    %c0_87 = arith.constant 0 : index
    %c143 = arith.constant 143 : index
    %114 = vector.load %arg23[%c0_87, %c143] : memref<4x512xbf16, #tpu.memory_space<vmem>>, vector<4x256xbf16>
    %115 = vector.broadcast %11 : vector<1x256xbf16> to vector<4x256xbf16>
    %116 = arith.mulf %114, %115 : vector<4x256xbf16>
    %c0_88 = arith.constant 0 : index
    %c144 = arith.constant 144 : index
    %117 = vector.load %arg23[%c0_88, %c144] : memref<4x512xbf16, #tpu.memory_space<vmem>>, vector<4x256xbf16>
    %c0_89 = arith.constant 0 : index
    %c145 = arith.constant 145 : index
    %118 = vector.load %arg23[%c0_89, %c145] : memref<4x512xbf16, #tpu.memory_space<vmem>>, vector<4x256xbf16>
    %119 = vector.broadcast %12 : vector<1x256xbf16> to vector<4x256xbf16>
    %120 = arith.mulf %118, %119 : vector<4x256xbf16>
    %121 = tpu.concatenate %102, %103, %106, %109, %110, %113, %116, %117, %120 in 0 : vector<4x256xbf16>, vector<4x256xbf16>, vector<4x256xbf16>, vector<4x256xbf16>, vector<4x256xbf16>, vector<4x256xbf16>, vector<4x256xbf16>, vector<4x256xbf16>, vector<4x256xbf16> -> vector<36x256xbf16>
    %cst_90 = arith.constant dense<0.000000e+00> : vector<4x256xf32>
    %122 = tpu.matmul %98, %121, %cst_90 {dimension_numbers = #tpu.dot_dimension_numbers<[1], [0], [0], [1], [0, 0, 1, 1], [], []>} : vector<4x36xbf16>, vector<36x256xbf16>, vector<4x256xf32> -> vector<4x256xf32>
    %123 = vector.broadcast %99 : vector<4x1xf32> to vector<4x256xf32>
    %124 = arith.addf %122, %123 : vector<4x256xf32>
    %125 = arith.truncf %124 : vector<4x256xf32> to vector<4x256xbf16>
    %c0_91 = arith.constant 0 : index
    %c128_92 = arith.constant 128 : index
    %126 = vector.load %arg25[%c0_91, %c128_92] : memref<4x512xbf16, #tpu.memory_space<vmem>>, vector<4x256xbf16>
    tpu.vector_store %arg25[%c0_91, %c128_92], %125 {strides = array<i32>} : memref<4x512xbf16, #tpu.memory_space<vmem>>, vector<4x256xbf16>,
    %c0_93 = arith.constant 0 : index
    %c17_94 = arith.constant 17 : index
    %127 = vector.load %arg22[%c0_93, %c17_94] : memref<4x290xbf16, #tpu.memory_space<vmem>>, vector<4x256xbf16>
    %c0_95 = arith.constant 0 : index
    %c0_96 = arith.constant 0 : index
    %128 = vector.load %arg11[%c0_95, %c0_96] : memref<4x4xbf16, #tpu.memory_space<vmem>>, vector<4x4xbf16>
    %cst_97 = arith.constant dense<0.000000e+00> : vector<4x256xf32>
    %129 = tpu.matmul %128, %127, %cst_97 {dimension_numbers = #tpu.dot_dimension_numbers<[1], [0], [0], [1], [0, 0, 1, 1], [], []>} : vector<4x4xbf16>, vector<4x256xbf16>, vector<4x256xf32> -> vector<4x256xf32>
    %c0_98 = arith.constant 0 : index
    %c0_99 = arith.constant 0 : index
    %130 = vector.load %arg12[%c0_98, %c0_99] : memref<4x1xf32, #tpu.memory_space<vmem>>, vector<4x1xf32>
    %131 = vector.broadcast %130 : vector<4x1xf32> to vector<4x256xf32>
    %132 = arith.addf %129, %131 : vector<4x256xf32>
    %cst_100 = arith.constant 0.000000e+00 : f32
    %133 = vector.broadcast %cst_100 : f32 to vector<4x256xf32>
    %134 = arith.maximumf %132, %133 : vector<4x256xf32>
    %c0_101 = arith.constant 0 : index
    %c0_102 = arith.constant 0 : index
    %135 = vector.load %arg9[%c0_101, %c0_102] : memref<4x36xbf16, #tpu.memory_space<vmem>>, vector<4x36xbf16>
    %c0_103 = arith.constant 0 : index
    %c0_104 = arith.constant 0 : index
    %136 = vector.load %arg10[%c0_103, %c0_104] : memref<4x1xf32, #tpu.memory_space<vmem>>, vector<4x1xf32>
    %c0_105 = arith.constant 0 : index
    %c0_106 = arith.constant 0 : index
    %137 = vector.load %arg22[%c0_105, %c0_106] : memref<4x290xbf16, #tpu.memory_space<vmem>>, vector<4x256xbf16>
    %138 = vector.broadcast %11 : vector<1x256xbf16> to vector<4x256xbf16>
    %139 = arith.mulf %137, %138 : vector<4x256xbf16>
    %c0_107 = arith.constant 0 : index
    %c1_108 = arith.constant 1 : index
    %140 = vector.load %arg22[%c0_107, %c1_108] : memref<4x290xbf16, #tpu.memory_space<vmem>>, vector<4x256xbf16>
    %c0_109 = arith.constant 0 : index
    %c2_110 = arith.constant 2 : index
    %141 = vector.load %arg22[%c0_109, %c2_110] : memref<4x290xbf16, #tpu.memory_space<vmem>>, vector<4x256xbf16>
    %142 = vector.broadcast %12 : vector<1x256xbf16> to vector<4x256xbf16>
    %143 = arith.mulf %141, %142 : vector<4x256xbf16>
    %c0_111 = arith.constant 0 : index
    %c16_112 = arith.constant 16 : index
    %144 = vector.load %arg22[%c0_111, %c16_112] : memref<4x290xbf16, #tpu.memory_space<vmem>>, vector<4x256xbf16>
    %145 = vector.broadcast %11 : vector<1x256xbf16> to vector<4x256xbf16>
    %146 = arith.mulf %144, %145 : vector<4x256xbf16>
    %c0_113 = arith.constant 0 : index
    %c17_114 = arith.constant 17 : index
    %147 = vector.load %arg22[%c0_113, %c17_114] : memref<4x290xbf16, #tpu.memory_space<vmem>>, vector<4x256xbf16>
    %c0_115 = arith.constant 0 : index
    %c18_116 = arith.constant 18 : index
    %148 = vector.load %arg22[%c0_115, %c18_116] : memref<4x290xbf16, #tpu.memory_space<vmem>>, vector<4x256xbf16>
    %149 = vector.broadcast %12 : vector<1x256xbf16> to vector<4x256xbf16>
    %150 = arith.mulf %148, %149 : vector<4x256xbf16>
    %c0_117 = arith.constant 0 : index
    %c32_118 = arith.constant 32 : index
    %151 = vector.load %arg22[%c0_117, %c32_118] : memref<4x290xbf16, #tpu.memory_space<vmem>>, vector<4x256xbf16>
    %152 = vector.broadcast %11 : vector<1x256xbf16> to vector<4x256xbf16>
    %153 = arith.mulf %151, %152 : vector<4x256xbf16>
    %c0_119 = arith.constant 0 : index
    %c33_120 = arith.constant 33 : index
    %154 = vector.load %arg22[%c0_119, %c33_120] : memref<4x290xbf16, #tpu.memory_space<vmem>>, vector<4x256xbf16>
    %c0_121 = arith.constant 0 : index
    %c34_122 = arith.constant 34 : index
    %155 = vector.load %arg22[%c0_121, %c34_122] : memref<4x290xbf16, #tpu.memory_space<vmem>>, vector<4x256xbf16>
    %156 = vector.broadcast %12 : vector<1x256xbf16> to vector<4x256xbf16>
    %157 = arith.mulf %155, %156 : vector<4x256xbf16>
    %158 = tpu.concatenate %139, %140, %143, %146, %147, %150, %153, %154, %157 in 0 : vector<4x256xbf16>, vector<4x256xbf16>, vector<4x256xbf16>, vector<4x256xbf16>, vector<4x256xbf16>, vector<4x256xbf16>, vector<4x256xbf16>, vector<4x256xbf16>, vector<4x256xbf16> -> vector<36x256xbf16>
    %cst_123 = arith.constant dense<0.000000e+00> : vector<4x256xf32>
    %159 = tpu.matmul %135, %158, %cst_123 {dimension_numbers = #tpu.dot_dimension_numbers<[1], [0], [0], [1], [0, 0, 1, 1], [], []>} : vector<4x36xbf16>, vector<36x256xbf16>, vector<4x256xf32> -> vector<4x256xf32>
    %160 = vector.broadcast %136 : vector<4x1xf32> to vector<4x256xf32>
    %161 = arith.addf %159, %160 : vector<4x256xf32>
    %c0_124 = arith.constant 0 : index
    %c0_125 = arith.constant 0 : index
    %162 = vector.load %arg13[%c0_124, %c0_125] : memref<4x4xbf16, #tpu.memory_space<vmem>>, vector<4x4xbf16>
    %163 = arith.truncf %134 : vector<4x256xf32> to vector<4x256xbf16>
    %cst_126 = arith.constant dense<0.000000e+00> : vector<4x256xf32>
    %164 = tpu.matmul %162, %163, %cst_126 {dimension_numbers = #tpu.dot_dimension_numbers<[1], [0], [0], [1], [0, 0, 1, 1], [], []>} : vector<4x4xbf16>, vector<4x256xbf16>, vector<4x256xf32> -> vector<4x256xf32>
    %165 = arith.addf %161, %164 : vector<4x256xf32>
    %cst_127 = arith.constant dense<0xFF800000> : vector<256xf32>
    %166 = vector.multi_reduction <maximumf>, %165, %cst_127 [0] : vector<4x256xf32> to vector<256xf32>
    %167 = vector.shape_cast %166 : vector<256xf32> to vector<1x256xf32>
    %168 = vector.broadcast %167 : vector<1x256xf32> to vector<4x256xf32>
    %169 = arith.subf %165, %168 : vector<4x256xf32>
    %170 = math.exp %169 : vector<4x256xf32>
    %cst_128 = arith.constant dense<0.000000e+00> : vector<256xf32>
    %171 = vector.multi_reduction <add>, %170, %cst_128 [0] : vector<4x256xf32> to vector<256xf32>
    %172 = vector.shape_cast %171 : vector<256xf32> to vector<1x256xf32>
    %173 = tpu.reciprocal %172 : vector<1x256xf32> -> vector<1x256xf32>
    %174 = vector.broadcast %173 : vector<1x256xf32> to vector<4x256xf32>
    %175 = arith.mulf %170, %174 : vector<4x256xf32>
    %176 = arith.truncf %175 : vector<4x256xf32> to vector<4x256xbf16>
    %c0_129 = arith.constant 0 : index
    %c128_130 = arith.constant 128 : index
    %177 = vector.load %arg24[%c0_129, %c128_130] : memref<4x512xbf16, #tpu.memory_space<vmem>>, vector<4x256xbf16>
    tpu.vector_store %arg24[%c0_129, %c128_130], %176 {strides = array<i32>} : memref<4x512xbf16, #tpu.memory_space<vmem>>, vector<4x256xbf16>,
    %c0_131 = arith.constant 0 : index
    %c0_132 = arith.constant 0 : index
    %178 = vector.load %arg14[%c0_131, %c0_132] : memref<4x72xbf16, #tpu.memory_space<vmem>>, vector<4x72xbf16>
    %c0_133 = arith.constant 0 : index
    %c0_134 = arith.constant 0 : index
    %179 = vector.load %arg15[%c0_133, %c0_134] : memref<4x1xf32, #tpu.memory_space<vmem>>, vector<4x1xf32>
    %c0_135 = arith.constant 0 : index
    %c111_136 = arith.constant 111 : index
    %180 = vector.load %arg24[%c0_135, %c111_136] : memref<4x512xbf16, #tpu.memory_space<vmem>>, vector<4x256xbf16>
    %181 = vector.broadcast %11 : vector<1x256xbf16> to vector<4x256xbf16>
    %182 = arith.mulf %180, %181 : vector<4x256xbf16>
    %c0_137 = arith.constant 0 : index
    %c111_138 = arith.constant 111 : index
    %183 = vector.load %arg25[%c0_137, %c111_138] : memref<4x512xbf16, #tpu.memory_space<vmem>>, vector<4x256xbf16>
    %184 = vector.broadcast %11 : vector<1x256xbf16> to vector<4x256xbf16>
    %185 = arith.mulf %183, %184 : vector<4x256xbf16>
    %c0_139 = arith.constant 0 : index
    %c112_140 = arith.constant 112 : index
    %186 = vector.load %arg24[%c0_139, %c112_140] : memref<4x512xbf16, #tpu.memory_space<vmem>>, vector<4x256xbf16>
    %c0_141 = arith.constant 0 : index
    %c112_142 = arith.constant 112 : index
    %187 = vector.load %arg25[%c0_141, %c112_142] : memref<4x512xbf16, #tpu.memory_space<vmem>>, vector<4x256xbf16>
    %c0_143 = arith.constant 0 : index
    %c113_144 = arith.constant 113 : index
    %188 = vector.load %arg24[%c0_143, %c113_144] : memref<4x512xbf16, #tpu.memory_space<vmem>>, vector<4x256xbf16>
    %189 = vector.broadcast %12 : vector<1x256xbf16> to vector<4x256xbf16>
    %190 = arith.mulf %188, %189 : vector<4x256xbf16>
    %c0_145 = arith.constant 0 : index
    %c113_146 = arith.constant 113 : index
    %191 = vector.load %arg25[%c0_145, %c113_146] : memref<4x512xbf16, #tpu.memory_space<vmem>>, vector<4x256xbf16>
    %192 = vector.broadcast %12 : vector<1x256xbf16> to vector<4x256xbf16>
    %193 = arith.mulf %191, %192 : vector<4x256xbf16>
    %c0_147 = arith.constant 0 : index
    %c127_148 = arith.constant 127 : index
    %194 = vector.load %arg24[%c0_147, %c127_148] : memref<4x512xbf16, #tpu.memory_space<vmem>>, vector<4x256xbf16>
    %195 = vector.broadcast %11 : vector<1x256xbf16> to vector<4x256xbf16>
    %196 = arith.mulf %194, %195 : vector<4x256xbf16>
    %c0_149 = arith.constant 0 : index
    %c127_150 = arith.constant 127 : index
    %197 = vector.load %arg25[%c0_149, %c127_150] : memref<4x512xbf16, #tpu.memory_space<vmem>>, vector<4x256xbf16>
    %198 = vector.broadcast %11 : vector<1x256xbf16> to vector<4x256xbf16>
    %199 = arith.mulf %197, %198 : vector<4x256xbf16>
    %c0_151 = arith.constant 0 : index
    %c128_152 = arith.constant 128 : index
    %200 = vector.load %arg24[%c0_151, %c128_152] : memref<4x512xbf16, #tpu.memory_space<vmem>>, vector<4x256xbf16>
    %c0_153 = arith.constant 0 : index
    %c128_154 = arith.constant 128 : index
    %201 = vector.load %arg25[%c0_153, %c128_154] : memref<4x512xbf16, #tpu.memory_space<vmem>>, vector<4x256xbf16>
    %c0_155 = arith.constant 0 : index
    %c129_156 = arith.constant 129 : index
    %202 = vector.load %arg24[%c0_155, %c129_156] : memref<4x512xbf16, #tpu.memory_space<vmem>>, vector<4x256xbf16>
    %203 = vector.broadcast %12 : vector<1x256xbf16> to vector<4x256xbf16>
    %204 = arith.mulf %202, %203 : vector<4x256xbf16>
    %c0_157 = arith.constant 0 : index
    %c129_158 = arith.constant 129 : index
    %205 = vector.load %arg25[%c0_157, %c129_158] : memref<4x512xbf16, #tpu.memory_space<vmem>>, vector<4x256xbf16>
    %206 = vector.broadcast %12 : vector<1x256xbf16> to vector<4x256xbf16>
    %207 = arith.mulf %205, %206 : vector<4x256xbf16>
    %c0_159 = arith.constant 0 : index
    %c143_160 = arith.constant 143 : index
    %208 = vector.load %arg24[%c0_159, %c143_160] : memref<4x512xbf16, #tpu.memory_space<vmem>>, vector<4x256xbf16>
    %209 = vector.broadcast %11 : vector<1x256xbf16> to vector<4x256xbf16>
    %210 = arith.mulf %208, %209 : vector<4x256xbf16>
    %c0_161 = arith.constant 0 : index
    %c143_162 = arith.constant 143 : index
    %211 = vector.load %arg25[%c0_161, %c143_162] : memref<4x512xbf16, #tpu.memory_space<vmem>>, vector<4x256xbf16>
    %212 = vector.broadcast %11 : vector<1x256xbf16> to vector<4x256xbf16>
    %213 = arith.mulf %211, %212 : vector<4x256xbf16>
    %c0_163 = arith.constant 0 : index
    %c144_164 = arith.constant 144 : index
    %214 = vector.load %arg24[%c0_163, %c144_164] : memref<4x512xbf16, #tpu.memory_space<vmem>>, vector<4x256xbf16>
    %c0_165 = arith.constant 0 : index
    %c144_166 = arith.constant 144 : index
    %215 = vector.load %arg25[%c0_165, %c144_166] : memref<4x512xbf16, #tpu.memory_space<vmem>>, vector<4x256xbf16>
    %c0_167 = arith.constant 0 : index
    %c145_168 = arith.constant 145 : index
    %216 = vector.load %arg24[%c0_167, %c145_168] : memref<4x512xbf16, #tpu.memory_space<vmem>>, vector<4x256xbf16>
    %217 = vector.broadcast %12 : vector<1x256xbf16> to vector<4x256xbf16>
    %218 = arith.mulf %216, %217 : vector<4x256xbf16>
    %c0_169 = arith.constant 0 : index
    %c145_170 = arith.constant 145 : index
    %219 = vector.load %arg25[%c0_169, %c145_170] : memref<4x512xbf16, #tpu.memory_space<vmem>>, vector<4x256xbf16>
    %220 = vector.broadcast %12 : vector<1x256xbf16> to vector<4x256xbf16>
    %221 = arith.mulf %219, %220 : vector<4x256xbf16>
    %222 = tpu.concatenate %182, %185, %186, %187, %190, %193, %196, %199, %200, %201, %204, %207, %210, %213, %214, %215 in 0 : vector<4x256xbf16>, vector<4x256xbf16>, vector<4x256xbf16>, vector<4x256xbf16>, vector<4x256xbf16>, vector<4x256xbf16>, vector<4x256xbf16>, vector<4x256xbf16>, vector<4x256xbf16>, vector<4x256xbf16>, vector<4x256xbf16>, vector<4x256xbf16>, vector<4x256xbf16>, vector<4x256xbf16>, vector<4x256xbf16>, vector<4x256xbf16> -> vector<64x256xbf16>
    %223 = tpu.concatenate %218, %221 in 0 : vector<4x256xbf16>, vector<4x256xbf16> -> vector<8x256xbf16>
    %224 = tpu.concatenate %222, %223 in 0 : vector<64x256xbf16>, vector<8x256xbf16> -> vector<72x256xbf16>
    %cst_171 = arith.constant dense<0.000000e+00> : vector<4x256xf32>
    %225 = tpu.matmul %178, %224, %cst_171 {dimension_numbers = #tpu.dot_dimension_numbers<[1], [0], [0], [1], [0, 0, 1, 1], [], []>} : vector<4x72xbf16>, vector<72x256xbf16>, vector<4x256xf32> -> vector<4x256xf32>
    %226 = vector.broadcast %179 : vector<4x1xf32> to vector<4x256xf32>
    %227 = arith.addf %225, %226 : vector<4x256xf32>
    %cst_172 = arith.constant 0.000000e+00 : f32
    %228 = vector.broadcast %cst_172 : f32 to vector<4x256xf32>
    %229 = arith.maximumf %227, %228 : vector<4x256xf32>
    %cst_173 = arith.constant dense<0xFF800000> : vector<256xf32>
    %230 = vector.multi_reduction <maximumf>, %229, %cst_173 [0] : vector<4x256xf32> to vector<256xf32>
    %231 = vector.shape_cast %230 : vector<256xf32> to vector<1x256xf32>
    %232 = vector.broadcast %231 : vector<1x256xf32> to vector<4x256xf32>
    %233 = arith.subf %229, %232 : vector<4x256xf32>
    %234 = math.exp %233 : vector<4x256xf32>
    %cst_174 = arith.constant dense<0.000000e+00> : vector<256xf32>
    %235 = vector.multi_reduction <add>, %234, %cst_174 [0] : vector<4x256xf32> to vector<256xf32>
    %236 = vector.shape_cast %235 : vector<256xf32> to vector<1x256xf32>
    %237 = tpu.reciprocal %236 : vector<1x256xf32> -> vector<1x256xf32>
    %238 = vector.broadcast %237 : vector<1x256xf32> to vector<4x256xf32>
    %239 = arith.mulf %234, %238 : vector<4x256xf32>
    %c0_175 = arith.constant 0 : index
    %c0_176 = arith.constant 0 : index
    %c0_177 = arith.constant 0 : index
    %240 = vector.load %arg21[%c0_175, %c0_176, %c0_177] : memref<1x4x256xf32, #tpu.memory_space<vmem>>, vector<1x4x256xf32>
    %241 = vector.shape_cast %240 : vector<1x4x256xf32> to vector<4x256xf32>
    %242 = vector.shape_cast %239 : vector<4x256xf32> to vector<1x4x256xf32>
    tpu.vector_store %arg21[%c0_175, %c0_176, %c0_177], %242 {strides = array<i32>} : memref<1x4x256xf32, #tpu.memory_space<vmem>>, vector<1x4x256xf32>,
    return
  }
  func.func @transform_0(%arg0: i32) -> (i32, i32, i32) {
    %c0_i32 = arith.constant 0 : i32
    %c0_i32_0 = arith.constant 0 : i32
    %c0_i32_1 = arith.constant 0 : i32
    return %arg0, %c0_i32, %c0_i32_0 : i32, i32, i32
  }
  func.func @transform_1(%arg0: i32) -> (i32, i32, i32) {
    %c0_i32 = arith.constant 0 : i32
    %c0_i32_0 = arith.constant 0 : i32
    %c0_i32_1 = arith.constant 0 : i32
    return %arg0, %c0_i32, %c0_i32_0 : i32, i32, i32
  }
  func.func @transform_2(%arg0: i32) -> (i32, i32) {
    %c0_i32 = arith.constant 0 : i32
    %c0_i32_0 = arith.constant 0 : i32
    %c0_i32_1 = arith.constant 0 : i32
    return %c0_i32, %c0_i32_0 : i32, i32
  }
  func.func @transform_3(%arg0: i32) -> (i32, i32) {
    %c0_i32 = arith.constant 0 : i32
    %c0_i32_0 = arith.constant 0 : i32
    %c0_i32_1 = arith.constant 0 : i32
    return %c0_i32, %c0_i32_0 : i32, i32
  }
  func.func @transform_4(%arg0: i32) -> (i32, i32) {
    %c0_i32 = arith.constant 0 : i32
    %c0_i32_0 = arith.constant 0 : i32
    %c0_i32_1 = arith.constant 0 : i32
    return %c0_i32, %c0_i32_0 : i32, i32
  }
  func.func @transform_5(%arg0: i32) -> (i32, i32) {
    %c0_i32 = arith.constant 0 : i32
    %c0_i32_0 = arith.constant 0 : i32
    %c0_i32_1 = arith.constant 0 : i32
    return %c0_i32, %c0_i32_0 : i32, i32
  }
  func.func @transform_6(%arg0: i32) -> (i32, i32) {
    %c0_i32 = arith.constant 0 : i32
    %c0_i32_0 = arith.constant 0 : i32
    %c0_i32_1 = arith.constant 0 : i32
    return %c0_i32, %c0_i32_0 : i32, i32
  }
  func.func @transform_7(%arg0: i32) -> (i32, i32) {
    %c0_i32 = arith.constant 0 : i32
    %c0_i32_0 = arith.constant 0 : i32
    %c0_i32_1 = arith.constant 0 : i32
    return %c0_i32, %c0_i32_0 : i32, i32
  }
  func.func @transform_8(%arg0: i32) -> (i32, i32) {
    %c0_i32 = arith.constant 0 : i32
    %c0_i32_0 = arith.constant 0 : i32
    %c0_i32_1 = arith.constant 0 : i32
    return %c0_i32, %c0_i32_0 : i32, i32
  }
  func.func @transform_9(%arg0: i32) -> (i32, i32) {
    %c0_i32 = arith.constant 0 : i32
    %c0_i32_0 = arith.constant 0 : i32
    %c0_i32_1 = arith.constant 0 : i32
    return %c0_i32, %c0_i32_0 : i32, i32
  }
  func.func @transform_10(%arg0: i32) -> (i32, i32) {
    %c0_i32 = arith.constant 0 : i32
    %c0_i32_0 = arith.constant 0 : i32
    %c0_i32_1 = arith.constant 0 : i32
    return %c0_i32, %c0_i32_0 : i32, i32
  }
  func.func @transform_11(%arg0: i32) -> (i32, i32) {
    %c0_i32 = arith.constant 0 : i32
    %c0_i32_0 = arith.constant 0 : i32
    %c0_i32_1 = arith.constant 0 : i32
    return %c0_i32, %c0_i32_0 : i32, i32
  }
  func.func @transform_12(%arg0: i32) -> (i32, i32) {
    %c0_i32 = arith.constant 0 : i32
    %c0_i32_0 = arith.constant 0 : i32
    %c0_i32_1 = arith.constant 0 : i32
    return %c0_i32, %c0_i32_0 : i32, i32
  }
  func.func @transform_13(%arg0: i32) -> (i32, i32) {
    %c0_i32 = arith.constant 0 : i32
    %c0_i32_0 = arith.constant 0 : i32
    %c0_i32_1 = arith.constant 0 : i32
    return %c0_i32, %c0_i32_0 : i32, i32
  }
  func.func @transform_14(%arg0: i32) -> (i32, i32) {
    %c0_i32 = arith.constant 0 : i32
    %c0_i32_0 = arith.constant 0 : i32
    %c0_i32_1 = arith.constant 0 : i32
    return %c0_i32, %c0_i32_0 : i32, i32
  }
  func.func @transform_15(%arg0: i32) -> (i32, i32) {
    %c0_i32 = arith.constant 0 : i32
    %c0_i32_0 = arith.constant 0 : i32
    %c0_i32_1 = arith.constant 0 : i32
    return %c0_i32, %c0_i32_0 : i32, i32
  }
  func.func @transform_16(%arg0: i32) -> (i32, i32) {
    %c0_i32 = arith.constant 0 : i32
    %c0_i32_0 = arith.constant 0 : i32
    %c0_i32_1 = arith.constant 0 : i32
    return %c0_i32, %c0_i32_0 : i32, i32
  }
  func.func @transform_17(%arg0: i32) -> (i32, i32) {
    %c0_i32 = arith.constant 0 : i32
    %c0_i32_0 = arith.constant 0 : i32
    %c0_i32_1 = arith.constant 0 : i32
    return %c0_i32, %c0_i32_0 : i32, i32
  }
  func.func @transform_18(%arg0: i32) -> (i32, i32) {
    %c0_i32 = arith.constant 0 : i32
    %c0_i32_0 = arith.constant 0 : i32
    %c0_i32_1 = arith.constant 0 : i32
    return %c0_i32, %c0_i32_0 : i32, i32
  }
  func.func @transform_19(%arg0: i32) -> (i32, i32) {
    %c0_i32 = arith.constant 0 : i32
    %c0_i32_0 = arith.constant 0 : i32
    %c0_i32_1 = arith.constant 0 : i32
    return %c0_i32, %c0_i32_0 : i32, i32
  }
  func.func @transform_20(%arg0: i32) -> (i32, i32, i32) {
    %c0_i32 = arith.constant 0 : i32
    %c0_i32_0 = arith.constant 0 : i32
    %c0_i32_1 = arith.constant 0 : i32
    return %arg0, %c0_i32, %c0_i32_0 : i32, i32, i32
  }
}

</mosaic_0001>

<llo_original>
// kernel: bede_forward.1
$region0: #{bede_forward.1}
  #allocation0 [shape = 'u32[]', space=smem, size = 0x4, offset = 0x4, fixed_abs, tag = 'smem constant byte address 0x4 - core index']
  #allocation1 [shape = 'u32[72,128]{1,0:T(1,128)}', space=vmem, size = 0x9000, scoped, tag = 'internal scratch']
  #allocation2 [shape = 'bf16[4,290]{1,0:T(4,128)(2,1)}', space=vmem, size = 0xc00, scoped, tag = 'scratch operand']
  #allocation3 [shape = 'bf16[4,512]{1,0:T(4,128)(2,1)}', space=vmem, size = 0x1000, scoped, tag = 'scratch operand']
  #allocation4 [shape = 'bf16[4,512]{1,0:T(4,128)(2,1)}', space=vmem, size = 0x1000, scoped, tag = 'scratch operand']
  #allocation5 [shape = 'bf16[4,512]{1,0:T(4,128)(2,1)}', space=vmem, size = 0x1000, scoped, tag = 'scratch operand']
  %s0 = inlined_call_operand.vmem [shape: f32[2,4,290], index: 0, kind: input, shape index: {}]
  %s1 = inlined_call_operand.vmem [shape: bf16[2,4,82], index: 1, kind: input, shape index: {}]
  %s2 = inlined_call_operand.vmem [shape: bf16[4,36], index: 2, kind: input, shape index: {}]
  %s3 = inlined_call_operand.vmem [shape: f32[4,1], index: 3, kind: input, shape index: {}]
  %s4 = inlined_call_operand.vmem [shape: bf16[4,36], index: 4, kind: input, shape index: {}]
  %s5 = inlined_call_operand.vmem [shape: f32[4,1], index: 5, kind: input, shape index: {}]
  %s6 = inlined_call_operand.vmem [shape: bf16[4,36], index: 6, kind: input, shape index: {}]
  %s7 = inlined_call_operand.vmem [shape: f32[4,1], index: 7, kind: input, shape index: {}]
  %s8 = inlined_call_operand.vmem [shape: bf16[4,36], index: 8, kind: input, shape index: {}]
  %s9 = inlined_call_operand.vmem [shape: f32[4,1], index: 9, kind: input, shape index: {}]
  %s10 = inlined_call_operand.vmem [shape: bf16[4,4], index: 10, kind: input, shape index: {}]
  %s11 = inlined_call_operand.vmem [shape: f32[4,1], index: 11, kind: input, shape index: {}]
  %s12 = inlined_call_operand.vmem [shape: bf16[4,4], index: 12, kind: input, shape index: {}]
  %s13 = inlined_call_operand.vmem [shape: bf16[4,72], index: 13, kind: input, shape index: {}]
  %s14 = inlined_call_operand.vmem [shape: f32[4,1], index: 14, kind: input, shape index: {}]
  %s15 = inlined_call_operand.vmem [shape: bf16[64,256], index: 15, kind: input, shape index: {}]
  %s16 = inlined_call_operand.vmem [shape: bf16[1,256], index: 16, kind: input, shape index: {}]
  %s17 = inlined_call_operand.vmem [shape: bf16[1,256], index: 17, kind: input, shape index: {}]
  %s18 = inlined_call_operand.vmem [shape: bf16[1,64], index: 18, kind: input, shape index: {}]
  %s19 = inlined_call_operand.vmem [shape: bf16[1,64], index: 19, kind: input, shape index: {}]
  %s20 = inlined_call_operand.vmem [shape: f32[2,4,256], index: 20, kind: output, shape index: {}]
  %s21 = sld [smem:[#allocation0]]
  $region113: #{bede_forward.1} parent=0
    _
  %s23 = ssub.s32 1, %s21
  %s24 = scalar_select 0, %s23, %s21
  loop: start=0, step=1, limit=4
  $region2: #{bede_forward.1} parent=0 // loop_pre_header
    _
  $region3: #{bede_forward.1} parent=0 // loop_header
    %s26 = sphi 0, %s30
    %p27 = scmp.ge.s32.totalorder %s26, 4
    %s36 = sphi 0, %s38
    %s39 = sphi 0, %s36
    %s40 = sphi 0, %s39
    %s56 = sphi 0, %s40
    %s62 = sphi 0, %s64
    %s65 = sphi 0, %s62
    %s66 = sphi 0, %s65
    %s82 = sphi 0, %s66
    %s86 = sphi 0, %s86
    %s88 = sphi 0, %s86
    %s89 = sphi 0, %s88
    %s103 = sphi 0, %s89
    %s107 = sphi 0, %s107
    %s109 = sphi 0, %s107
    %s110 = sphi 0, %s109
    %s124 = sphi 0, %s110
    %s128 = sphi 0, %s128
    %s130 = sphi 0, %s128
    %s131 = sphi 0, %s130
    %s145 = sphi 0, %s131
    %s149 = sphi 0, %s149
    %s151 = sphi 0, %s149
    %s152 = sphi 0, %s151
    %s166 = sphi 0, %s152
    %s170 = sphi 0, %s170
    %s172 = sphi 0, %s170
    %s173 = sphi 0, %s172
    %s187 = sphi 0, %s173
    %s191 = sphi 0, %s191
    %s193 = sphi 0, %s191
    %s194 = sphi 0, %s193
    %s208 = sphi 0, %s194
    %s212 = sphi 0, %s212
    %s214 = sphi 0, %s212
    %s215 = sphi 0, %s214
    %s229 = sphi 0, %s215
    %s233 = sphi 0, %s233
    %s235 = sphi 0, %s233
    %s236 = sphi 0, %s235
    %s250 = sphi 0, %s236
    %s254 = sphi 0, %s254
    %s256 = sphi 0, %s254
    %s257 = sphi 0, %s256
    %s271 = sphi 0, %s257
    %s275 = sphi 0, %s275
    %s277 = sphi 0, %s275
    %s278 = sphi 0, %s277
    %s292 = sphi 0, %s278
    %s296 = sphi 0, %s296
    %s298 = sphi 0, %s296
    %s299 = sphi 0, %s298
    %s313 = sphi 0, %s299
    %s317 = sphi 0, %s317
    %s319 = sphi 0, %s317
    %s320 = sphi 0, %s319
    %s334 = sphi 0, %s320
    %s338 = sphi 0, %s338
    %s340 = sphi 0, %s338
    %s341 = sphi 0, %s340
    %s355 = sphi 0, %s341
    %s359 = sphi 0, %s359
    %s361 = sphi 0, %s359
    %s362 = sphi 0, %s361
    %s376 = sphi 0, %s362
    %s380 = sphi 0, %s380
    %s382 = sphi 0, %s380
    %s383 = sphi 0, %s382
    %s397 = sphi 0, %s383
    %s401 = sphi 0, %s401
    %s403 = sphi 0, %s401
    %s404 = sphi 0, %s403
    %s418 = sphi 0, %s404
    %s422 = sphi 0, %s422
    %s424 = sphi 0, %s422
    %s425 = sphi 0, %s424
    %s439 = sphi 0, %s425
    %s443 = sphi 0, %s443
    %s445 = sphi 0, %s443
    %s446 = sphi 0, %s445
    %s460 = sphi 0, %s446
    %s466 = sphi 0, %s468
    %s469 = sphi 0, %s466
    %s470 = sphi 0, %s469
    %s486 = sphi 0, %s470
  $region4: #{bede_forward.1} parent=0 // loop_header_branch
    %29 = sbr.rel (%p27) target = $region8
  $region5: #{bede_forward.1} parent=0 // loop_body
    %s31 = ssub.s32 %s26, 1
    %s32 = ssub.s32 %s26, 2
    %s33 = sadd.s32 %s26, 1
    %s34 = ssub.s32 %s26, %s33
    %p35 = scmp.eq.s32.totalorder %s34, 0
    %s37 = sadd.s32 %s36, 1
    %s38 = scalar_select %p35, %s36, %s37
    %p41 = pneg %p35
    %p42 = scmp.eq.s32.totalorder %s26, 1
    %p43 = por %p41, %p42
    %p44 = scmp.ne.s32.totalorder %s36, %s39
    %p45 = scmp.eq.s32.totalorder %s26, 0
    %p46 = por %p44, %p45
    %p47 = scmp.ne.s32.totalorder %s36, %s39
    %p48 = scmp.eq.s32.totalorder %s31, 1
    %p49 = por %p47, %p48
    %p50 = scmp.ne.s32.totalorder %s39, %s40
    %p51 = scmp.eq.s32.totalorder %s31, 0
    %p52 = por %p50, %p51
    %p53 = scmp.ne.s32.totalorder %s39, %s40
    %p54 = scmp.eq.s32.totalorder %s32, 1
    %p55 = por %p53, %p54
    %p57 = scmp.ne.s32.totalorder %s40, %s56
    %p58 = scmp.eq.s32.totalorder %s32, 0
    %p59 = por %p57, %p58
    %s60 = ssub.s32 %s26, %s33
    %p61 = scmp.eq.s32.totalorder %s60, 0
    %s63 = sadd.s32 %s62, 1
    %s64 = scalar_select %p61, %s62, %s63
    %p67 = pneg %p61
    %p68 = scmp.eq.s32.totalorder %s26, 1
    %p69 = por %p67, %p68
    %p70 = scmp.ne.s32.totalorder %s62, %s65
    %p71 = scmp.eq.s32.totalorder %s26, 0
    %p72 = por %p70, %p71
    %p73 = scmp.ne.s32.totalorder %s62, %s65
    %p74 = scmp.eq.s32.totalorder %s31, 1
    %p75 = por %p73, %p74
    %p76 = scmp.ne.s32.totalorder %s65, %s66
    %p77 = scmp.eq.s32.totalorder %s31, 0
    %p78 = por %p76, %p77
    %p79 = scmp.ne.s32.totalorder %s65, %s66
    %p80 = scmp.eq.s32.totalorder %s32, 1
    %p81 = por %p79, %p80
    %p83 = scmp.ne.s32.totalorder %s66, %s82
    %p84 = scmp.eq.s32.totalorder %s32, 0
    %p85 = por %p83, %p84
    %s87 = sadd.s32 %s86, 1
    %p90 = scmp.eq.s32.totalorder %s26, 1
    %p91 = scmp.ne.s32.totalorder %s86, %s88
    %p92 = scmp.eq.s32.totalorder %s26, 0
    %p93 = por %p91, %p92
    %p94 = scmp.ne.s32.totalorder %s86, %s88
    %p95 = scmp.eq.s32.totalorder %s31, 1
    %p96 = por %p94, %p95
    %p97 = scmp.ne.s32.totalorder %s88, %s89
    %p98 = scmp.eq.s32.totalorder %s31, 0
    %p99 = por %p97, %p98
    %p100 = scmp.ne.s32.totalorder %s88, %s89
    %p101 = scmp.eq.s32.totalorder %s32, 1
    %p102 = por %p100, %p101
    %p104 = scmp.ne.s32.totalorder %s89, %s103
    %p105 = scmp.eq.s32.totalorder %s32, 0
    %p106 = por %p104, %p105
    %s108 = sadd.s32 %s107, 1
    %p111 = scmp.eq.s32.totalorder %s26, 1
    %p112 = scmp.ne.s32.totalorder %s107, %s109
    %p113 = scmp.eq.s32.totalorder %s26, 0
    %p114 = por %p112, %p113
    %p115 = scmp.ne.s32.totalorder %s107, %s109
    %p116 = scmp.eq.s32.totalorder %s31, 1
    %p117 = por %p115, %p116
    %p118 = scmp.ne.s32.totalorder %s109, %s110
    %p119 = scmp.eq.s32.totalorder %s31, 0
    %p120 = por %p118, %p119
    %p121 = scmp.ne.s32.totalorder %s109, %s110
    %p122 = scmp.eq.s32.totalorder %s32, 1
    %p123 = por %p121, %p122
    %p125 = scmp.ne.s32.totalorder %s110, %s124
    %p126 = scmp.eq.s32.totalorder %s32, 0
    %p127 = por %p125, %p126
    %s129 = sadd.s32 %s128, 1
    %p132 = scmp.eq.s32.totalorder %s26, 1
    %p133 = scmp.ne.s32.totalorder %s128, %s130
    %p134 = scmp.eq.s32.totalorder %s26, 0
    %p135 = por %p133, %p134
    %p136 = scmp.ne.s32.totalorder %s128, %s130
    %p137 = scmp.eq.s32.totalorder %s31, 1
    %p138 = por %p136, %p137
    %p139 = scmp.ne.s32.totalorder %s130, %s131
    %p140 = scmp.eq.s32.totalorder %s31, 0
    %p141 = por %p139, %p140
    %p142 = scmp.ne.s32.totalorder %s130, %s131
    %p143 = scmp.eq.s32.totalorder %s32, 1
    %p144 = por %p142, %p143
    %p146 = scmp.ne.s32.totalorder %s131, %s145
    %p147 = scmp.eq.s32.totalorder %s32, 0
    %p148 = por %p146, %p147
    %s150 = sadd.s32 %s149, 1
    %p153 = scmp.eq.s32.totalorder %s26, 1
    %p154 = scmp.ne.s32.totalorder %s149, %s151
    %p155 = scmp.eq.s32.totalorder %s26, 0
    %p156 = por %p154, %p155
    %p157 = scmp.ne.s32.totalorder %s149, %s151
    %p158 = scmp.eq.s32.totalorder %s31, 1
    %p159 = por %p157, %p158
    %p160 = scmp.ne.s32.totalorder %s151, %s152
    %p161 = scmp.eq.s32.totalorder %s31, 0
    %p162 = por %p160, %p161
    %p163 = scmp.ne.s32.totalorder %s151, %s152
    %p164 = scmp.eq.s32.totalorder %s32, 1
    %p165 = por %p163, %p164
    %p167 = scmp.ne.s32.totalorder %s152, %s166
    %p168 = scmp.eq.s32.totalorder %s32, 0
    %p169 = por %p167, %p168
    %s171 = sadd.s32 %s170, 1
    %p174 = scmp.eq.s32.totalorder %s26, 1
    %p175 = scmp.ne.s32.totalorder %s170, %s172
    %p176 = scmp.eq.s32.totalorder %s26, 0
    %p177 = por %p175, %p176
    %p178 = scmp.ne.s32.totalorder %s170, %s172
    %p179 = scmp.eq.s32.totalorder %s31, 1
    %p180 = por %p178, %p179
    %p181 = scmp.ne.s32.totalorder %s172, %s173
    %p182 = scmp.eq.s32.totalorder %s31, 0
    %p183 = por %p181, %p182
    %p184 = scmp.ne.s32.totalorder %s172, %s173
    %p185 = scmp.eq.s32.totalorder %s32, 1
    %p186 = por %p184, %p185
    %p188 = scmp.ne.s32.totalorder %s173, %s187
    %p189 = scmp.eq.s32.totalorder %s32, 0
    %p190 = por %p188, %p189
    %s192 = sadd.s32 %s191, 1
    %p195 = scmp.eq.s32.totalorder %s26, 1
    %p196 = scmp.ne.s32.totalorder %s191, %s193
    %p197 = scmp.eq.s32.totalorder %s26, 0
    %p198 = por %p196, %p197
    %p199 = scmp.ne.s32.totalorder %s191, %s193
    %p200 = scmp.eq.s32.totalorder %s31, 1
    %p201 = por %p199, %p200
    %p202 = scmp.ne.s32.totalorder %s193, %s194
    %p203 = scmp.eq.s32.totalorder %s31, 0
    %p204 = por %p202, %p203
    %p205 = scmp.ne.s32.totalorder %s193, %s194
    %p206 = scmp.eq.s32.totalorder %s32, 1
    %p207 = por %p205, %p206
    %p209 = scmp.ne.s32.totalorder %s194, %s208
    %p210 = scmp.eq.s32.totalorder %s32, 0
    %p211 = por %p209, %p210
    %s213 = sadd.s32 %s212, 1
    %p216 = scmp.eq.s32.totalorder %s26, 1
    %p217 = scmp.ne.s32.totalorder %s212, %s214
    %p218 = scmp.eq.s32.totalorder %s26, 0
    %p219 = por %p217, %p218
    %p220 = scmp.ne.s32.totalorder %s212, %s214
    %p221 = scmp.eq.s32.totalorder %s31, 1
    %p222 = por %p220, %p221
    %p223 = scmp.ne.s32.totalorder %s214, %s215
    %p224 = scmp.eq.s32.totalorder %s31, 0
    %p225 = por %p223, %p224
    %p226 = scmp.ne.s32.totalorder %s214, %s215
    %p227 = scmp.eq.s32.totalorder %s32, 1
    %p228 = por %p226, %p227
    %p230 = scmp.ne.s32.totalorder %s215, %s229
    %p231 = scmp.eq.s32.totalorder %s32, 0
    %p232 = por %p230, %p231
    %s234 = sadd.s32 %s233, 1
    %p237 = scmp.eq.s32.totalorder %s26, 1
    %p238 = scmp.ne.s32.totalorder %s233, %s235
    %p239 = scmp.eq.s32.totalorder %s26, 0
    %p240 = por %p238, %p239
    %p241 = scmp.ne.s32.totalorder %s233, %s235
    %p242 = scmp.eq.s32.totalorder %s31, 1
    %p243 = por %p241, %p242
    %p244 = scmp.ne.s32.totalorder %s235, %s236
    %p245 = scmp.eq.s32.totalorder %s31, 0
    %p246 = por %p244, %p245
    %p247 = scmp.ne.s32.totalorder %s235, %s236
    %p248 = scmp.eq.s32.totalorder %s32, 1
    %p249 = por %p247, %p248
    %p251 = scmp.ne.s32.totalorder %s236, %s250
    %p252 = scmp.eq.s32.totalorder %s32, 0
    %p253 = por %p251, %p252
    %s255 = sadd.s32 %s254, 1
    %p258 = scmp.eq.s32.totalorder %s26, 1
    %p259 = scmp.ne.s32.totalorder %s254, %s256
    %p260 = scmp.eq.s32.totalorder %s26, 0
    %p261 = por %p259, %p260
    %p262 = scmp.ne.s32.totalorder %s254, %s256
    %p263 = scmp.eq.s32.totalorder %s31, 1
    %p264 = por %p262, %p263
    %p265 = scmp.ne.s32.totalorder %s256, %s257
    %p266 = scmp.eq.s32.totalorder %s31, 0
    %p267 = por %p265, %p266
    %p268 = scmp.ne.s32.totalorder %s256, %s257
    %p269 = scmp.eq.s32.totalorder %s32, 1
    %p270 = por %p268, %p269
    %p272 = scmp.ne.s32.totalorder %s257, %s271
    %p273 = scmp.eq.s32.totalorder %s32, 0
    %p274 = por %p272, %p273
    %s276 = sadd.s32 %s275, 1
    %p279 = scmp.eq.s32.totalorder %s26, 1
    %p280 = scmp.ne.s32.totalorder %s275, %s277
    %p281 = scmp.eq.s32.totalorder %s26, 0
    %p282 = por %p280, %p281
    %p283 = scmp.ne.s32.totalorder %s275, %s277
    %p284 = scmp.eq.s32.totalorder %s31, 1
    %p285 = por %p283, %p284
    %p286 = scmp.ne.s32.totalorder %s277, %s278
    %p287 = scmp.eq.s32.totalorder %s31, 0
    %p288 = por %p286, %p287
    %p289 = scmp.ne.s32.totalorder %s277, %s278
    %p290 = scmp.eq.s32.totalorder %s32, 1
    %p291 = por %p289, %p290
    %p293 = scmp.ne.s32.totalorder %s278, %s292
    %p294 = scmp.eq.s32.totalorder %s32, 0
    %p295 = por %p293, %p294
    %s297 = sadd.s32 %s296, 1
    %p300 = scmp.eq.s32.totalorder %s26, 1
    %p301 = scmp.ne.s32.totalorder %s296, %s298
    %p302 = scmp.eq.s32.totalorder %s26, 0
    %p303 = por %p301, %p302
    %p304 = scmp.ne.s32.totalorder %s296, %s298
    %p305 = scmp.eq.s32.totalorder %s31, 1
    %p306 = por %p304, %p305
    %p307 = scmp.ne.s32.totalorder %s298, %s299
    %p308 = scmp.eq.s32.totalorder %s31, 0
    %p309 = por %p307, %p308
    %p310 = scmp.ne.s32.totalorder %s298, %s299
    %p311 = scmp.eq.s32.totalorder %s32, 1
    %p312 = por %p310, %p311
    %p314 = scmp.ne.s32.totalorder %s299, %s313
    %p315 = scmp.eq.s32.totalorder %s32, 0
    %p316 = por %p314, %p315
    %s318 = sadd.s32 %s317, 1
    %p321 = scmp.eq.s32.totalorder %s26, 1
    %p322 = scmp.ne.s32.totalorder %s317, %s319
    %p323 = scmp.eq.s32.totalorder %s26, 0
    %p324 = por %p322, %p323
    %p325 = scmp.ne.s32.totalorder %s317, %s319
    %p326 = scmp.eq.s32.totalorder %s31, 1
    %p327 = por %p325, %p326
    %p328 = scmp.ne.s32.totalorder %s319, %s320
    %p329 = scmp.eq.s32.totalorder %s31, 0
    %p330 = por %p328, %p329
    %p331 = scmp.ne.s32.totalorder %s319, %s320
    %p332 = scmp.eq.s32.totalorder %s32, 1
    %p333 = por %p331, %p332
    %p335 = scmp.ne.s32.totalorder %s320, %s334
    %p336 = scmp.eq.s32.totalorder %s32, 0
    %p337 = por %p335, %p336
    %s339 = sadd.s32 %s338, 1
    %p342 = scmp.eq.s32.totalorder %s26, 1
    %p343 = scmp.ne.s32.totalorder %s338, %s340
    %p344 = scmp.eq.s32.totalorder %s26, 0
    %p345 = por %p343, %p344
    %p346 = scmp.ne.s32.totalorder %s338, %s340
    %p347 = scmp.eq.s32.totalorder %s31, 1
    %p348 = por %p346, %p347
    %p349 = scmp.ne.s32.totalorder %s340, %s341
    %p350 = scmp.eq.s32.totalorder %s31, 0
    %p351 = por %p349, %p350
    %p352 = scmp.ne.s32.totalorder %s340, %s341
    %p353 = scmp.eq.s32.totalorder %s32, 1
    %p354 = por %p352, %p353
    %p356 = scmp.ne.s32.totalorder %s341, %s355
    %p357 = scmp.eq.s32.totalorder %s32, 0
    %p358 = por %p356, %p357
    %s360 = sadd.s32 %s359, 1
    %p363 = scmp.eq.s32.totalorder %s26, 1
    %p364 = scmp.ne.s32.totalorder %s359, %s361
    %p365 = scmp.eq.s32.totalorder %s26, 0
    %p366 = por %p364, %p365
    %p367 = scmp.ne.s32.totalorder %s359, %s361
    %p368 = scmp.eq.s32.totalorder %s31, 1
    %p369 = por %p367, %p368
    %p370 = scmp.ne.s32.totalorder %s361, %s362
    %p371 = scmp.eq.s32.totalorder %s31, 0
    %p372 = por %p370, %p371
    %p373 = scmp.ne.s32.totalorder %s361, %s362
    %p374 = scmp.eq.s32.totalorder %s32, 1
    %p375 = por %p373, %p374
    %p377 = scmp.ne.s32.totalorder %s362, %s376
    %p378 = scmp.eq.s32.totalorder %s32, 0
    %p379 = por %p377, %p378
    %s381 = sadd.s32 %s380, 1
    %p384 = scmp.eq.s32.totalorder %s26, 1
    %p385 = scmp.ne.s32.totalorder %s380, %s382
    %p386 = scmp.eq.s32.totalorder %s26, 0
    %p387 = por %p385, %p386
    %p388 = scmp.ne.s32.totalorder %s380, %s382
    %p389 = scmp.eq.s32.totalorder %s31, 1
    %p390 = por %p388, %p389
    %p391 = scmp.ne.s32.totalorder %s382, %s383
    %p392 = scmp.eq.s32.totalorder %s31, 0
    %p393 = por %p391, %p392
    %p394 = scmp.ne.s32.totalorder %s382, %s383
    %p395 = scmp.eq.s32.totalorder %s32, 1
    %p396 = por %p394, %p395
    %p398 = scmp.ne.s32.totalorder %s383, %s397
    %p399 = scmp.eq.s32.totalorder %s32, 0
    %p400 = por %p398, %p399
    %s402 = sadd.s32 %s401, 1
    %p405 = scmp.eq.s32.totalorder %s26, 1
    %p406 = scmp.ne.s32.totalorder %s401, %s403
    %p407 = scmp.eq.s32.totalorder %s26, 0
    %p408 = por %p406, %p407
    %p409 = scmp.ne.s32.totalorder %s401, %s403
    %p410 = scmp.eq.s32.totalorder %s31, 1
    %p411 = por %p409, %p410
    %p412 = scmp.ne.s32.totalorder %s403, %s404
    %p413 = scmp.eq.s32.totalorder %s31, 0
    %p414 = por %p412, %p413
    %p415 = scmp.ne.s32.totalorder %s403, %s404
    %p416 = scmp.eq.s32.totalorder %s32, 1
    %p417 = por %p415, %p416
    %p419 = scmp.ne.s32.totalorder %s404, %s418
    %p420 = scmp.eq.s32.totalorder %s32, 0
    %p421 = por %p419, %p420
    %s423 = sadd.s32 %s422, 1
    %p426 = scmp.eq.s32.totalorder %s26, 1
    %p427 = scmp.ne.s32.totalorder %s422, %s424
    %p428 = scmp.eq.s32.totalorder %s26, 0
    %p429 = por %p427, %p428
    %p430 = scmp.ne.s32.totalorder %s422, %s424
    %p431 = scmp.eq.s32.totalorder %s31, 1
    %p432 = por %p430, %p431
    %p433 = scmp.ne.s32.totalorder %s424, %s425
    %p434 = scmp.eq.s32.totalorder %s31, 0
    %p435 = por %p433, %p434
    %p436 = scmp.ne.s32.totalorder %s424, %s425
    %p437 = scmp.eq.s32.totalorder %s32, 1
    %p438 = por %p436, %p437
    %p440 = scmp.ne.s32.totalorder %s425, %s439
    %p441 = scmp.eq.s32.totalorder %s32, 0
    %p442 = por %p440, %p441
    %s444 = sadd.s32 %s443, 1
    %p447 = scmp.eq.s32.totalorder %s26, 1
    %p448 = scmp.ne.s32.totalorder %s443, %s445
    %p449 = scmp.eq.s32.totalorder %s26, 0
    %p450 = por %p448, %p449
    %p451 = scmp.ne.s32.totalorder %s443, %s445
    %p452 = scmp.eq.s32.totalorder %s31, 1
    %p453 = por %p451, %p452
    %p454 = scmp.ne.s32.totalorder %s445, %s446
    %p455 = scmp.eq.s32.totalorder %s31, 0
    %p456 = por %p454, %p455
    %p457 = scmp.ne.s32.totalorder %s445, %s446
    %p458 = scmp.eq.s32.totalorder %s32, 1
    %p459 = por %p457, %p458
    %p461 = scmp.ne.s32.totalorder %s446, %s460
    %p462 = scmp.eq.s32.totalorder %s32, 0
    %p463 = por %p461, %p462
    %s464 = ssub.s32 %s26, %s33
    %p465 = scmp.eq.s32.totalorder %s464, 0
    %s467 = sadd.s32 %s466, 1
    %s468 = scalar_select %p465, %s466, %s467
    %p471 = pneg %p465
    %p472 = scmp.eq.s32.totalorder %s26, 1
    %p473 = por %p471, %p472
    %p474 = scmp.ne.s32.totalorder %s466, %s469
    %p475 = scmp.eq.s32.totalorder %s26, 0
    %p476 = por %p474, %p475
    %p477 = scmp.ne.s32.totalorder %s466, %s469
    %p478 = scmp.eq.s32.totalorder %s31, 1
    %p479 = por %p477, %p478
    %p480 = scmp.ne.s32.totalorder %s469, %s470
    %p481 = scmp.eq.s32.totalorder %s31, 0
    %p482 = por %p480, %p481
    %p483 = scmp.ne.s32.totalorder %s469, %s470
    %p484 = scmp.eq.s32.totalorder %s32, 1
    %p485 = por %p483, %p484
    %p487 = scmp.ne.s32.totalorder %s470, %s486
    %p488 = scmp.eq.s32.totalorder %s32, 0
    %p489 = por %p487, %p488
    %p490 = scmp.le.s32.totalorder 1, %s26
    %p491 = scmp.lt.s32.totalorder %s26, 3
    %p492 = pnand %p490, %p491
    %p493 = pneg %p492
    // Predicated region
    $region9: #{bede_forward.1} parent=5 // pred_check
      _
    $region10: #{bede_forward.1} parent=5 // pred_check_branch
      %495 = sbr.rel (%p492) target = $region12
    $region11: #{bede_forward.1} parent=5 // pred_region
      %s496 = ssub.s32 %s26, 1
      // Predicated region
      $region13: #{bede_forward.1} parent=11 // pred_check
        %p497 = pneg %p99
      $region14: #{bede_forward.1} parent=11 // pred_check_branch
        %499 = sbr.rel (%p497) target = $region16
      $region15: #{bede_forward.1} parent=11 // pred_region
        _
      $region16: #{bede_forward.1} parent=11 // pred_fallthru
        _
      // Predicated region
      $region17: #{bede_forward.1} parent=11 // pred_check
        %p500 = pneg %p120
      $region18: #{bede_forward.1} parent=11 // pred_check_branch
        %502 = sbr.rel (%p500) target = $region20
      $region19: #{bede_forward.1} parent=11 // pred_region
        _
      $region20: #{bede_forward.1} parent=11 // pred_fallthru
        _
      // Predicated region
      $region21: #{bede_forward.1} parent=11 // pred_check
        %p503 = pneg %p141
      $region22: #{bede_forward.1} parent=11 // pred_check_branch
        %505 = sbr.rel (%p503) target = $region24
      $region23: #{bede_forward.1} parent=11 // pred_region
        _
      $region24: #{bede_forward.1} parent=11 // pred_fallthru
        _
      // Predicated region
      $region25: #{bede_forward.1} parent=11 // pred_check
        %p506 = pneg %p162
      $region26: #{bede_forward.1} parent=11 // pred_check_branch
        %508 = sbr.rel (%p506) target = $region28
      $region27: #{bede_forward.1} parent=11 // pred_region
        _
      $region28: #{bede_forward.1} parent=11 // pred_fallthru
        _
      // Predicated region
      $region29: #{bede_forward.1} parent=11 // pred_check
        %p509 = pneg %p183
      $region30: #{bede_forward.1} parent=11 // pred_check_branch
        %511 = sbr.rel (%p509) target = $region32
      $region31: #{bede_forward.1} parent=11 // pred_region
        _
      $region32: #{bede_forward.1} parent=11 // pred_fallthru
        _
      // Predicated region
      $region33: #{bede_forward.1} parent=11 // pred_check
        %p512 = pneg %p204
      $region34: #{bede_forward.1} parent=11 // pred_check_branch
        %514 = sbr.rel (%p512) target = $region36
      $region35: #{bede_forward.1} parent=11 // pred_region
        _
      $region36: #{bede_forward.1} parent=11 // pred_fallthru
        _
      // Predicated region
      $region37: #{bede_forward.1} parent=11 // pred_check
        %p515 = pneg %p225
      $region38: #{bede_forward.1} parent=11 // pred_check_branch
        %517 = sbr.rel (%p515) target = $region40
      $region39: #{bede_forward.1} parent=11 // pred_region
        _
      $region40: #{bede_forward.1} parent=11 // pred_fallthru
        _
      // Predicated region
      $region41: #{bede_forward.1} parent=11 // pred_check
        %p518 = pneg %p246
      $region42: #{bede_forward.1} parent=11 // pred_check_branch
        %520 = sbr.rel (%p518) target = $region44
      $region43: #{bede_forward.1} parent=11 // pred_region
        _
      $region44: #{bede_forward.1} parent=11 // pred_fallthru
        _
      // Predicated region
      $region45: #{bede_forward.1} parent=11 // pred_check
        %p521 = pneg %p267
      $region46: #{bede_forward.1} parent=11 // pred_check_branch
        %523 = sbr.rel (%p521) target = $region48
      $region47: #{bede_forward.1} parent=11 // pred_region
        _
      $region48: #{bede_forward.1} parent=11 // pred_fallthru
        _
      // Predicated region
      $region49: #{bede_forward.1} parent=11 // pred_check
        %p524 = pneg %p288
      $region50: #{bede_forward.1} parent=11 // pred_check_branch
        %526 = sbr.rel (%p524) target = $region52
      $region51: #{bede_forward.1} parent=11 // pred_region
        _
      $region52: #{bede_forward.1} parent=11 // pred_fallthru
        _
      // Predicated region
      $region53: #{bede_forward.1} parent=11 // pred_check
        %p527 = pneg %p309
      $region54: #{bede_forward.1} parent=11 // pred_check_branch
        %529 = sbr.rel (%p527) target = $region56
      $region55: #{bede_forward.1} parent=11 // pred_region
        _
      $region56: #{bede_forward.1} parent=11 // pred_fallthru
        _
      // Predicated region
      $region57: #{bede_forward.1} parent=11 // pred_check
        %p530 = pneg %p330
      $region58: #{bede_forward.1} parent=11 // pred_check_branch
        %532 = sbr.rel (%p530) target = $region60
      $region59: #{bede_forward.1} parent=11 // pred_region
        _
      $region60: #{bede_forward.1} parent=11 // pred_fallthru
        _
      // Predicated region
      $region61: #{bede_forward.1} parent=11 // pred_check
        %p533 = pneg %p351
      $region62: #{bede_forward.1} parent=11 // pred_check_branch
        %535 = sbr.rel (%p533) target = $region64
      $region63: #{bede_forward.1} parent=11 // pred_region
        _
      $region64: #{bede_forward.1} parent=11 // pred_fallthru
        _
      // Predicated region
      $region65: #{bede_forward.1} parent=11 // pred_check
        %p536 = pneg %p372
      $region66: #{bede_forward.1} parent=11 // pred_check_branch
        %538 = sbr.rel (%p536) target = $region68
      $region67: #{bede_forward.1} parent=11 // pred_region
        _
      $region68: #{bede_forward.1} parent=11 // pred_fallthru
        _
      // Predicated region
      $region69: #{bede_forward.1} parent=11 // pred_check
        %p539 = pneg %p393
      $region70: #{bede_forward.1} parent=11 // pred_check_branch
        %541 = sbr.rel (%p539) target = $region72
      $region71: #{bede_forward.1} parent=11 // pred_region
        _
      $region72: #{bede_forward.1} parent=11 // pred_fallthru
        _
      // Predicated region
      $region73: #{bede_forward.1} parent=11 // pred_check
        %p542 = pneg %p414
      $region74: #{bede_forward.1} parent=11 // pred_check_branch
        %544 = sbr.rel (%p542) target = $region76
      $region75: #{bede_forward.1} parent=11 // pred_region
        _
      $region76: #{bede_forward.1} parent=11 // pred_fallthru
        _
      // Predicated region
      $region77: #{bede_forward.1} parent=11 // pred_check
        %p545 = pneg %p435
      $region78: #{bede_forward.1} parent=11 // pred_check_branch
        %547 = sbr.rel (%p545) target = $region80
      $region79: #{bede_forward.1} parent=11 // pred_region
        _
      $region80: #{bede_forward.1} parent=11 // pred_fallthru
        _
      // Predicated region
      $region81: #{bede_forward.1} parent=11 // pred_check
        %p548 = pneg %p456
      $region82: #{bede_forward.1} parent=11 // pred_check_branch
        %550 = sbr.rel (%p548) target = $region84
      $region83: #{bede_forward.1} parent=11 // pred_region
        _
      $region84: #{bede_forward.1} parent=11 // pred_fallthru
        _
    $region12: #{bede_forward.1} parent=5 // pred_fallthru
      _
    %p551 = scmp.lt.s32.totalorder %s26, 2
    // Predicated region
    $region85: #{bede_forward.1} parent=5 // pred_check
      %p552 = pneg %p551
    $region86: #{bede_forward.1} parent=5 // pred_check_branch
      %554 = sbr.rel (%p552) target = $region88
    $region87: #{bede_forward.1} parent=5 // pred_region
      // Predicated region
      $region89: #{bede_forward.1} parent=87 // pred_check
        %p555 = pneg %p46
      $region90: #{bede_forward.1} parent=87 // pred_check_branch
        %557 = sbr.rel (%p555) target = $region92
      $region91: #{bede_forward.1} parent=87 // pred_region
        %p558 = scmp.lt.s32.totalorder %s26, 1
        %s559 = scalar_select %p558, %s26, 1
        %s560 = smul.addr %s559, 3
        %s561 = smul.addr %s560, 4
        %s562 = scalar_lea.vmem %s0, %s561
      $region92: #{bede_forward.1} parent=87 // pred_fallthru
        _
      // Predicated region
      $region93: #{bede_forward.1} parent=87 // pred_check
        %p563 = pneg %p72
      $region94: #{bede_forward.1} parent=87 // pred_check_branch
        %565 = sbr.rel (%p563) target = $region96
      $region95: #{bede_forward.1} parent=87 // pred_region
        %p566 = scmp.lt.s32.totalorder %s26, 1
        %s567 = scalar_select %p566, %s26, 1
        %s568 = smul.addr %s567, 2
        %s569 = scalar_lea.vmem %s1, %s568
      $region96: #{bede_forward.1} parent=87 // pred_fallthru
        _
    $region88: #{bede_forward.1} parent=5 // pred_fallthru
      _
    %p570 = scmp.le.s32.totalorder 1, %s26
    %p571 = scmp.lt.s32.totalorder %s26, 3
    %p572 = pnand %p570, %p571
    %p573 = pneg %p572
    // Predicated region
    $region97: #{bede_forward.1} parent=5 // pred_check
      _
    $region98: #{bede_forward.1} parent=5 // pred_check_branch
      %575 = sbr.rel (%p572) target = $region100
    $region99: #{bede_forward.1} parent=5 // pred_region
      %s576 = ssub.s32 %s26, 1
      %p577 = scmp.lt.s32.totalorder %s31, 1
      %s578 = scalar_select %p577, %s31, 1
      %s579 = smul.addr %s578, 3
      %s580 = smul.addr %s579, 4
      %s581 = scalar_lea.vmem %s0, %s580
      %p582 = pneg %p52
      %p583 = pneg %p49
      %p584 = scmp.lt.s32.totalorder %s31, 1
      %s585 = scalar_select %p584, %s31, 1
      %s586 = smul.addr %s585, 2
      %s587 = scalar_lea.vmem %s1, %s586
      %p588 = pneg %p78
      %p589 = pneg %p75
      %p590 = pneg %p99
      %p591 = pneg %p96
      %p592 = pneg %p120
      %p593 = pneg %p117
      %p594 = pneg %p141
      %p595 = pneg %p138
      %p596 = pneg %p162
      %p597 = pneg %p159
      %p598 = pneg %p183
      %p599 = pneg %p180
      %p600 = pneg %p204
      %p601 = pneg %p201
      %p602 = pneg %p225
      %p603 = pneg %p222
      %p604 = pneg %p246
      %p605 = pneg %p243
      %p606 = pneg %p267
      %p607 = pneg %p264
      %p608 = pneg %p288
      %p609 = pneg %p285
      %p610 = pneg %p309
      %p611 = pneg %p306
      %p612 = pneg %p330
      %p613 = pneg %p327
      %p614 = pneg %p351
      %p615 = pneg %p348
      %p616 = pneg %p372
      %p617 = pneg %p369
      %p618 = pneg %p393
      %p619 = pneg %p390
      %p620 = pneg %p414
      %p621 = pneg %p411
      %p622 = pneg %p435
      %p623 = pneg %p432
      %p624 = pneg %p456
      %p625 = pneg %p453
      %p626 = pneg %p482
      %p627 = pneg %p479
      %p628 = scmp.lt.s32.totalorder %s31, 1
      %s629 = scalar_select %p628, %s31, 1
      %s630 = smul.addr %s629, 2
      %s631 = smul.addr %s630, 4
      %s632 = scalar_lea.vmem %s20, %s631
      %p633 = scmp.lt.s32.totalorder %s31, 1
      %s634 = scalar_select %p633, %s31, 1
      %s635 = smul.addr %s634, 3
      %s636 = smul.addr %s635, 4
      %s637 = scalar_lea.vmem %s0, %s636
      %p638 = scmp.lt.s32.totalorder %s31, 1
      %s639 = scalar_select %p638, %s31, 1
      %s640 = smul.addr %s639, 2
      %s641 = scalar_lea.vmem %s1, %s640
      %p642 = scmp.lt.s32.totalorder %s31, 1
      %s643 = scalar_select %p642, %s31, 1
      %s644 = smul.addr %s643, 2
      %s645 = smul.addr %s644, 4
      %s646 = scalar_lea.vmem %s20, %s645
      %v648 = vld [vmem:[%s637] sm:$0xff]
      %v649 = vld [vmem:[%s637 + $0x8] sm:$0xf]
      %652 = vst [vmem:[#allocation1] ss:$2 sm:$0xff] %v648
      %s653 = scalar_lea.vmem [#allocation1], 16
      %654 = vst [vmem:[%s653] ss:$2 sm:$0xff] %v649
      %v655 = vld.sshfl [vmem:[#allocation1] sm:$0xff pattern:$0x75316420]
      %v656 = vld.sshfl [vmem:[#allocation1 + $0x8] sm:$0xff pattern:$0x75316420]
      %v657 = vld.sshfl [vmem:[#allocation1 + $0x10] sm:$0xff pattern:$0x75316420]
      %v661 = vpack.c.bf16 %v656, %v655
      %v662 = vpack.c.bf16 %v657, %v657
      %v665 = vrot.slane %v661, 2
      %v666 = vrot.slane %v662, 4
      %v667 = vrot.slane %v662, 6
      %vm668 = vcmask 1041408
      %v671 = vsel %vm668, %v661, %v665
      %vm672 = vcmask 1045508
      %v675 = vsel %vm672, %v666, %v667
      %vm676 = vcmask 1043456
      %v677 = vsel %vm676, %v671, %v675
      %vm679 = vcmask 1043458
      %vm680 = vmor %vm679, %vm668
      %vm681 = vcmask 275460
      %vm682 = vmor %vm681, %vm680
      %683 = vst.msk [vmem:[#allocation2] sm:$0x3f] %vm682, %v677
      %684 = vst [vmem:[#allocation3] sm:$0x3] 0
      %685 = vst [vmem:[#allocation3 + $0x6] sm:$0x3] 0
      %686 = vst [vmem:[#allocation4] sm:$0x3] 0
      %687 = vst [vmem:[#allocation4 + $0x6] sm:$0x3] 0
      %688 = vst [vmem:[#allocation5] sm:$0x3] 0
      %689 = vst [vmem:[#allocation5 + $0x6] sm:$0x3] 0
      %v690 = vld [vmem:[%s16] sm:$0x3]
      %v691 = vld [vmem:[%s17] sm:$0x3]
      %v692 = vld [vmem:[%s18] sm:$0x1]
      %v693 = vld [vmem:[%s19] sm:$0x1]
      %v694 = vld [vmem:[%s2] sm:$0x3]
      %v695 = vld [vmem:[%s3] sm:$0xf]
      %v696 = vld [vmem:[%s641] sm:$0x3]
      %v698 = vpack.i.b16 %v692, %v692
      %v700 = vperm.slane %v698, 0
      %v701 = vunpack.c.l.bf16 %v696
      %v702 = vunpack.c.l.bf16 %v700
      %v703 = vmul.f32 %v701, %v702
      %v704 = vpack.c.bf16 %v703, %v703
      %v706 = vpack.i.b16 %v693, %v693
      %v708 = vperm.slane %v706, 0
      %v709 = vunpack.c.l.bf16 %v708
      %711 = vrot.lane.b32.xlu0 %v709, 2
      %v712 = vpop.permute.xlu0 %711
      %v714 = vmul.f32 %v701, %v712
      %v715 = vpack.c.bf16 %v714, %v714
      %717 = vrot.lane.b32.xlu0 %v702, 8
      %v718 = vpop.permute.xlu0 %717
      %v720 = vmul.f32 %v701, %v718
      %v721 = vpack.c.bf16 %v720, %v720
      %722 = vrot.lane.b32.xlu0 %v709, 10
      %v723 = vpop.permute.xlu0 %722
      %v725 = vmul.f32 %v701, %v723
      %v726 = vpack.c.bf16 %v725, %v725
      %727 = vrot.lane.b32.xlu0 %v702, 16
      %v728 = vpop.permute.xlu0 %727
      %v730 = vmul.f32 %v701, %v728
      %v731 = vpack.c.bf16 %v730, %v730
      %732 = vrot.lane.b32.xlu0 %v709, 18
      %v733 = vpop.permute.xlu0 %732
      %v735 = vmul.f32 %v701, %v733
      %v736 = vpack.c.bf16 %v735, %v735
      %s738 = scalar_lea.vmem [#allocation1], 1
      %739 = vst [vmem:[%s738] ss:$4 sm:$0xff] %v696
      %v740 = vld.sshfl [vmem:[#allocation1] sm:$0xff pattern:$0x73625140]
      %742 = vrot.lane.b32.xlu0 %v740, 127
      %v743 = vpop.permute.xlu0 %742
      %v745 = vunpack.c.l.b16 %v715
      %v746 = vpack.c.b16 %v745, %v745
      %747 = vrot.lane.b32.xlu0 %v746, 126
      %v748 = vpop.permute.xlu0 %747
      %v750 = vunpack.c.l.b16 %v721
      %v751 = vpack.c.b16 %v750, %v750
      %v752 = vrot.slane %v751, 2
      %753 = vrot.lane.b32.xlu0 %v752, 120
      %v754 = vpop.permute.xlu0 %753
      %755 = vst [vmem:[#allocation1] ss:$4 sm:$0xff] %v696
      %v756 = vld.sshfl [vmem:[#allocation1] sm:$0xff pattern:$0x73625140]
      %758 = vrot.lane.b32.xlu0 %v756, 119
      %v759 = vpop.permute.xlu0 %758
      %v761 = vunpack.c.l.b16 %v726
      %v762 = vpack.c.b16 %v761, %v761
      %v763 = vrot.slane %v762, 6
      %764 = vrot.lane.b32.xlu0 %v763, 118
      %v765 = vpop.permute.xlu0 %764
      %v767 = vunpack.c.l.b16 %v731
      %v768 = vpack.c.b16 %v767, %v767
      %769 = vrot.lane.b32.xlu0 %v768, 112
      %v770 = vpop.permute.xlu0 %769
      %s771 = scalar_lea.vmem [#allocation1], 3
      %772 = vst [vmem:[%s771] ss:$4 sm:$0xff] %v696
      %v773 = vld.sshfl [vmem:[#allocation1] sm:$0xff pattern:$0x73625140]
      %775 = vrot.lane.b32.xlu0 %v773, 111
      %v776 = vpop.permute.xlu0 %775
      %v778 = vunpack.c.l.b16 %v736
      %v779 = vpack.c.b16 %v778, %v778
      %780 = vrot.lane.b32.xlu0 %v779, 110
      %v781 = vpop.permute.xlu0 %780
      %v784 = vsel %vm668, %v704, %v743
      %v786 = vsel %vm676, %v784, %v748
      %vm787 = vcmask 1045504
      %v789 = vsel %vm787, %v786, %v754
      %v793 = vsel %vm668, %v759, %v765
      %v795 = vsel %vm676, %v793, %v770
      %v797 = vsel %vm787, %v795, %v776
      %800 = vset.pattern.permute.xlu0 0
      %801 = vperm.xlu0 %800, %v695
      %v802 = vpop.permute.xlu0 %801
      %vm804 = vcmask 293888
      %v806 = vsel %vm804, %v694, 0
      %v809 = vsel %vm668, %v781, 0
      %811 = vmatpush.bf16.msra.mxu0 0
      %812 = vmatpush.bf16.msra.mxu0 0
      %813 = vmatpush.bf16.msra.mxu0 0
      %814 = vmatpush.bf16.msra.mxu0 0
      %815 = vmatpush.bf16.msra.mxu0 0
      %816 = vmatpush.bf16.msra.mxu0 %v809
      %817 = vmatpush.bf16.msra.mxu0 %v797
      %818 = vmatpush.bf16.msra.mxu0 %v789
      %819 = vmatmul.bf16.gmra.mxu0 %v806
      %v820 = vpop.f32.mrf.mxu0
      %v821 = vadd.f32 %v802, %v820
      %v822 = vpop.f32.mrf.mxu0
      %823 = vdwg.mxu0
      %v824 = vpack.c.bf16 %v821, %v821
      %v825 = vld [vmem:[%s15] sm:$0xff]
      %v826 = vld [vmem:[%s15 + $0x8] sm:$0xff]
      %v827 = vld [vmem:[%s15 + $0x10] sm:$0xff]
      %v828 = vld [vmem:[%s15 + $0x18] sm:$0xff]
      %v829 = vld [vmem:[%s15 + $0x20] sm:$0xff]
      %v830 = vld [vmem:[%s15 + $0x28] sm:$0xff]
      %v831 = vld [vmem:[%s15 + $0x30] sm:$0xff]
      %v832 = vld [vmem:[%s15 + $0x38] sm:$0xff]
      %v841 = vunpack.c.l.b16 %v825
      %v842 = vunpack.c.h.b16 %v825
      %v843 = vunpack.c.l.b16 %v826
      %v844 = vunpack.c.h.b16 %v826
      %v845 = vunpack.c.l.b16 %v827
      %v846 = vunpack.c.h.b16 %v827
      %v847 = vunpack.c.l.b16 %v828
      %v848 = vunpack.c.h.b16 %v828
      %v849 = vunpack.c.l.b16 %v829
      %v850 = vunpack.c.h.b16 %v829
      %v851 = vunpack.c.l.b16 %v830
      %v852 = vunpack.c.h.b16 %v830
      %v853 = vunpack.c.l.b16 %v831
      %v854 = vunpack.c.h.b16 %v831
      %v855 = vunpack.c.l.b16 %v832
      %v856 = vunpack.c.h.b16 %v832
      %v857 = vpack.c.b16 %v843, %v841
      %v858 = vpack.c.b16 %v844, %v842
      %v859 = vpack.c.b16 %v847, %v845
      %v860 = vpack.c.b16 %v848, %v846
      %v861 = vpack.c.b16 %v851, %v849
      %v862 = vpack.c.b16 %v852, %v850
      %v863 = vpack.c.b16 %v855, %v853
      %v864 = vpack.c.b16 %v856, %v854
      %vm873 = vcmask 523264
      %v875 = vsel %vm873, %v824, 0
      %877 = vmatpush.bf16.msra.mxu0 0
      %878 = vmatpush.bf16.msra.mxu0 0
      %879 = vmatpush.bf16.msra.mxu0 0
      %880 = vmatpush.bf16.msra.mxu0 0
      %881 = vmatpush.bf16.msra.mxu0 %v863
      %882 = vmatpush.bf16.msra.mxu0 %v861
      %883 = vmatpush.bf16.msra.mxu0 %v859
      %884 = vmatpush.bf16.msra.mxu0 %v857
      %885 = vmatmul.bf16.gmra.mxu0 %v875
      %v886 = vpop.f32.mrf.mxu0
      %v887 = vadd.f32 0.0, %v886
      %v888 = vpop.f32.mrf.mxu0
      %889 = vdwg.mxu0
      %890 = vmatpush.bf16.msra.mxu0 0
      %891 = vmatpush.bf16.msra.mxu0 0
      %892 = vmatpush.bf16.msra.mxu0 0
      %893 = vmatpush.bf16.msra.mxu0 0
      %894 = vmatpush.bf16.msra.mxu0 %v864
      %895 = vmatpush.bf16.msra.mxu0 %v862
      %896 = vmatpush.bf16.msra.mxu0 %v860
      %897 = vmatpush.bf16.msra.mxu0 %v858
      %898 = vmatmul.bf16.gmra.mxu0 %v875
      %v899 = vpop.f32.mrf.mxu0
      %v900 = vadd.f32 0.0, %v899
      %v901 = vpop.f32.mrf.mxu0
      %902 = vdwg.mxu0
      %v903 = vld [vmem:[%s4] sm:$0x3]
      %v904 = vld [vmem:[%s5] sm:$0xf]
      %v905 = vld [vmem:[#allocation2] sm:$0xf]
      %907 = vst [vmem:[#allocation1] ss:$9 sm:$0xff] %v690
      %v908 = vld [vmem:[#allocation1] sm:$0xff]
      %v909 = vld [vmem:[#allocation1 + $0x9] sm:$0xff]
      %v910 = vpack.i.b16 %v908, %v908
      %v912 = vperm.slane %v910, 0
      %v913 = vpack.i.b16 %v909, %v909
      %v915 = vperm.slane %v913, 0
      %v916 = vunpack.c.l.bf16 %v905
      %v917 = vunpack.c.l.bf16 %v912
      %v918 = vunpack.c.l.bf16 %v915
      %v921 = vrot.slane %v918, 4
      %v922 = vsel %vm676, %v917, %v921
      %v924 = vmul.f32 %v916, %v922
      %926 = vst [vmem:[#allocation1] ss:$2 sm:$0xff] %v924
      %v927 = vld.sshfl [vmem:[#allocation1] sm:$0xff pattern:$0x75316420]
      %v928 = vld.sshfl [vmem:[#allocation1 + $0x8] sm:$0xff pattern:$0x75316420]
      %v931 = vpack.c.bf16 %v928, %v927
      %v932 = vld [vmem:[#allocation2] sm:$0x3f]
      %934 = vst [vmem:[#allocation1] ss:$9 sm:$0xff] %v691
      %v935 = vld [vmem:[#allocation1] sm:$0xff]
      %v936 = vld [vmem:[#allocation1 + $0x9] sm:$0xff]
      %v937 = vpack.i.b16 %v935, %v935
      %v939 = vperm.slane %v937, 0
      %v940 = vpack.i.b16 %v936, %v936
      %v942 = vperm.slane %v940, 0
      %v943 = vunpack.c.l.bf16 %v932
      %v944 = vunpack.c.h.bf16 %v932
      %v945 = vunpack.c.l.bf16 %v939
      %v946 = vunpack.c.l.bf16 %v942
      %v949 = vrot.slane %v946, 4
      %v950 = vsel %vm676, %v945, %v949
      %951 = vrot.lane.b32.xlu0 %v950, 2
      %v952 = vpop.permute.xlu0 %951
      %v953 = vrot.slane %v952, 4
      %vm954 = vcmask 15360
      %v955 = vsel %vm954, %v953, %v952
      %v958 = vmul.f32 %v943, %v955
      %v959 = vmul.f32 %v944, %v953
      %962 = vst [vmem:[#allocation1] ss:$2 sm:$0xff] %v958
      %s963 = scalar_lea.vmem [#allocation1], 16
      %964 = vst [vmem:[%s963] ss:$2 sm:$0xff] %v959
      %v965 = vld.sshfl [vmem:[#allocation1] sm:$0xff pattern:$0x75316420]
      %v966 = vld.sshfl [vmem:[#allocation1 + $0x8] sm:$0xff pattern:$0x75316420]
      %v967 = vld.sshfl [vmem:[#allocation1 + $0x10] sm:$0xff pattern:$0x75316420]
      %v971 = vpack.c.bf16 %v966, %v965
      %v972 = vpack.c.bf16 %v967, %v967
      %v973 = vld [vmem:[#allocation2] sm:$0x3f]
      %v974 = vunpack.c.l.bf16 %v973
      %v975 = vunpack.c.h.bf16 %v973
      %976 = vrot.lane.b32.xlu0 %v922, 16
      %v977 = vpop.permute.xlu0 %976
      %v978 = vrot.slane %v977, 4
      %vm979 = vcmask 130048
      %v980 = vsel %vm979, %v978, %v977
      %v983 = vmul.f32 %v974, %v980
      %v984 = vmul.f32 %v975, %v978
      %987 = vst [vmem:[#allocation1] ss:$2 sm:$0xff] %v983
      %s988 = scalar_lea.vmem [#allocation1], 16
      %989 = vst [vmem:[%s988] ss:$2 sm:$0xff] %v984
      %v990 = vld.sshfl [vmem:[#allocation1] sm:$0xff pattern:$0x75316420]
      %v991 = vld.sshfl [vmem:[#allocation1 + $0x8] sm:$0xff pattern:$0x75316420]
      %v992 = vld.sshfl [vmem:[#allocation1 + $0x10] sm:$0xff pattern:$0x75316420]
      %v996 = vpack.c.bf16 %v991, %v990
      %v997 = vpack.c.bf16 %v992, %v992
      %v998 = vld [vmem:[#allocation2] sm:$0x3f]
      %v999 = vunpack.c.l.bf16 %v998
      %v1000 = vunpack.c.h.bf16 %v998
      %1001 = vrot.lane.b32.xlu0 %v950, 18
      %v1002 = vpop.permute.xlu0 %1001
      %v1003 = vrot.slane %v1002, 4
      %vm1004 = vcmask 146432
      %v1005 = vsel %vm1004, %v1003, %v1002
      %v1008 = vmul.f32 %v999, %v1005
      %v1009 = vmul.f32 %v1000, %v1003
      %1012 = vst [vmem:[#allocation1] ss:$2 sm:$0xff] %v1008
      %s1013 = scalar_lea.vmem [#allocation1], 16
      %1014 = vst [vmem:[%s1013] ss:$2 sm:$0xff] %v1009
      %v1015 = vld.sshfl [vmem:[#allocation1] sm:$0xff pattern:$0x75316420]
      %v1016 = vld.sshfl [vmem:[#allocation1 + $0x8] sm:$0xff pattern:$0x75316420]
      %v1017 = vld.sshfl [vmem:[#allocation1 + $0x10] sm:$0xff pattern:$0x75316420]
      %v1021 = vpack.c.bf16 %v1016, %v1015
      %v1022 = vpack.c.bf16 %v1017, %v1017
      %v1023 = vld [vmem:[#allocation2] sm:$0x3f]
      %v1024 = vunpack.c.l.bf16 %v1023
      %v1025 = vunpack.c.h.bf16 %v1023
      %1026 = vrot.lane.b32.xlu0 %v922, 32
      %v1027 = vpop.permute.xlu0 %1026
      %v1028 = vrot.slane %v1027, 4
      %vm1029 = vcmask 261120
      %v1030 = vsel %vm1029, %v1028, %v1027
      %v1033 = vmul.f32 %v1024, %v1030
      %v1034 = vmul.f32 %v1025, %v1028
      %1037 = vst [vmem:[#allocation1] ss:$2 sm:$0xff] %v1033
      %s1038 = scalar_lea.vmem [#allocation1], 16
      %1039 = vst [vmem:[%s1038] ss:$2 sm:$0xff] %v1034
      %v1040 = vld.sshfl [vmem:[#allocation1] sm:$0xff pattern:$0x75316420]
      %v1041 = vld.sshfl [vmem:[#allocation1 + $0x8] sm:$0xff pattern:$0x75316420]
      %v1042 = vld.sshfl [vmem:[#allocation1 + $0x10] sm:$0xff pattern:$0x75316420]
      %v1046 = vpack.c.bf16 %v1041, %v1040
      %v1047 = vpack.c.bf16 %v1042, %v1042
      %v1048 = vld [vmem:[#allocation2] sm:$0x3f]
      %v1049 = vunpack.c.l.bf16 %v1048
      %v1050 = vunpack.c.h.bf16 %v1048
      %1051 = vrot.lane.b32.xlu0 %v950, 34
      %v1052 = vpop.permute.xlu0 %1051
      %v1053 = vrot.slane %v1052, 4
      %vm1054 = vcmask 277504
      %v1055 = vsel %vm1054, %v1053, %v1052
      %v1058 = vmul.f32 %v1049, %v1055
      %v1059 = vmul.f32 %v1050, %v1053
      %1062 = vst [vmem:[#allocation1] ss:$2 sm:$0xff] %v1058
      %s1063 = scalar_lea.vmem [#allocation1], 16
      %1064 = vst [vmem:[%s1063] ss:$2 sm:$0xff] %v1059
      %v1065 = vld.sshfl [vmem:[#allocation1] sm:$0xff pattern:$0x75316420]
      %v1066 = vld.sshfl [vmem:[#allocation1 + $0x8] sm:$0xff pattern:$0x75316420]
      %v1067 = vld.sshfl [vmem:[#allocation1 + $0x10] sm:$0xff pattern:$0x75316420]
      %v1071 = vpack.c.bf16 %v1066, %v1065
      %v1072 = vpack.c.bf16 %v1067, %v1067
      %v1074 = vunpack.c.l.b16 %v931
      %v1075 = vunpack.c.h.b16 %v931
      %v1076 = vpack.c.b16 %v1074, %v1074
      %v1077 = vpack.c.b16 %v1075, %v1075
      %s1079 = scalar_lea.vmem [#allocation1], 1
      %1080 = vst [vmem:[%s1079] ss:$4 sm:$0xff] %v932
      %v1081 = vld.sshfl [vmem:[#allocation1] sm:$0xff pattern:$0x73625140]
      %v1083 = vld.sshfl [vmem:[#allocation1 + $0x8] sm:$0xff pattern:$0x73625140]
      %v1085 = vld.sshfl [vmem:[#allocation1 + $0x10] sm:$0xff pattern:$0x73625140]
      %1087 = vrot.lane.b32.xlu0 %v1081, 127
      %v1088 = vpop.permute.xlu0 %1087
      %1089 = vrot.lane.b32.xlu0 %v1083, 127
      %v1090 = vpop.permute.xlu0 %1089
      %1091 = vrot.lane.b32.xlu0 %v1085, 127
      %v1092 = vpop.permute.xlu0 %1091
      %vm1093 = vcmask 1039360
      %v1094 = vsel %vm1093, %v1088, %v1090
      %v1095 = vsel %vm1093, %v1090, %v1092
      %v1098 = vunpack.c.l.b16 %v971
      %v1099 = vunpack.c.h.b16 %v971
      %v1100 = vunpack.c.l.b16 %v972
      %v1101 = vpack.c.b16 %v1098, %v1098
      %v1102 = vpack.c.b16 %v1099, %v1099
      %v1103 = vpack.c.b16 %v1100, %v1100
      %1104 = vrot.lane.b32.xlu0 %v1101, 126
      %v1105 = vpop.permute.xlu0 %1104
      %1106 = vrot.lane.b32.xlu0 %v1102, 126
      %v1107 = vpop.permute.xlu0 %1106
      %1108 = vrot.lane.b32.xlu0 %v1103, 126
      %v1109 = vpop.permute.xlu0 %1108
      %vm1110 = vcmask 1031168
      %v1111 = vsel %vm1110, %v1105, %v1107
      %v1112 = vsel %vm1110, %v1107, %v1109
      %v1115 = vunpack.c.l.b16 %v996
      %v1116 = vunpack.c.h.b16 %v996
      %v1117 = vunpack.c.l.b16 %v997
      %v1118 = vpack.c.b16 %v1115, %v1115
      %v1119 = vpack.c.b16 %v1116, %v1116
      %v1120 = vpack.c.b16 %v1117, %v1117
      %v1121 = vrot.slane %v1118, 2
      %v1122 = vrot.slane %v1119, 2
      %v1123 = vrot.slane %v1120, 2
      %1124 = vrot.lane.b32.xlu0 %v1121, 112
      %v1125 = vpop.permute.xlu0 %1124
      %1126 = vrot.lane.b32.xlu0 %v1122, 112
      %v1127 = vpop.permute.xlu0 %1126
      %1128 = vrot.lane.b32.xlu0 %v1123, 112
      %v1129 = vpop.permute.xlu0 %1128
      %vm1130 = vcmask 916480
      %v1131 = vsel %vm1130, %v1125, %v1127
      %v1132 = vsel %vm1130, %v1127, %v1129
      %1134 = vst [vmem:[#allocation1] ss:$4 sm:$0xff] %v998
      %v1135 = vld.sshfl [vmem:[#allocation1] sm:$0xff pattern:$0x73625140]
      %v1137 = vld.sshfl [vmem:[#allocation1 + $0x8] sm:$0xff pattern:$0x73625140]
      %v1139 = vld.sshfl [vmem:[#allocation1 + $0x10] sm:$0xff pattern:$0x73625140]
      %1141 = vrot.lane.b32.xlu0 %v1135, 111
      %v1142 = vpop.permute.xlu0 %1141
      %1143 = vrot.lane.b32.xlu0 %v1137, 111
      %v1144 = vpop.permute.xlu0 %1143
      %1145 = vrot.lane.b32.xlu0 %v1139, 111
      %v1146 = vpop.permute.xlu0 %1145
      %vm1147 = vcmask 908288
      %v1148 = vsel %vm1147, %v1142, %v1144
      %v1149 = vsel %vm1147, %v1144, %v1146
      %v1152 = vunpack.c.l.b16 %v1021
      %v1153 = vunpack.c.h.b16 %v1021
      %v1154 = vunpack.c.l.b16 %v1022
      %v1155 = vpack.c.b16 %v1152, %v1152
      %v1156 = vpack.c.b16 %v1153, %v1153
      %v1157 = vpack.c.b16 %v1154, %v1154
      %v1158 = vrot.slane %v1155, 6
      %v1159 = vrot.slane %v1156, 6
      %v1160 = vrot.slane %v1157, 6
      %1161 = vrot.lane.b32.xlu0 %v1158, 110
      %v1162 = vpop.permute.xlu0 %1161
      %1163 = vrot.lane.b32.xlu0 %v1159, 110
      %v1164 = vpop.permute.xlu0 %1163
      %1165 = vrot.lane.b32.xlu0 %v1160, 110
      %v1166 = vpop.permute.xlu0 %1165
      %vm1167 = vcmask 900096
      %v1168 = vsel %vm1167, %v1162, %v1164
      %v1169 = vsel %vm1167, %v1164, %v1166
      %v1172 = vunpack.c.l.b16 %v1046
      %v1173 = vunpack.c.h.b16 %v1046
      %v1174 = vunpack.c.l.b16 %v1047
      %v1175 = vpack.c.b16 %v1172, %v1172
      %v1176 = vpack.c.b16 %v1173, %v1173
      %v1177 = vpack.c.b16 %v1174, %v1174
      %1178 = vrot.lane.b32.xlu0 %v1175, 96
      %v1179 = vpop.permute.xlu0 %1178
      %1180 = vrot.lane.b32.xlu0 %v1176, 96
      %v1181 = vpop.permute.xlu0 %1180
      %1182 = vrot.lane.b32.xlu0 %v1177, 96
      %v1183 = vpop.permute.xlu0 %1182
      %vm1184 = vcmask 785408
      %v1185 = vsel %vm1184, %v1179, %v1181
      %v1186 = vsel %vm1184, %v1181, %v1183
      %s1188 = scalar_lea.vmem [#allocation1], 3
      %1189 = vst [vmem:[%s1188] ss:$4 sm:$0xff] %v1048
      %v1190 = vld.sshfl [vmem:[#allocation1] sm:$0xff pattern:$0x73625140]
      %v1192 = vld.sshfl [vmem:[#allocation1 + $0x8] sm:$0xff pattern:$0x73625140]
      %v1194 = vld.sshfl [vmem:[#allocation1 + $0x10] sm:$0xff pattern:$0x73625140]
      %1196 = vrot.lane.b32.xlu0 %v1190, 95
      %v1197 = vpop.permute.xlu0 %1196
      %1198 = vrot.lane.b32.xlu0 %v1192, 95
      %v1199 = vpop.permute.xlu0 %1198
      %1200 = vrot.lane.b32.xlu0 %v1194, 95
      %v1201 = vpop.permute.xlu0 %1200
      %vm1202 = vcmask 777216
      %v1203 = vsel %vm1202, %v1197, %v1199
      %v1204 = vsel %vm1202, %v1199, %v1201
      %v1207 = vunpack.c.l.b16 %v1071
      %v1208 = vunpack.c.h.b16 %v1071
      %v1209 = vunpack.c.l.b16 %v1072
      %v1210 = vpack.c.b16 %v1207, %v1207
      %v1211 = vpack.c.b16 %v1208, %v1208
      %v1212 = vpack.c.b16 %v1209, %v1209
      %1213 = vrot.lane.b32.xlu0 %v1210, 94
      %v1214 = vpop.permute.xlu0 %1213
      %1215 = vrot.lane.b32.xlu0 %v1211, 94
      %v1216 = vpop.permute.xlu0 %1215
      %1217 = vrot.lane.b32.xlu0 %v1212, 94
      %v1218 = vpop.permute.xlu0 %1217
      %vm1219 = vcmask 769024
      %v1220 = vsel %vm1219, %v1214, %v1216
      %v1221 = vsel %vm1219, %v1216, %v1218
      %v1224 = vsel %vm668, %v1076, %v1094
      %v1227 = vsel %vm668, %v1077, %v1095
      %v1229 = vsel %vm676, %v1224, %v1111
      %v1231 = vsel %vm676, %v1227, %v1112
      %v1233 = vsel %vm787, %v1229, %v1131
      %v1236 = vsel %vm787, %v1231, %v1132
      %v1240 = vsel %vm668, %v1148, %v1168
      %v1243 = vsel %vm668, %v1149, %v1169
      %v1245 = vsel %vm676, %v1240, %v1185
      %v1247 = vsel %vm676, %v1243, %v1186
      %v1249 = vsel %vm787, %v1245, %v1203
      %v1252 = vsel %vm787, %v1247, %v1204
      %1255 = vset.pattern.permute.xlu0 0
      %1256 = vperm.xlu0 %1255, %v904
      %v1257 = vpop.permute.xlu0 %1256
      %v1260 = vsel %vm804, %v903, 0
      %v1263 = vsel %vm668, %v1220, 0
      %v1266 = vsel %vm668, %v1221, 0
      %1268 = vmatpush.bf16.msra.mxu0 0
      %1269 = vmatpush.bf16.msra.mxu0 0
      %1270 = vmatpush.bf16.msra.mxu0 0
      %1271 = vmatpush.bf16.msra.mxu0 0
      %1272 = vmatpush.bf16.msra.mxu0 0
      %1273 = vmatpush.bf16.msra.mxu0 %v1263
      %1274 = vmatpush.bf16.msra.mxu0 %v1249
      %1275 = vmatpush.bf16.msra.mxu0 %v1233
      %1276 = vmatmul.bf16.gmra.mxu0 %v1260
      %v1277 = vpop.f32.mrf.mxu0
      %v1278 = vadd.f32 %v1257, %v1277
      %v1279 = vpop.f32.mrf.mxu0
      %1280 = vdwg.mxu0
      %1281 = vmatpush.bf16.msra.mxu0 0
      %1282 = vmatpush.bf16.msra.mxu0 0
      %1283 = vmatpush.bf16.msra.mxu0 0
      %1284 = vmatpush.bf16.msra.mxu0 0
      %1285 = vmatpush.bf16.msra.mxu0 0
      %1286 = vmatpush.bf16.msra.mxu0 %v1266
      %1287 = vmatpush.bf16.msra.mxu0 %v1252
      %1288 = vmatpush.bf16.msra.mxu0 %v1236
      %1289 = vmatmul.bf16.gmra.mxu0 %v1260
      %v1290 = vpop.f32.mrf.mxu0
      %v1291 = vadd.f32 %v1257, %v1290
      %v1292 = vpop.f32.mrf.mxu0
      %1293 = vdwg.mxu0
      %v1294 = vld [vmem:[%s637] sm:$0xff]
      %v1295 = vld [vmem:[%s637 + $0x8] sm:$0xf]
      %v1298 = vrot.slane %v900, 4
      %v1299 = vsel %vm676, %v887, %v1298
      %1300 = vrot.lane.b32.xlu0 %v1299, 17
      %v1301 = vpop.permute.xlu0 %1300
      %v1302 = vrot.slane %v1301, 4
      %vm1303 = vcmask 138240
      %v1304 = vsel %vm1303, %v1302, %v1301
      %v1307 = vadd.f32 %v1294, %v1304
      %v1308 = vadd.f32 %v1295, %v1302
      %v1309 = vxor.u32 %v1307, 2147483648
      %v1310 = vxor.u32 %v1308, 2147483648
      %v1311 = vmul.f32 %v1309, 1.442695
      %v1312 = vpow.pop %v1311
      %v1313 = vmul.f32 %v1310, 1.442695
      %v1314 = vpow.pop %v1313
      %v1315 = vadd.f32 %v1312, 1.0
      %v1316 = vadd.f32 %v1314, 1.0
      %v1317 = vrcp.pop %v1315
      %v1318 = vmul.f32 %v1315, %v1317
      %v1319 = vsub.f32 1.0, %v1318
      %v1320 = vmul.f32 %v1317, %v1319
      %v1321 = vadd.f32 %v1317, %v1320
      %vm1322 = vweird.f32 %v1315
      %vm1323 = vweird.f32 %v1317
      %vm1324 = vmor %vm1322, %vm1323
      %v1325 = vsel %vm1324, %v1317, %v1321
      %v1326 = vand.u32 2147483647, %v1315
      %vm1327 = vcmp.eq.f32.partialorder %v1326, 8.507059e+37
      %v1328 = vand.u32 %v1315, 2147483648
      %v1329 = vor.u32 1.1754944e-38, %v1328
      %v1330 = vsel %vm1327, %v1329, %v1325
      %v1331 = vmul.f32 1.0, %v1330
      %v1332 = vrcp.pop %v1316
      %v1333 = vmul.f32 %v1316, %v1332
      %v1334 = vsub.f32 1.0, %v1333
      %v1335 = vmul.f32 %v1332, %v1334
      %v1336 = vadd.f32 %v1332, %v1335
      %vm1337 = vweird.f32 %v1316
      %vm1338 = vweird.f32 %v1332
      %vm1339 = vmor %vm1337, %vm1338
      %v1340 = vsel %vm1339, %v1332, %v1336
      %v1341 = vand.u32 2147483647, %v1316
      %vm1342 = vcmp.eq.f32.partialorder %v1341, 8.507059e+37
      %v1343 = vand.u32 %v1316, 2147483648
      %v1344 = vor.u32 1.1754944e-38, %v1343
      %v1345 = vsel %vm1342, %v1344, %v1340
      %v1346 = vmul.f32 1.0, %v1345
      %v1349 = vrot.slane %v1291, 4
      %v1350 = vsel %vm676, %v1278, %v1349
      %1351 = vrot.lane.b32.xlu0 %v1350, 17
      %v1352 = vpop.permute.xlu0 %1351
      %v1353 = vrot.slane %v1352, 4
      %v1354 = vsel %vm1303, %v1353, %v1352
      %v1357 = vadd.f32 %v1294, %v1354
      %v1358 = vadd.f32 %v1295, %v1353
      %v1359 = vxor.u32 %v1357, 2147483648
      %v1360 = vxor.u32 %v1358, 2147483648
      %v1361 = vmul.f32 %v1359, 1.442695
      %v1362 = vpow.pop %v1361
      %v1363 = vmul.f32 %v1360, 1.442695
      %v1364 = vpow.pop %v1363
      %v1365 = vadd.f32 %v1362, 1.0
      %v1366 = vadd.f32 %v1364, 1.0
      %v1367 = vrcp.pop %v1365
      %v1368 = vmul.f32 %v1365, %v1367
      %v1369 = vsub.f32 1.0, %v1368
      %v1370 = vmul.f32 %v1367, %v1369
      %v1371 = vadd.f32 %v1367, %v1370
      %vm1372 = vweird.f32 %v1365
      %vm1373 = vweird.f32 %v1367
      %vm1374 = vmor %vm1372, %vm1373
      %v1375 = vsel %vm1374, %v1367, %v1371
      %v1376 = vand.u32 2147483647, %v1365
      %vm1377 = vcmp.eq.f32.partialorder %v1376, 8.507059e+37
      %v1378 = vand.u32 %v1365, 2147483648
      %v1379 = vor.u32 1.1754944e-38, %v1378
      %v1380 = vsel %vm1377, %v1379, %v1375
      %v1381 = vmul.f32 1.0, %v1380
      %v1382 = vrcp.pop %v1366
      %v1383 = vmul.f32 %v1366, %v1382
      %v1384 = vsub.f32 1.0, %v1383
      %v1385 = vmul.f32 %v1382, %v1384
      %v1386 = vadd.f32 %v1382, %v1385
      %vm1387 = vweird.f32 %v1366
      %vm1388 = vweird.f32 %v1382
      %vm1389 = vmor %vm1387, %vm1388
      %v1390 = vsel %vm1389, %v1382, %v1386
      %v1391 = vand.u32 2147483647, %v1366
      %vm1392 = vcmp.eq.f32.partialorder %v1391, 8.507059e+37
      %v1393 = vand.u32 %v1366, 2147483648
      %v1394 = vor.u32 1.1754944e-38, %v1393
      %v1395 = vsel %vm1392, %v1394, %v1390
      %v1396 = vmul.f32 1.0, %v1395
      %v1397 = vmul.f32 %v1331, %v1381
      %v1398 = vmul.f32 %v1346, %v1396
      %1401 = vst [vmem:[#allocation1] ss:$2 sm:$0xff] %v1397
      %s1402 = scalar_lea.vmem [#allocation1], 16
      %1403 = vst [vmem:[%s1402] ss:$2 sm:$0xff] %v1398
      %v1404 = vld.sshfl [vmem:[#allocation1] sm:$0xff pattern:$0x75316420]
      %v1405 = vld.sshfl [vmem:[#allocation1 + $0x8] sm:$0xff pattern:$0x75316420]
      %v1406 = vld.sshfl [vmem:[#allocation1 + $0x10] sm:$0xff pattern:$0x75316420]
      %v1410 = vpack.c.bf16 %v1405, %v1404
      %v1411 = vpack.c.bf16 %v1406, %v1406
      %v1414 = vrot.slane %v1410, 2
      %v1415 = vrot.slane %v1411, 4
      %v1416 = vrot.slane %v1411, 6
      %v1419 = vsel %vm668, %v1410, %v1414
      %v1422 = vsel %vm672, %v1415, %v1416
      %v1423 = vsel %vm676, %v1419, %v1422
      %1425 = vrot.lane.b32.xlu0 %v1423, 111
      %v1426 = vpop.permute.xlu0 %1425
      %v1427 = vrot.slane %v1426, 2
      %v1428 = vsel %vm1147, %v1426, %v1427
      %1430 = vst [vmem:[#allocation3 + $0x2] sm:$0xf] %v1428
      %v1431 = vld [vmem:[%s6] sm:$0x3]
      %v1432 = vld [vmem:[%s7] sm:$0xf]
      %v1433 = vld [vmem:[#allocation3] sm:$0x3f]
      %v1434 = vunpack.c.l.bf16 %v1433
      %v1435 = vunpack.c.h.bf16 %v1433
      %1436 = vrot.lane.b32.xlu0 %v922, 111
      %v1437 = vpop.permute.xlu0 %1436
      %v1438 = vrot.slane %v1437, 4
      %vm1439 = vcmask 908288
      %v1440 = vsel %vm1439, %v1438, %v1437
      %v1443 = vmul.f32 %v1434, %v1440
      %v1444 = vmul.f32 %v1435, %v1438
      %1447 = vst [vmem:[#allocation1] ss:$2 sm:$0xff] %v1443
      %s1448 = scalar_lea.vmem [#allocation1], 16
      %1449 = vst [vmem:[%s1448] ss:$2 sm:$0xff] %v1444
      %v1450 = vld.sshfl [vmem:[#allocation1] sm:$0xff pattern:$0x75316420]
      %v1451 = vld.sshfl [vmem:[#allocation1 + $0x8] sm:$0xff pattern:$0x75316420]
      %v1452 = vld.sshfl [vmem:[#allocation1 + $0x10] sm:$0xff pattern:$0x75316420]
      %v1456 = vpack.c.bf16 %v1451, %v1450
      %v1457 = vpack.c.bf16 %v1452, %v1452
      %v1458 = vld [vmem:[#allocation3] sm:$0x3f]
      %v1459 = vunpack.c.l.bf16 %v1458
      %v1460 = vunpack.c.h.bf16 %v1458
      %1461 = vrot.lane.b32.xlu0 %v950, 113
      %v1462 = vpop.permute.xlu0 %1461
      %v1463 = vrot.slane %v1462, 4
      %vm1464 = vcmask 924672
      %v1465 = vsel %vm1464, %v1463, %v1462
      %v1468 = vmul.f32 %v1459, %v1465
      %v1469 = vmul.f32 %v1460, %v1463
      %1472 = vst [vmem:[#allocation1] ss:$2 sm:$0xff] %v1468
      %s1473 = scalar_lea.vmem [#allocation1], 16
      %1474 = vst [vmem:[%s1473] ss:$2 sm:$0xff] %v1469
      %v1475 = vld.sshfl [vmem:[#allocation1] sm:$0xff pattern:$0x75316420]
      %v1476 = vld.sshfl [vmem:[#allocation1 + $0x8] sm:$0xff pattern:$0x75316420]
      %v1477 = vld.sshfl [vmem:[#allocation1 + $0x10] sm:$0xff pattern:$0x75316420]
      %v1481 = vpack.c.bf16 %v1476, %v1475
      %v1482 = vpack.c.bf16 %v1477, %v1477
      %v1483 = vld [vmem:[#allocation3] sm:$0x3f]
      %v1484 = vunpack.c.l.bf16 %v1483
      %v1485 = vunpack.c.h.bf16 %v1483
      %1486 = vrot.lane.b32.xlu0 %v922, 127
      %v1487 = vpop.permute.xlu0 %1486
      %v1488 = vrot.slane %v1487, 4
      %vm1489 = vcmask 1039360
      %v1490 = vsel %vm1489, %v1488, %v1487
      %v1493 = vmul.f32 %v1484, %v1490
      %v1494 = vmul.f32 %v1485, %v1488
      %1497 = vst [vmem:[#allocation1] ss:$2 sm:$0xff] %v1493
      %s1498 = scalar_lea.vmem [#allocation1], 16
      %1499 = vst [vmem:[%s1498] ss:$2 sm:$0xff] %v1494
      %v1500 = vld.sshfl [vmem:[#allocation1] sm:$0xff pattern:$0x75316420]
      %v1501 = vld.sshfl [vmem:[#allocation1 + $0x8] sm:$0xff pattern:$0x75316420]
      %v1502 = vld.sshfl [vmem:[#allocation1 + $0x10] sm:$0xff pattern:$0x75316420]
      %v1506 = vpack.c.bf16 %v1501, %v1500
      %v1507 = vpack.c.bf16 %v1502, %v1502
      %v1508 = vld [vmem:[#allocation3 + $0x2] sm:$0xf]
      %v1509 = vld [vmem:[#allocation3 + $0x2] sm:$0x3f]
      %v1510 = vunpack.c.l.bf16 %v1509
      %v1511 = vunpack.c.h.bf16 %v1509
      %1512 = vrot.lane.b32.xlu0 %v950, 1
      %v1513 = vpop.permute.xlu0 %1512
      %v1514 = vrot.slane %v1513, 4
      %vm1515 = vcmask 7168
      %v1516 = vsel %vm1515, %v1514, %v1513
      %v1519 = vmul.f32 %v1510, %v1516
      %v1520 = vmul.f32 %v1511, %v1514
      %1523 = vst [vmem:[#allocation1] ss:$2 sm:$0xff] %v1519
      %s1524 = scalar_lea.vmem [#allocation1], 16
      %1525 = vst [vmem:[%s1524] ss:$2 sm:$0xff] %v1520
      %v1526 = vld.sshfl [vmem:[#allocation1] sm:$0xff pattern:$0x75316420]
      %v1527 = vld.sshfl [vmem:[#allocation1 + $0x8] sm:$0xff pattern:$0x75316420]
      %v1528 = vld.sshfl [vmem:[#allocation1 + $0x10] sm:$0xff pattern:$0x75316420]
      %v1532 = vpack.c.bf16 %v1527, %v1526
      %v1533 = vpack.c.bf16 %v1528, %v1528
      %v1534 = vld [vmem:[#allocation3 + $0x2] sm:$0x3f]
      %v1535 = vunpack.c.l.bf16 %v1534
      %v1536 = vunpack.c.h.bf16 %v1534
      %1537 = vrot.lane.b32.xlu0 %v922, 15
      %v1538 = vpop.permute.xlu0 %1537
      %v1539 = vrot.slane %v1538, 4
      %vm1540 = vcmask 121856
      %v1541 = vsel %vm1540, %v1539, %v1538
      %v1544 = vmul.f32 %v1535, %v1541
      %v1545 = vmul.f32 %v1536, %v1539
      %1548 = vst [vmem:[#allocation1] ss:$2 sm:$0xff] %v1544
      %s1549 = scalar_lea.vmem [#allocation1], 16
      %1550 = vst [vmem:[%s1549] ss:$2 sm:$0xff] %v1545
      %v1551 = vld.sshfl [vmem:[#allocation1] sm:$0xff pattern:$0x75316420]
      %v1552 = vld.sshfl [vmem:[#allocation1 + $0x8] sm:$0xff pattern:$0x75316420]
      %v1553 = vld.sshfl [vmem:[#allocation1 + $0x10] sm:$0xff pattern:$0x75316420]
      %v1557 = vpack.c.bf16 %v1552, %v1551
      %v1558 = vpack.c.bf16 %v1553, %v1553
      %v1559 = vld [vmem:[#allocation3 + $0x2] sm:$0x3f]
      %v1560 = vunpack.c.l.bf16 %v1559
      %v1561 = vunpack.c.h.bf16 %v1559
      %1562 = vrot.lane.b32.xlu0 %v950, 17
      %v1563 = vpop.permute.xlu0 %1562
      %v1564 = vrot.slane %v1563, 4
      %v1565 = vsel %vm1303, %v1564, %v1563
      %v1568 = vmul.f32 %v1560, %v1565
      %v1569 = vmul.f32 %v1561, %v1564
      %1572 = vst [vmem:[#allocation1] ss:$2 sm:$0xff] %v1568
      %s1573 = scalar_lea.vmem [#allocation1], 16
      %1574 = vst [vmem:[%s1573] ss:$2 sm:$0xff] %v1569
      %v1575 = vld.sshfl [vmem:[#allocation1] sm:$0xff pattern:$0x75316420]
      %v1576 = vld.sshfl [vmem:[#allocation1 + $0x8] sm:$0xff pattern:$0x75316420]
      %v1577 = vld.sshfl [vmem:[#allocation1 + $0x10] sm:$0xff pattern:$0x75316420]
      %v1581 = vpack.c.bf16 %v1576, %v1575
      %v1582 = vpack.c.bf16 %v1577, %v1577
      %v1585 = vunpack.c.l.b16 %v1456
      %v1586 = vunpack.c.h.b16 %v1456
      %v1587 = vunpack.c.l.b16 %v1457
      %v1588 = vpack.c.b16 %v1585, %v1585
      %v1589 = vpack.c.b16 %v1586, %v1586
      %v1590 = vpack.c.b16 %v1587, %v1587
      %s1592 = scalar_lea.vmem [#allocation1], 1
      %1593 = vst [vmem:[%s1592] ss:$4 sm:$0xff] %v1458
      %v1594 = vld.sshfl [vmem:[#allocation1] sm:$0xff pattern:$0x73625140]
      %v1596 = vld.sshfl [vmem:[#allocation1 + $0x8] sm:$0xff pattern:$0x73625140]
      %v1598 = vld.sshfl [vmem:[#allocation1 + $0x10] sm:$0xff pattern:$0x73625140]
      %1600 = vrot.lane.b32.xlu0 %v1594, 127
      %v1601 = vpop.permute.xlu0 %1600
      %1602 = vrot.lane.b32.xlu0 %v1596, 127
      %v1603 = vpop.permute.xlu0 %1602
      %1604 = vrot.lane.b32.xlu0 %v1598, 127
      %v1605 = vpop.permute.xlu0 %1604
      %v1606 = vsel %vm1093, %v1601, %v1603
      %v1607 = vsel %vm1093, %v1603, %v1605
      %v1610 = vunpack.c.l.b16 %v1481
      %v1611 = vunpack.c.h.b16 %v1481
      %v1612 = vunpack.c.l.b16 %v1482
      %v1613 = vpack.c.b16 %v1610, %v1610
      %v1614 = vpack.c.b16 %v1611, %v1611
      %v1615 = vpack.c.b16 %v1612, %v1612
      %1616 = vrot.lane.b32.xlu0 %v1613, 126
      %v1617 = vpop.permute.xlu0 %1616
      %1618 = vrot.lane.b32.xlu0 %v1614, 126
      %v1619 = vpop.permute.xlu0 %1618
      %1620 = vrot.lane.b32.xlu0 %v1615, 126
      %v1621 = vpop.permute.xlu0 %1620
      %v1622 = vsel %vm1110, %v1617, %v1619
      %v1623 = vsel %vm1110, %v1619, %v1621
      %v1626 = vunpack.c.l.b16 %v1506
      %v1627 = vunpack.c.h.b16 %v1506
      %v1628 = vunpack.c.l.b16 %v1507
      %v1629 = vpack.c.b16 %v1626, %v1626
      %v1630 = vpack.c.b16 %v1627, %v1627
      %v1631 = vpack.c.b16 %v1628, %v1628
      %v1632 = vrot.slane %v1629, 2
      %v1633 = vrot.slane %v1630, 2
      %v1634 = vrot.slane %v1631, 2
      %1635 = vrot.lane.b32.xlu0 %v1632, 112
      %v1636 = vpop.permute.xlu0 %1635
      %1637 = vrot.lane.b32.xlu0 %v1633, 112
      %v1638 = vpop.permute.xlu0 %1637
      %1639 = vrot.lane.b32.xlu0 %v1634, 112
      %v1640 = vpop.permute.xlu0 %1639
      %v1641 = vsel %vm1130, %v1636, %v1638
      %v1642 = vsel %vm1130, %v1638, %v1640
      %1644 = vst [vmem:[#allocation1] ss:$4 sm:$0xff] %v1508
      %v1645 = vld.sshfl [vmem:[#allocation1] sm:$0xff pattern:$0x73625140]
      %v1647 = vld.sshfl [vmem:[#allocation1 + $0x8] sm:$0xff pattern:$0x73625140]
      %1649 = vrot.lane.b32.xlu0 %v1645, 111
      %v1650 = vpop.permute.xlu0 %1649
      %1651 = vrot.lane.b32.xlu0 %v1647, 111
      %v1652 = vpop.permute.xlu0 %1651
      %v1653 = vsel %vm1147, %v1650, %v1652
      %v1656 = vunpack.c.l.b16 %v1532
      %v1657 = vunpack.c.h.b16 %v1532
      %v1658 = vunpack.c.l.b16 %v1533
      %v1659 = vpack.c.b16 %v1656, %v1656
      %v1660 = vpack.c.b16 %v1657, %v1657
      %v1661 = vpack.c.b16 %v1658, %v1658
      %v1662 = vrot.slane %v1659, 6
      %v1663 = vrot.slane %v1660, 6
      %v1664 = vrot.slane %v1661, 6
      %1665 = vrot.lane.b32.xlu0 %v1662, 110
      %v1666 = vpop.permute.xlu0 %1665
      %1667 = vrot.lane.b32.xlu0 %v1663, 110
      %v1668 = vpop.permute.xlu0 %1667
      %1669 = vrot.lane.b32.xlu0 %v1664, 110
      %v1670 = vpop.permute.xlu0 %1669
      %v1671 = vsel %vm1167, %v1666, %v1668
      %v1672 = vsel %vm1167, %v1668, %v1670
      %v1675 = vunpack.c.l.b16 %v1557
      %v1676 = vunpack.c.h.b16 %v1557
      %v1677 = vunpack.c.l.b16 %v1558
      %v1678 = vpack.c.b16 %v1675, %v1675
      %v1679 = vpack.c.b16 %v1676, %v1676
      %v1680 = vpack.c.b16 %v1677, %v1677
      %1681 = vrot.lane.b32.xlu0 %v1678, 96
      %v1682 = vpop.permute.xlu0 %1681
      %1683 = vrot.lane.b32.xlu0 %v1679, 96
      %v1684 = vpop.permute.xlu0 %1683
      %1685 = vrot.lane.b32.xlu0 %v1680, 96
      %v1686 = vpop.permute.xlu0 %1685
      %v1687 = vsel %vm1184, %v1682, %v1684
      %v1688 = vsel %vm1184, %v1684, %v1686
      %s1690 = scalar_lea.vmem [#allocation1], 3
      %1691 = vst [vmem:[%s1690] ss:$4 sm:$0xff] %v1559
      %v1692 = vld.sshfl [vmem:[#allocation1] sm:$0xff pattern:$0x73625140]
      %v1694 = vld.sshfl [vmem:[#allocation1 + $0x8] sm:$0xff pattern:$0x73625140]
      %v1696 = vld.sshfl [vmem:[#allocation1 + $0x10] sm:$0xff pattern:$0x73625140]
      %1698 = vrot.lane.b32.xlu0 %v1692, 95
      %v1699 = vpop.permute.xlu0 %1698
      %1700 = vrot.lane.b32.xlu0 %v1694, 95
      %v1701 = vpop.permute.xlu0 %1700
      %1702 = vrot.lane.b32.xlu0 %v1696, 95
      %v1703 = vpop.permute.xlu0 %1702
      %v1704 = vsel %vm1202, %v1699, %v1701
      %v1705 = vsel %vm1202, %v1701, %v1703
      %v1708 = vunpack.c.l.b16 %v1581
      %v1709 = vunpack.c.h.b16 %v1581
      %v1710 = vunpack.c.l.b16 %v1582
      %v1711 = vpack.c.b16 %v1708, %v1708
      %v1712 = vpack.c.b16 %v1709, %v1709
      %v1713 = vpack.c.b16 %v1710, %v1710
      %1714 = vrot.lane.b32.xlu0 %v1711, 94
      %v1715 = vpop.permute.xlu0 %1714
      %1716 = vrot.lane.b32.xlu0 %v1712, 94
      %v1717 = vpop.permute.xlu0 %1716
      %1718 = vrot.lane.b32.xlu0 %v1713, 94
      %v1719 = vpop.permute.xlu0 %1718
      %v1720 = vsel %vm1219, %v1715, %v1717
      %v1721 = vsel %vm1219, %v1717, %v1719
      %v1724 = vsel %vm668, %v1588, %v1606
      %v1727 = vsel %vm668, %v1589, %v1607
      %v1730 = vsel %vm668, %v1590, %v1605
      %v1732 = vsel %vm676, %v1724, %v1622
      %v1734 = vsel %vm676, %v1727, %v1623
      %v1736 = vsel %vm676, %v1730, %v1621
      %v1738 = vsel %vm787, %v1732, %v1641
      %v1740 = vsel %vm787, %v1734, %v1642
      %v1742 = vsel %vm787, %v1736, %v1640
      %v1745 = vsel %vm668, %v1650, %v1666
      %v1748 = vsel %vm668, %v1653, %v1671
      %v1751 = vsel %vm668, %v1652, %v1672
      %v1753 = vsel %vm676, %v1745, %v1682
      %v1755 = vsel %vm676, %v1748, %v1687
      %v1757 = vsel %vm676, %v1751, %v1688
      %v1759 = vsel %vm787, %v1753, %v1699
      %v1761 = vsel %vm787, %v1755, %v1704
      %v1763 = vsel %vm787, %v1757, %v1705
      %1765 = vset.pattern.permute.xlu0 0
      %1766 = vperm.xlu0 %1765, %v1432
      %v1767 = vpop.permute.xlu0 %1766
      %1775 = vrot.lane.b32.xlu0 %v1738, 17
      %v1776 = vpop.permute.xlu0 %1775
      %1777 = vrot.lane.b32.xlu0 %v1740, 17
      %v1778 = vpop.permute.xlu0 %1777
      %1779 = vrot.lane.b32.xlu0 %v1742, 17
      %v1780 = vpop.permute.xlu0 %1779
      %1781 = vrot.lane.b32.xlu0 %v1759, 17
      %v1782 = vpop.permute.xlu0 %1781
      %1783 = vrot.lane.b32.xlu0 %v1761, 17
      %v1784 = vpop.permute.xlu0 %1783
      %1785 = vrot.lane.b32.xlu0 %v1763, 17
      %v1786 = vpop.permute.xlu0 %1785
      %1787 = vrot.lane.b32.xlu0 %v1715, 17
      %v1788 = vpop.permute.xlu0 %1787
      %1789 = vrot.lane.b32.xlu0 %v1720, 17
      %v1790 = vpop.permute.xlu0 %1789
      %1791 = vrot.lane.b32.xlu0 %v1721, 17
      %v1792 = vpop.permute.xlu0 %1791
      %vm1793 = vcmask 138240
      %v1794 = vsel %vm1793, %v1776, %v1778
      %v1795 = vsel %vm1793, %v1778, %v1780
      %v1796 = vsel %vm1793, %v1782, %v1784
      %v1797 = vsel %vm1793, %v1784, %v1786
      %v1798 = vsel %vm1793, %v1788, %v1790
      %v1799 = vsel %vm1793, %v1790, %v1792
      %v1805 = vsel %vm804, %v1431, 0
      %v1808 = vsel %vm668, %v1798, 0
      %v1811 = vsel %vm668, %v1799, 0
      %1813 = vmatpush.bf16.msra.mxu0 0
      %1814 = vmatpush.bf16.msra.mxu0 0
      %1815 = vmatpush.bf16.msra.mxu0 0
      %1816 = vmatpush.bf16.msra.mxu0 0
      %1817 = vmatpush.bf16.msra.mxu0 0
      %1818 = vmatpush.bf16.msra.mxu0 %v1808
      %1819 = vmatpush.bf16.msra.mxu0 %v1796
      %1820 = vmatpush.bf16.msra.mxu0 %v1794
      %1821 = vmatmul.bf16.gmra.mxu0 %v1805
      %v1822 = vpop.f32.mrf.mxu0
      %v1823 = vadd.f32 %v1767, %v1822
      %v1824 = vpop.f32.mrf.mxu0
      %1825 = vdwg.mxu0
      %1826 = vmatpush.bf16.msra.mxu0 0
      %1827 = vmatpush.bf16.msra.mxu0 0
      %1828 = vmatpush.bf16.msra.mxu0 0
      %1829 = vmatpush.bf16.msra.mxu0 0
      %1830 = vmatpush.bf16.msra.mxu0 0
      %1831 = vmatpush.bf16.msra.mxu0 %v1811
      %1832 = vmatpush.bf16.msra.mxu0 %v1797
      %1833 = vmatpush.bf16.msra.mxu0 %v1795
      %1834 = vmatmul.bf16.gmra.mxu0 %v1805
      %v1835 = vpop.f32.mrf.mxu0
      %v1836 = vadd.f32 %v1767, %v1835
      %v1837 = vpop.f32.mrf.mxu0
      %1838 = vdwg.mxu0
      %v1839 = vpack.c.bf16 %v1836, %v1823
      %v1841 = vrot.slane %v1839, 2
      %v1844 = vsel %vm668, %v1839, %v1841
      %1846 = vst [vmem:[#allocation5 + $0x2] sm:$0xf] %v1844
      %v1847 = vld [vmem:[#allocation2] sm:$0x3f]
      %v1848 = vld [vmem:[%s10] sm:$0x3]
      %v1849 = vld [vmem:[%s11] sm:$0xf]
      %1851 = vset.pattern.permute.xlu0 0
      %1852 = vperm.xlu0 %1851, %v1849
      %v1853 = vpop.permute.xlu0 %1852
      %1856 = vst [vmem:[#allocation1] ss:$4 sm:$0xff] %v1847
      %v1857 = vld.sshfl [vmem:[#allocation1] sm:$0xff pattern:$0x73625140]
      %v1859 = vld.sshfl [vmem:[#allocation1 + $0x8] sm:$0xff pattern:$0x73625140]
      %v1861 = vld.sshfl [vmem:[#allocation1 + $0x10] sm:$0xff pattern:$0x73625140]
      %1863 = vrot.lane.b32.xlu0 %v1857, 111
      %v1864 = vpop.permute.xlu0 %1863
      %1865 = vrot.lane.b32.xlu0 %v1859, 111
      %v1866 = vpop.permute.xlu0 %1865
      %1867 = vrot.lane.b32.xlu0 %v1861, 111
      %v1868 = vpop.permute.xlu0 %1867
      %v1869 = vsel %vm1147, %v1864, %v1866
      %v1870 = vsel %vm1147, %v1866, %v1868
      %vm1871 = vcmask 31744
      %v1873 = vsel %vm1871, %v1848, 0
      %v1876 = vsel %vm668, %v1869, 0
      %v1879 = vsel %vm668, %v1870, 0
      %1881 = vmatpush.bf16.msra.mxu0 0
      %1882 = vmatpush.bf16.msra.mxu0 0
      %1883 = vmatpush.bf16.msra.mxu0 0
      %1884 = vmatpush.bf16.msra.mxu0 0
      %1885 = vmatpush.bf16.msra.mxu0 0
      %1886 = vmatpush.bf16.msra.mxu0 0
      %1887 = vmatpush.bf16.msra.mxu0 0
      %1888 = vmatpush.bf16.msra.mxu0 %v1876
      %1889 = vmatmul.bf16.gmra.mxu0 %v1873
      %v1890 = vpop.f32.mrf.mxu0
      %v1891 = vadd.f32 %v1853, %v1890
      %v1892 = vpop.f32.mrf.mxu0
      %1893 = vdwg.mxu0
      %1894 = vmatpush.bf16.msra.mxu0 0
      %1895 = vmatpush.bf16.msra.mxu0 0
      %1896 = vmatpush.bf16.msra.mxu0 0
      %1897 = vmatpush.bf16.msra.mxu0 0
      %1898 = vmatpush.bf16.msra.mxu0 0
      %1899 = vmatpush.bf16.msra.mxu0 0
      %1900 = vmatpush.bf16.msra.mxu0 0
      %1901 = vmatpush.bf16.msra.mxu0 %v1879
      %1902 = vmatmul.bf16.gmra.mxu0 %v1873
      %v1903 = vpop.f32.mrf.mxu0
      %v1904 = vadd.f32 %v1853, %v1903
      %v1905 = vpop.f32.mrf.mxu0
      %1906 = vdwg.mxu0
      %v1907 = vmax.f32 %v1891, 0.0
      %v1908 = vmax.f32 %v1904, 0.0
      %v1909 = vld [vmem:[%s8] sm:$0x3]
      %v1910 = vld [vmem:[%s9] sm:$0xf]
      %v1911 = vld [vmem:[#allocation2] sm:$0xf]
      %v1912 = vunpack.c.l.bf16 %v1911
      %v1913 = vmul.f32 %v1912, %v922
      %1915 = vst [vmem:[#allocation1] ss:$2 sm:$0xff] %v1913
      %v1916 = vld.sshfl [vmem:[#allocation1] sm:$0xff pattern:$0x75316420]
      %v1917 = vld.sshfl [vmem:[#allocation1 + $0x8] sm:$0xff pattern:$0x75316420]
      %v1920 = vpack.c.bf16 %v1917, %v1916
      %v1921 = vld [vmem:[#allocation2] sm:$0x3f]
      %v1922 = vunpack.c.l.bf16 %v1921
      %v1923 = vunpack.c.h.bf16 %v1921
      %v1924 = vmul.f32 %v1922, %v955
      %v1925 = vmul.f32 %v1923, %v953
      %1928 = vst [vmem:[#allocation1] ss:$2 sm:$0xff] %v1924
      %s1929 = scalar_lea.vmem [#allocation1], 16
      %1930 = vst [vmem:[%s1929] ss:$2 sm:$0xff] %v1925
      %v1931 = vld.sshfl [vmem:[#allocation1] sm:$0xff pattern:$0x75316420]
      %v1932 = vld.sshfl [vmem:[#allocation1 + $0x8] sm:$0xff pattern:$0x75316420]
      %v1933 = vld.sshfl [vmem:[#allocation1 + $0x10] sm:$0xff pattern:$0x75316420]
      %v1937 = vpack.c.bf16 %v1932, %v1931
      %v1938 = vpack.c.bf16 %v1933, %v1933
      %v1939 = vld [vmem:[#allocation2] sm:$0x3f]
      %v1940 = vunpack.c.l.bf16 %v1939
      %v1941 = vunpack.c.h.bf16 %v1939
      %v1942 = vmul.f32 %v1940, %v980
      %v1943 = vmul.f32 %v1941, %v978
      %1946 = vst [vmem:[#allocation1] ss:$2 sm:$0xff] %v1942
      %s1947 = scalar_lea.vmem [#allocation1], 16
      %1948 = vst [vmem:[%s1947] ss:$2 sm:$0xff] %v1943
      %v1949 = vld.sshfl [vmem:[#allocation1] sm:$0xff pattern:$0x75316420]
      %v1950 = vld.sshfl [vmem:[#allocation1 + $0x8] sm:$0xff pattern:$0x75316420]
      %v1951 = vld.sshfl [vmem:[#allocation1 + $0x10] sm:$0xff pattern:$0x75316420]
      %v1955 = vpack.c.bf16 %v1950, %v1949
      %v1956 = vpack.c.bf16 %v1951, %v1951
      %v1957 = vld [vmem:[#allocation2] sm:$0x3f]
      %v1958 = vunpack.c.l.bf16 %v1957
      %v1959 = vunpack.c.h.bf16 %v1957
      %v1960 = vmul.f32 %v1958, %v1005
      %v1961 = vmul.f32 %v1959, %v1003
      %1964 = vst [vmem:[#allocation1] ss:$2 sm:$0xff] %v1960
      %s1965 = scalar_lea.vmem [#allocation1], 16
      %1966 = vst [vmem:[%s1965] ss:$2 sm:$0xff] %v1961
      %v1967 = vld.sshfl [vmem:[#allocation1] sm:$0xff pattern:$0x75316420]
      %v1968 = vld.sshfl [vmem:[#allocation1 + $0x8] sm:$0xff pattern:$0x75316420]
      %v1969 = vld.sshfl [vmem:[#allocation1 + $0x10] sm:$0xff pattern:$0x75316420]
      %v1973 = vpack.c.bf16 %v1968, %v1967
      %v1974 = vpack.c.bf16 %v1969, %v1969
      %v1975 = vld [vmem:[#allocation2] sm:$0x3f]
      %v1976 = vunpack.c.l.bf16 %v1975
      %v1977 = vunpack.c.h.bf16 %v1975
      %v1978 = vmul.f32 %v1976, %v1030
      %v1979 = vmul.f32 %v1977, %v1028
      %1982 = vst [vmem:[#allocation1] ss:$2 sm:$0xff] %v1978
      %s1983 = scalar_lea.vmem [#allocation1], 16
      %1984 = vst [vmem:[%s1983] ss:$2 sm:$0xff] %v1979
      %v1985 = vld.sshfl [vmem:[#allocation1] sm:$0xff pattern:$0x75316420]
      %v1986 = vld.sshfl [vmem:[#allocation1 + $0x8] sm:$0xff pattern:$0x75316420]
      %v1987 = vld.sshfl [vmem:[#allocation1 + $0x10] sm:$0xff pattern:$0x75316420]
      %v1991 = vpack.c.bf16 %v1986, %v1985
      %v1992 = vpack.c.bf16 %v1987, %v1987
      %v1993 = vld [vmem:[#allocation2] sm:$0x3f]
      %v1994 = vunpack.c.l.bf16 %v1993
      %v1995 = vunpack.c.h.bf16 %v1993
      %v1996 = vmul.f32 %v1994, %v1055
      %v1997 = vmul.f32 %v1995, %v1053
      %2000 = vst [vmem:[#allocation1] ss:$2 sm:$0xff] %v1996
      %s2001 = scalar_lea.vmem [#allocation1], 16
      %2002 = vst [vmem:[%s2001] ss:$2 sm:$0xff] %v1997
      %v2003 = vld.sshfl [vmem:[#allocation1] sm:$0xff pattern:$0x75316420]
      %v2004 = vld.sshfl [vmem:[#allocation1 + $0x8] sm:$0xff pattern:$0x75316420]
      %v2005 = vld.sshfl [vmem:[#allocation1 + $0x10] sm:$0xff pattern:$0x75316420]
      %v2009 = vpack.c.bf16 %v2004, %v2003
      %v2010 = vpack.c.bf16 %v2005, %v2005
      %v2012 = vunpack.c.l.b16 %v1920
      %v2013 = vunpack.c.h.b16 %v1920
      %v2014 = vpack.c.b16 %v2012, %v2012
      %v2015 = vpack.c.b16 %v2013, %v2013
      %s2017 = scalar_lea.vmem [#allocation1], 1
      %2018 = vst [vmem:[%s2017] ss:$4 sm:$0xff] %v1921
      %v2019 = vld.sshfl [vmem:[#allocation1] sm:$0xff pattern:$0x73625140]
      %v2021 = vld.sshfl [vmem:[#allocation1 + $0x8] sm:$0xff pattern:$0x73625140]
      %v2023 = vld.sshfl [vmem:[#allocation1 + $0x10] sm:$0xff pattern:$0x73625140]
      %2025 = vrot.lane.b32.xlu0 %v2019, 127
      %v2026 = vpop.permute.xlu0 %2025
      %2027 = vrot.lane.b32.xlu0 %v2021, 127
      %v2028 = vpop.permute.xlu0 %2027
      %2029 = vrot.lane.b32.xlu0 %v2023, 127
      %v2030 = vpop.permute.xlu0 %2029
      %v2031 = vsel %vm1093, %v2026, %v2028
      %v2032 = vsel %vm1093, %v2028, %v2030
      %v2035 = vunpack.c.l.b16 %v1937
      %v2036 = vunpack.c.h.b16 %v1937
      %v2037 = vunpack.c.l.b16 %v1938
      %v2038 = vpack.c.b16 %v2035, %v2035
      %v2039 = vpack.c.b16 %v2036, %v2036
      %v2040 = vpack.c.b16 %v2037, %v2037
      %2041 = vrot.lane.b32.xlu0 %v2038, 126
      %v2042 = vpop.permute.xlu0 %2041
      %2043 = vrot.lane.b32.xlu0 %v2039, 126
      %v2044 = vpop.permute.xlu0 %2043
      %2045 = vrot.lane.b32.xlu0 %v2040, 126
      %v2046 = vpop.permute.xlu0 %2045
      %v2047 = vsel %vm1110, %v2042, %v2044
      %v2048 = vsel %vm1110, %v2044, %v2046
      %v2051 = vunpack.c.l.b16 %v1955
      %v2052 = vunpack.c.h.b16 %v1955
      %v2053 = vunpack.c.l.b16 %v1956
      %v2054 = vpack.c.b16 %v2051, %v2051
      %v2055 = vpack.c.b16 %v2052, %v2052
      %v2056 = vpack.c.b16 %v2053, %v2053
      %v2057 = vrot.slane %v2054, 2
      %v2058 = vrot.slane %v2055, 2
      %v2059 = vrot.slane %v2056, 2
      %2060 = vrot.lane.b32.xlu0 %v2057, 112
      %v2061 = vpop.permute.xlu0 %2060
      %2062 = vrot.lane.b32.xlu0 %v2058, 112
      %v2063 = vpop.permute.xlu0 %2062
      %2064 = vrot.lane.b32.xlu0 %v2059, 112
      %v2065 = vpop.permute.xlu0 %2064
      %v2066 = vsel %vm1130, %v2061, %v2063
      %v2067 = vsel %vm1130, %v2063, %v2065
      %2068 = vst [vmem:[#allocation1] ss:$4 sm:$0xff] %v1847
      %v2069 = vld.sshfl [vmem:[#allocation1] sm:$0xff pattern:$0x73625140]
      %v2071 = vld.sshfl [vmem:[#allocation1 + $0x8] sm:$0xff pattern:$0x73625140]
      %v2073 = vld.sshfl [vmem:[#allocation1 + $0x10] sm:$0xff pattern:$0x73625140]
      %2075 = vrot.lane.b32.xlu0 %v2069, 111
      %v2076 = vpop.permute.xlu0 %2075
      %2077 = vrot.lane.b32.xlu0 %v2071, 111
      %v2078 = vpop.permute.xlu0 %2077
      %2079 = vrot.lane.b32.xlu0 %v2073, 111
      %v2080 = vpop.permute.xlu0 %2079
      %v2081 = vsel %vm1147, %v2076, %v2078
      %v2082 = vsel %vm1147, %v2078, %v2080
      %v2085 = vunpack.c.l.b16 %v1973
      %v2086 = vunpack.c.h.b16 %v1973
      %v2087 = vunpack.c.l.b16 %v1974
      %v2088 = vpack.c.b16 %v2085, %v2085
      %v2089 = vpack.c.b16 %v2086, %v2086
      %v2090 = vpack.c.b16 %v2087, %v2087
      %v2091 = vrot.slane %v2088, 6
      %v2092 = vrot.slane %v2089, 6
      %v2093 = vrot.slane %v2090, 6
      %2094 = vrot.lane.b32.xlu0 %v2091, 110
      %v2095 = vpop.permute.xlu0 %2094
      %2096 = vrot.lane.b32.xlu0 %v2092, 110
      %v2097 = vpop.permute.xlu0 %2096
      %2098 = vrot.lane.b32.xlu0 %v2093, 110
      %v2099 = vpop.permute.xlu0 %2098
      %v2100 = vsel %vm1167, %v2095, %v2097
      %v2101 = vsel %vm1167, %v2097, %v2099
      %v2104 = vunpack.c.l.b16 %v1991
      %v2105 = vunpack.c.h.b16 %v1991
      %v2106 = vunpack.c.l.b16 %v1992
      %v2107 = vpack.c.b16 %v2104, %v2104
      %v2108 = vpack.c.b16 %v2105, %v2105
      %v2109 = vpack.c.b16 %v2106, %v2106
      %2110 = vrot.lane.b32.xlu0 %v2107, 96
      %v2111 = vpop.permute.xlu0 %2110
      %2112 = vrot.lane.b32.xlu0 %v2108, 96
      %v2113 = vpop.permute.xlu0 %2112
      %2114 = vrot.lane.b32.xlu0 %v2109, 96
      %v2115 = vpop.permute.xlu0 %2114
      %v2116 = vsel %vm1184, %v2111, %v2113
      %v2117 = vsel %vm1184, %v2113, %v2115
      %s2119 = scalar_lea.vmem [#allocation1], 3
      %2120 = vst [vmem:[%s2119] ss:$4 sm:$0xff] %v1993
      %v2121 = vld.sshfl [vmem:[#allocation1] sm:$0xff pattern:$0x73625140]
      %v2123 = vld.sshfl [vmem:[#allocation1 + $0x8] sm:$0xff pattern:$0x73625140]
      %v2125 = vld.sshfl [vmem:[#allocation1 + $0x10] sm:$0xff pattern:$0x73625140]
      %2127 = vrot.lane.b32.xlu0 %v2121, 95
      %v2128 = vpop.permute.xlu0 %2127
      %2129 = vrot.lane.b32.xlu0 %v2123, 95
      %v2130 = vpop.permute.xlu0 %2129
      %2131 = vrot.lane.b32.xlu0 %v2125, 95
      %v2132 = vpop.permute.xlu0 %2131
      %v2133 = vsel %vm1202, %v2128, %v2130
      %v2134 = vsel %vm1202, %v2130, %v2132
      %v2137 = vunpack.c.l.b16 %v2009
      %v2138 = vunpack.c.h.b16 %v2009
      %v2139 = vunpack.c.l.b16 %v2010
      %v2140 = vpack.c.b16 %v2137, %v2137
      %v2141 = vpack.c.b16 %v2138, %v2138
      %v2142 = vpack.c.b16 %v2139, %v2139
      %2143 = vrot.lane.b32.xlu0 %v2140, 94
      %v2144 = vpop.permute.xlu0 %2143
      %2145 = vrot.lane.b32.xlu0 %v2141, 94
      %v2146 = vpop.permute.xlu0 %2145
      %2147 = vrot.lane.b32.xlu0 %v2142, 94
      %v2148 = vpop.permute.xlu0 %2147
      %v2149 = vsel %vm1219, %v2144, %v2146
      %v2150 = vsel %vm1219, %v2146, %v2148
      %v2153 = vsel %vm668, %v2014, %v2031
      %v2156 = vsel %vm668, %v2015, %v2032
      %v2158 = vsel %vm676, %v2153, %v2047
      %v2160 = vsel %vm676, %v2156, %v2048
      %v2162 = vsel %vm787, %v2158, %v2066
      %v2165 = vsel %vm787, %v2160, %v2067
      %v2169 = vsel %vm668, %v2081, %v2100
      %v2172 = vsel %vm668, %v2082, %v2101
      %v2174 = vsel %vm676, %v2169, %v2116
      %v2176 = vsel %vm676, %v2172, %v2117
      %v2178 = vsel %vm787, %v2174, %v2133
      %v2181 = vsel %vm787, %v2176, %v2134
      %2184 = vset.pattern.permute.xlu0 0
      %2185 = vperm.xlu0 %2184, %v1910
      %v2186 = vpop.permute.xlu0 %2185
      %v2189 = vsel %vm804, %v1909, 0
      %v2192 = vsel %vm668, %v2149, 0
      %v2195 = vsel %vm668, %v2150, 0
      %2197 = vmatpush.bf16.msra.mxu0 0
      %2198 = vmatpush.bf16.msra.mxu0 0
      %2199 = vmatpush.bf16.msra.mxu0 0
      %2200 = vmatpush.bf16.msra.mxu0 0
      %2201 = vmatpush.bf16.msra.mxu0 0
      %2202 = vmatpush.bf16.msra.mxu0 %v2192
      %2203 = vmatpush.bf16.msra.mxu0 %v2178
      %2204 = vmatpush.bf16.msra.mxu0 %v2162
      %2205 = vmatmul.bf16.gmra.mxu0 %v2189
      %v2206 = vpop.f32.mrf.mxu0
      %v2207 = vadd.f32 %v2186, %v2206
      %v2208 = vpop.f32.mrf.mxu0
      %2209 = vdwg.mxu0
      %2210 = vmatpush.bf16.msra.mxu0 0
      %2211 = vmatpush.bf16.msra.mxu0 0
      %2212 = vmatpush.bf16.msra.mxu0 0
      %2213 = vmatpush.bf16.msra.mxu0 0
      %2214 = vmatpush.bf16.msra.mxu0 0
      %2215 = vmatpush.bf16.msra.mxu0 %v2195
      %2216 = vmatpush.bf16.msra.mxu0 %v2181
      %2217 = vmatpush.bf16.msra.mxu0 %v2165
      %2218 = vmatmul.bf16.gmra.mxu0 %v2189
      %v2219 = vpop.f32.mrf.mxu0
      %v2220 = vadd.f32 %v2186, %v2219
      %v2221 = vpop.f32.mrf.mxu0
      %2222 = vdwg.mxu0
      %v2223 = vld [vmem:[%s12] sm:$0x3]
      %v2224 = vpack.c.bf16 %v1907, %v1907
      %v2225 = vpack.c.bf16 %v1908, %v1908
      %v2227 = vsel %vm1871, %v2223, 0
      %v2230 = vsel %vm668, %v2224, 0
      %v2233 = vsel %vm668, %v2225, 0
      %2235 = vmatpush.bf16.msra.mxu0 0
      %2236 = vmatpush.bf16.msra.mxu0 0
      %2237 = vmatpush.bf16.msra.mxu0 0
      %2238 = vmatpush.bf16.msra.mxu0 0
      %2239 = vmatpush.bf16.msra.mxu0 0
      %2240 = vmatpush.bf16.msra.mxu0 0
      %2241 = vmatpush.bf16.msra.mxu0 0
      %2242 = vmatpush.bf16.msra.mxu0 %v2230
      %2243 = vmatmul.bf16.gmra.mxu0 %v2227
      %v2244 = vpop.f32.mrf.mxu0
      %v2245 = vadd.f32 0.0, %v2244
      %v2246 = vpop.f32.mrf.mxu0
      %2247 = vdwg.mxu0
      %2248 = vmatpush.bf16.msra.mxu0 0
      %2249 = vmatpush.bf16.msra.mxu0 0
      %2250 = vmatpush.bf16.msra.mxu0 0
      %2251 = vmatpush.bf16.msra.mxu0 0
      %2252 = vmatpush.bf16.msra.mxu0 0
      %2253 = vmatpush.bf16.msra.mxu0 0
      %2254 = vmatpush.bf16.msra.mxu0 0
      %2255 = vmatpush.bf16.msra.mxu0 %v2233
      %2256 = vmatmul.bf16.gmra.mxu0 %v2227
      %v2257 = vpop.f32.mrf.mxu0
      %v2258 = vadd.f32 0.0, %v2257
      %v2259 = vpop.f32.mrf.mxu0
      %2260 = vdwg.mxu0
      %v2261 = vadd.f32 %v2207, %v2245
      %v2262 = vadd.f32 %v2220, %v2258
      %v2263 = vsel %vm676, %v2261, -inf
      %v2264 = vrot.slane %v2263, 4
      %v2265 = vmax.f32 %v2263, %v2264
      %v2266 = vrot.slane %v2265, 2
      %v2267 = vmax.f32 %v2265, %v2266
      %v2268 = vrot.slane %v2267, 1
      %v2269 = vmax.f32 %v2267, %v2268
      %v2270 = vsel %vm676, %v2262, -inf
      %v2271 = vrot.slane %v2270, 4
      %v2272 = vmax.f32 %v2270, %v2271
      %v2273 = vrot.slane %v2272, 2
      %v2274 = vmax.f32 %v2272, %v2273
      %v2275 = vrot.slane %v2274, 1
      %v2276 = vmax.f32 %v2274, %v2275
      %v2277 = vsub.f32 %v2261, %v2269
      %v2278 = vsub.f32 %v2262, %v2276
      %v2279 = vmul.f32 %v2277, 1.442695
      %v2280 = vpow.pop %v2279
      %v2281 = vmul.f32 %v2278, 1.442695
      %v2282 = vpow.pop %v2281
      %v2283 = vsel %vm676, %v2280, 0.0
      %v2284 = vrot.slane %v2283, 4
      %v2285 = vadd.f32 %v2283, %v2284
      %v2286 = vrot.slane %v2285, 2
      %v2287 = vadd.f32 %v2285, %v2286
      %v2288 = vrot.slane %v2287, 1
      %v2289 = vadd.f32 %v2287, %v2288
      %v2290 = vsel %vm676, %v2282, 0.0
      %v2291 = vrot.slane %v2290, 4
      %v2292 = vadd.f32 %v2290, %v2291
      %v2293 = vrot.slane %v2292, 2
      %v2294 = vadd.f32 %v2292, %v2293
      %v2295 = vrot.slane %v2294, 1
      %v2296 = vadd.f32 %v2294, %v2295
      %v2297 = vrcp.pop %v2289
      %v2298 = vmul.f32 %v2289, %v2297
      %v2299 = vsub.f32 1.0, %v2298
      %v2300 = vmul.f32 %v2297, %v2299
      %v2301 = vadd.f32 %v2297, %v2300
      %vm2302 = vweird.f32 %v2289
      %vm2303 = vweird.f32 %v2297
      %vm2304 = vmor %vm2302, %vm2303
      %v2305 = vsel %vm2304, %v2297, %v2301
      %v2306 = vand.u32 2147483647, %v2289
      %vm2307 = vcmp.eq.f32.partialorder %v2306, 8.507059e+37
      %v2308 = vand.u32 %v2289, 2147483648
      %v2309 = vor.u32 1.1754944e-38, %v2308
      %v2310 = vsel %vm2307, %v2309, %v2305
      %v2311 = vrcp.pop %v2296
      %v2312 = vmul.f32 %v2296, %v2311
      %v2313 = vsub.f32 1.0, %v2312
      %v2314 = vmul.f32 %v2311, %v2313
      %v2315 = vadd.f32 %v2311, %v2314
      %vm2316 = vweird.f32 %v2296
      %vm2317 = vweird.f32 %v2311
      %vm2318 = vmor %vm2316, %vm2317
      %v2319 = vsel %vm2318, %v2311, %v2315
      %v2320 = vand.u32 2147483647, %v2296
      %vm2321 = vcmp.eq.f32.partialorder %v2320, 8.507059e+37
      %v2322 = vand.u32 %v2296, 2147483648
      %v2323 = vor.u32 1.1754944e-38, %v2322
      %v2324 = vsel %vm2321, %v2323, %v2319
      %v2325 = vmul.f32 %v2280, %v2310
      %v2326 = vmul.f32 %v2282, %v2324
      %v2327 = vpack.c.bf16 %v2326, %v2325
      %v2329 = vrot.slane %v2327, 2
      %v2332 = vsel %vm668, %v2327, %v2329
      %2334 = vst [vmem:[#allocation4 + $0x2] sm:$0xf] %v2332
      %v2335 = vld [vmem:[%s13] sm:$0x3]
      %v2336 = vld [vmem:[%s14] sm:$0xf]
      %v2337 = vld [vmem:[#allocation4] sm:$0x3f]
      %v2338 = vunpack.c.l.bf16 %v2337
      %v2339 = vunpack.c.h.bf16 %v2337
      %v2340 = vmul.f32 %v2338, %v1440
      %v2341 = vmul.f32 %v2339, %v1438
      %2344 = vst [vmem:[#allocation1] ss:$2 sm:$0xff] %v2340
      %s2345 = scalar_lea.vmem [#allocation1], 16
      %2346 = vst [vmem:[%s2345] ss:$2 sm:$0xff] %v2341
      %v2347 = vld.sshfl [vmem:[#allocation1] sm:$0xff pattern:$0x75316420]
      %v2348 = vld.sshfl [vmem:[#allocation1 + $0x8] sm:$0xff pattern:$0x75316420]
      %v2349 = vld.sshfl [vmem:[#allocation1 + $0x10] sm:$0xff pattern:$0x75316420]
      %v2353 = vpack.c.bf16 %v2348, %v2347
      %v2354 = vpack.c.bf16 %v2349, %v2349
      %v2355 = vld [vmem:[#allocation5] sm:$0x3f]
      %v2356 = vunpack.c.l.bf16 %v2355
      %v2357 = vunpack.c.h.bf16 %v2355
      %v2358 = vmul.f32 %v2356, %v1440
      %v2359 = vmul.f32 %v2357, %v1438
      %2362 = vst [vmem:[#allocation1] ss:$2 sm:$0xff] %v2358
      %s2363 = scalar_lea.vmem [#allocation1], 16
      %2364 = vst [vmem:[%s2363] ss:$2 sm:$0xff] %v2359
      %v2365 = vld.sshfl [vmem:[#allocation1] sm:$0xff pattern:$0x75316420]
      %v2366 = vld.sshfl [vmem:[#allocation1 + $0x8] sm:$0xff pattern:$0x75316420]
      %v2367 = vld.sshfl [vmem:[#allocation1 + $0x10] sm:$0xff pattern:$0x75316420]
      %v2371 = vpack.c.bf16 %v2366, %v2365
      %v2372 = vpack.c.bf16 %v2367, %v2367
      %v2373 = vld [vmem:[#allocation4] sm:$0x3f]
      %v2374 = vld [vmem:[#allocation5] sm:$0x3f]
      %v2375 = vunpack.c.l.bf16 %v2373
      %v2376 = vunpack.c.h.bf16 %v2373
      %v2377 = vmul.f32 %v2375, %v1465
      %v2378 = vmul.f32 %v2376, %v1463
      %2381 = vst [vmem:[#allocation1] ss:$2 sm:$0xff] %v2377
      %s2382 = scalar_lea.vmem [#allocation1], 16
      %2383 = vst [vmem:[%s2382] ss:$2 sm:$0xff] %v2378
      %v2384 = vld.sshfl [vmem:[#allocation1] sm:$0xff pattern:$0x75316420]
      %v2385 = vld.sshfl [vmem:[#allocation1 + $0x8] sm:$0xff pattern:$0x75316420]
      %v2386 = vld.sshfl [vmem:[#allocation1 + $0x10] sm:$0xff pattern:$0x75316420]
      %v2390 = vpack.c.bf16 %v2385, %v2384
      %v2391 = vpack.c.bf16 %v2386, %v2386
      %v2392 = vld [vmem:[#allocation5] sm:$0x3f]
      %v2393 = vunpack.c.l.bf16 %v2392
      %v2394 = vunpack.c.h.bf16 %v2392
      %v2395 = vmul.f32 %v2393, %v1465
      %v2396 = vmul.f32 %v2394, %v1463
      %2399 = vst [vmem:[#allocation1] ss:$2 sm:$0xff] %v2395
      %s2400 = scalar_lea.vmem [#allocation1], 16
      %2401 = vst [vmem:[%s2400] ss:$2 sm:$0xff] %v2396
      %v2402 = vld.sshfl [vmem:[#allocation1] sm:$0xff pattern:$0x75316420]
      %v2403 = vld.sshfl [vmem:[#allocation1 + $0x8] sm:$0xff pattern:$0x75316420]
      %v2404 = vld.sshfl [vmem:[#allocation1 + $0x10] sm:$0xff pattern:$0x75316420]
      %v2408 = vpack.c.bf16 %v2403, %v2402
      %v2409 = vpack.c.bf16 %v2404, %v2404
      %v2410 = vld [vmem:[#allocation4] sm:$0x3f]
      %v2411 = vunpack.c.l.bf16 %v2410
      %v2412 = vunpack.c.h.bf16 %v2410
      %v2413 = vmul.f32 %v2411, %v1490
      %v2414 = vmul.f32 %v2412, %v1488
      %2417 = vst [vmem:[#allocation1] ss:$2 sm:$0xff] %v2413
      %s2418 = scalar_lea.vmem [#allocation1], 16
      %2419 = vst [vmem:[%s2418] ss:$2 sm:$0xff] %v2414
      %v2420 = vld.sshfl [vmem:[#allocation1] sm:$0xff pattern:$0x75316420]
      %v2421 = vld.sshfl [vmem:[#allocation1 + $0x8] sm:$0xff pattern:$0x75316420]
      %v2422 = vld.sshfl [vmem:[#allocation1 + $0x10] sm:$0xff pattern:$0x75316420]
      %v2426 = vpack.c.bf16 %v2421, %v2420
      %v2427 = vpack.c.bf16 %v2422, %v2422
      %v2428 = vld [vmem:[#allocation5] sm:$0x3f]
      %v2429 = vunpack.c.l.bf16 %v2428
      %v2430 = vunpack.c.h.bf16 %v2428
      %v2431 = vmul.f32 %v2429, %v1490
      %v2432 = vmul.f32 %v2430, %v1488
      %2435 = vst [vmem:[#allocation1] ss:$2 sm:$0xff] %v2431
      %s2436 = scalar_lea.vmem [#allocation1], 16
      %2437 = vst [vmem:[%s2436] ss:$2 sm:$0xff] %v2432
      %v2438 = vld.sshfl [vmem:[#allocation1] sm:$0xff pattern:$0x75316420]
      %v2439 = vld.sshfl [vmem:[#allocation1 + $0x8] sm:$0xff pattern:$0x75316420]
      %v2440 = vld.sshfl [vmem:[#allocation1 + $0x10] sm:$0xff pattern:$0x75316420]
      %v2444 = vpack.c.bf16 %v2439, %v2438
      %v2445 = vpack.c.bf16 %v2440, %v2440
      %v2446 = vld [vmem:[#allocation4 + $0x2] sm:$0xf]
      %v2447 = vld [vmem:[#allocation5 + $0x2] sm:$0xf]
      %v2448 = vld [vmem:[#allocation4 + $0x2] sm:$0x3f]
      %v2449 = vunpack.c.l.bf16 %v2448
      %v2450 = vunpack.c.h.bf16 %v2448
      %v2451 = vmul.f32 %v2449, %v1516
      %v2452 = vmul.f32 %v2450, %v1514
      %2455 = vst [vmem:[#allocation1] ss:$2 sm:$0xff] %v2451
      %s2456 = scalar_lea.vmem [#allocation1], 16
      %2457 = vst [vmem:[%s2456] ss:$2 sm:$0xff] %v2452
      %v2458 = vld.sshfl [vmem:[#allocation1] sm:$0xff pattern:$0x75316420]
      %v2459 = vld.sshfl [vmem:[#allocation1 + $0x8] sm:$0xff pattern:$0x75316420]
      %v2460 = vld.sshfl [vmem:[#allocation1 + $0x10] sm:$0xff pattern:$0x75316420]
      %v2464 = vpack.c.bf16 %v2459, %v2458
      %v2465 = vpack.c.bf16 %v2460, %v2460
      %v2466 = vld [vmem:[#allocation5 + $0x2] sm:$0x3f]
      %v2467 = vunpack.c.l.bf16 %v2466
      %v2468 = vunpack.c.h.bf16 %v2466
      %v2469 = vmul.f32 %v2467, %v1516
      %v2470 = vmul.f32 %v2468, %v1514
      %2473 = vst [vmem:[#allocation1] ss:$2 sm:$0xff] %v2469
      %s2474 = scalar_lea.vmem [#allocation1], 16
      %2475 = vst [vmem:[%s2474] ss:$2 sm:$0xff] %v2470
      %v2476 = vld.sshfl [vmem:[#allocation1] sm:$0xff pattern:$0x75316420]
      %v2477 = vld.sshfl [vmem:[#allocation1 + $0x8] sm:$0xff pattern:$0x75316420]
      %v2478 = vld.sshfl [vmem:[#allocation1 + $0x10] sm:$0xff pattern:$0x75316420]
      %v2482 = vpack.c.bf16 %v2477, %v2476
      %v2483 = vpack.c.bf16 %v2478, %v2478
      %v2484 = vld [vmem:[#allocation4 + $0x2] sm:$0x3f]
      %v2485 = vunpack.c.l.bf16 %v2484
      %v2486 = vunpack.c.h.bf16 %v2484
      %v2487 = vmul.f32 %v2485, %v1541
      %v2488 = vmul.f32 %v2486, %v1539
      %2491 = vst [vmem:[#allocation1] ss:$2 sm:$0xff] %v2487
      %s2492 = scalar_lea.vmem [#allocation1], 16
      %2493 = vst [vmem:[%s2492] ss:$2 sm:$0xff] %v2488
      %v2494 = vld.sshfl [vmem:[#allocation1] sm:$0xff pattern:$0x75316420]
      %v2495 = vld.sshfl [vmem:[#allocation1 + $0x8] sm:$0xff pattern:$0x75316420]
      %v2496 = vld.sshfl [vmem:[#allocation1 + $0x10] sm:$0xff pattern:$0x75316420]
      %v2500 = vpack.c.bf16 %v2495, %v2494
      %v2501 = vpack.c.bf16 %v2496, %v2496
      %v2502 = vld [vmem:[#allocation5 + $0x2] sm:$0x3f]
      %v2503 = vunpack.c.l.bf16 %v2502
      %v2504 = vunpack.c.h.bf16 %v2502
      %v2505 = vmul.f32 %v2503, %v1541
      %v2506 = vmul.f32 %v2504, %v1539
      %2509 = vst [vmem:[#allocation1] ss:$2 sm:$0xff] %v2505
      %s2510 = scalar_lea.vmem [#allocation1], 16
      %2511 = vst [vmem:[%s2510] ss:$2 sm:$0xff] %v2506
      %v2512 = vld.sshfl [vmem:[#allocation1] sm:$0xff pattern:$0x75316420]
      %v2513 = vld.sshfl [vmem:[#allocation1 + $0x8] sm:$0xff pattern:$0x75316420]
      %v2514 = vld.sshfl [vmem:[#allocation1 + $0x10] sm:$0xff pattern:$0x75316420]
      %v2518 = vpack.c.bf16 %v2513, %v2512
      %v2519 = vpack.c.bf16 %v2514, %v2514
      %v2520 = vld [vmem:[#allocation4 + $0x2] sm:$0x3f]
      %v2521 = vld [vmem:[#allocation5 + $0x2] sm:$0x3f]
      %v2522 = vunpack.c.l.bf16 %v2520
      %v2523 = vunpack.c.h.bf16 %v2520
      %v2524 = vmul.f32 %v2522, %v1565
      %v2525 = vmul.f32 %v2523, %v1564
      %2528 = vst [vmem:[#allocation1] ss:$2 sm:$0xff] %v2524
      %s2529 = scalar_lea.vmem [#allocation1], 16
      %2530 = vst [vmem:[%s2529] ss:$2 sm:$0xff] %v2525
      %v2531 = vld.sshfl [vmem:[#allocation1] sm:$0xff pattern:$0x75316420]
      %v2532 = vld.sshfl [vmem:[#allocation1 + $0x8] sm:$0xff pattern:$0x75316420]
      %v2533 = vld.sshfl [vmem:[#allocation1 + $0x10] sm:$0xff pattern:$0x75316420]
      %v2537 = vpack.c.bf16 %v2532, %v2531
      %v2538 = vpack.c.bf16 %v2533, %v2533
      %v2539 = vld [vmem:[#allocation5 + $0x2] sm:$0x3f]
      %v2540 = vunpack.c.l.bf16 %v2539
      %v2541 = vunpack.c.h.bf16 %v2539
      %v2542 = vmul.f32 %v2540, %v1565
      %v2543 = vmul.f32 %v2541, %v1564
      %2546 = vst [vmem:[#allocation1] ss:$2 sm:$0xff] %v2542
      %s2547 = scalar_lea.vmem [#allocation1], 16
      %2548 = vst [vmem:[%s2547] ss:$2 sm:$0xff] %v2543
      %v2549 = vld.sshfl [vmem:[#allocation1] sm:$0xff pattern:$0x75316420]
      %v2550 = vld.sshfl [vmem:[#allocation1 + $0x8] sm:$0xff pattern:$0x75316420]
      %v2551 = vld.sshfl [vmem:[#allocation1 + $0x10] sm:$0xff pattern:$0x75316420]
      %v2555 = vpack.c.bf16 %v2550, %v2549
      %v2556 = vpack.c.bf16 %v2551, %v2551
      %v2559 = vunpack.c.l.b16 %v2353
      %v2560 = vunpack.c.h.b16 %v2353
      %v2561 = vunpack.c.l.b16 %v2354
      %v2562 = vpack.c.b16 %v2559, %v2559
      %v2563 = vpack.c.b16 %v2560, %v2560
      %v2564 = vpack.c.b16 %v2561, %v2561
      %v2567 = vunpack.c.l.b16 %v2371
      %v2568 = vunpack.c.h.b16 %v2371
      %v2569 = vunpack.c.l.b16 %v2372
      %v2570 = vpack.c.b16 %v2567, %v2567
      %v2571 = vpack.c.b16 %v2568, %v2568
      %v2572 = vpack.c.b16 %v2569, %v2569
      %v2573 = vrot.slane %v2570, 6
      %v2574 = vrot.slane %v2571, 6
      %v2575 = vrot.slane %v2572, 6
      %s2577 = scalar_lea.vmem [#allocation1], 2
      %2578 = vst [vmem:[%s2577] ss:$4 sm:$0xff] %v2373
      %v2579 = vld.sshfl [vmem:[#allocation1] sm:$0xff pattern:$0x73625140]
      %v2581 = vld.sshfl [vmem:[#allocation1 + $0x8] sm:$0xff pattern:$0x73625140]
      %v2583 = vld.sshfl [vmem:[#allocation1 + $0x10] sm:$0xff pattern:$0x73625140]
      %2585 = vrot.lane.b32.xlu0 %v2579, 127
      %v2586 = vpop.permute.xlu0 %2585
      %2587 = vrot.lane.b32.xlu0 %v2581, 127
      %v2588 = vpop.permute.xlu0 %2587
      %2589 = vrot.lane.b32.xlu0 %v2583, 127
      %v2590 = vpop.permute.xlu0 %2589
      %v2591 = vsel %vm1093, %v2586, %v2588
      %v2592 = vsel %vm1093, %v2588, %v2590
      %s2594 = scalar_lea.vmem [#allocation1], 3
      %2595 = vst [vmem:[%s2594] ss:$4 sm:$0xff] %v2374
      %v2596 = vld.sshfl [vmem:[#allocation1] sm:$0xff pattern:$0x73625140]
      %v2598 = vld.sshfl [vmem:[#allocation1 + $0x8] sm:$0xff pattern:$0x73625140]
      %v2600 = vld.sshfl [vmem:[#allocation1 + $0x10] sm:$0xff pattern:$0x73625140]
      %2602 = vrot.lane.b32.xlu0 %v2596, 127
      %v2603 = vpop.permute.xlu0 %2602
      %2604 = vrot.lane.b32.xlu0 %v2598, 127
      %v2605 = vpop.permute.xlu0 %2604
      %2606 = vrot.lane.b32.xlu0 %v2600, 127
      %v2607 = vpop.permute.xlu0 %2606
      %v2608 = vsel %vm1093, %v2603, %v2605
      %v2609 = vsel %vm1093, %v2605, %v2607
      %v2612 = vunpack.c.l.b16 %v2390
      %v2613 = vunpack.c.h.b16 %v2390
      %v2614 = vunpack.c.l.b16 %v2391
      %v2615 = vpack.c.b16 %v2612, %v2612
      %v2616 = vpack.c.b16 %v2613, %v2613
      %v2617 = vpack.c.b16 %v2614, %v2614
      %2618 = vrot.lane.b32.xlu0 %v2615, 126
      %v2619 = vpop.permute.xlu0 %2618
      %2620 = vrot.lane.b32.xlu0 %v2616, 126
      %v2621 = vpop.permute.xlu0 %2620
      %2622 = vrot.lane.b32.xlu0 %v2617, 126
      %v2623 = vpop.permute.xlu0 %2622
      %v2624 = vsel %vm1110, %v2619, %v2621
      %v2625 = vsel %vm1110, %v2621, %v2623
      %v2628 = vunpack.c.l.b16 %v2408
      %v2629 = vunpack.c.h.b16 %v2408
      %v2630 = vunpack.c.l.b16 %v2409
      %v2631 = vpack.c.b16 %v2628, %v2628
      %v2632 = vpack.c.b16 %v2629, %v2629
      %v2633 = vpack.c.b16 %v2630, %v2630
      %v2634 = vrot.slane %v2631, 6
      %v2635 = vrot.slane %v2632, 6
      %v2636 = vrot.slane %v2633, 6
      %2637 = vrot.lane.b32.xlu0 %v2634, 126
      %v2638 = vpop.permute.xlu0 %2637
      %2639 = vrot.lane.b32.xlu0 %v2635, 126
      %v2640 = vpop.permute.xlu0 %2639
      %2641 = vrot.lane.b32.xlu0 %v2636, 126
      %v2642 = vpop.permute.xlu0 %2641
      %v2643 = vsel %vm1110, %v2638, %v2640
      %v2644 = vsel %vm1110, %v2640, %v2642
      %v2647 = vunpack.c.l.b16 %v2426
      %v2648 = vunpack.c.h.b16 %v2426
      %v2649 = vunpack.c.l.b16 %v2427
      %v2650 = vpack.c.b16 %v2647, %v2647
      %v2651 = vpack.c.b16 %v2648, %v2648
      %v2652 = vpack.c.b16 %v2649, %v2649
      %2653 = vrot.lane.b32.xlu0 %v2650, 112
      %v2654 = vpop.permute.xlu0 %2653
      %2655 = vrot.lane.b32.xlu0 %v2651, 112
      %v2656 = vpop.permute.xlu0 %2655
      %2657 = vrot.lane.b32.xlu0 %v2652, 112
      %v2658 = vpop.permute.xlu0 %2657
      %v2659 = vsel %vm1130, %v2654, %v2656
      %v2660 = vsel %vm1130, %v2656, %v2658
      %v2663 = vunpack.c.l.b16 %v2444
      %v2664 = vunpack.c.h.b16 %v2444
      %v2665 = vunpack.c.l.b16 %v2445
      %v2666 = vpack.c.b16 %v2663, %v2663
      %v2667 = vpack.c.b16 %v2664, %v2664
      %v2668 = vpack.c.b16 %v2665, %v2665
      %v2669 = vrot.slane %v2666, 2
      %v2670 = vrot.slane %v2667, 2
      %v2671 = vrot.slane %v2668, 2
      %2672 = vrot.lane.b32.xlu0 %v2669, 112
      %v2673 = vpop.permute.xlu0 %2672
      %2674 = vrot.lane.b32.xlu0 %v2670, 112
      %v2675 = vpop.permute.xlu0 %2674
      %2676 = vrot.lane.b32.xlu0 %v2671, 112
      %v2677 = vpop.permute.xlu0 %2676
      %v2678 = vsel %vm1130, %v2673, %v2675
      %v2679 = vsel %vm1130, %v2675, %v2677
      %2681 = vst [vmem:[#allocation1] ss:$4 sm:$0xff] %v2446
      %v2682 = vld.sshfl [vmem:[#allocation1] sm:$0xff pattern:$0x73625140]
      %v2684 = vld.sshfl [vmem:[#allocation1 + $0x8] sm:$0xff pattern:$0x73625140]
      %2686 = vrot.lane.b32.xlu0 %v2682, 111
      %v2687 = vpop.permute.xlu0 %2686
      %2688 = vrot.lane.b32.xlu0 %v2684, 111
      %v2689 = vpop.permute.xlu0 %2688
      %v2690 = vsel %vm1147, %v2687, %v2689
      %s2692 = scalar_lea.vmem [#allocation1], 1
      %2693 = vst [vmem:[%s2692] ss:$4 sm:$0xff] %v2447
      %v2694 = vld.sshfl [vmem:[#allocation1] sm:$0xff pattern:$0x73625140]
      %v2696 = vld.sshfl [vmem:[#allocation1 + $0x8] sm:$0xff pattern:$0x73625140]
      %2698 = vrot.lane.b32.xlu0 %v2694, 111
      %v2699 = vpop.permute.xlu0 %2698
      %2700 = vrot.lane.b32.xlu0 %v2696, 111
      %v2701 = vpop.permute.xlu0 %2700
      %v2702 = vsel %vm1147, %v2699, %v2701
      %v2705 = vunpack.c.l.b16 %v2464
      %v2706 = vunpack.c.h.b16 %v2464
      %v2707 = vunpack.c.l.b16 %v2465
      %v2708 = vpack.c.b16 %v2705, %v2705
      %v2709 = vpack.c.b16 %v2706, %v2706
      %v2710 = vpack.c.b16 %v2707, %v2707
      %2711 = vrot.lane.b32.xlu0 %v2708, 110
      %v2712 = vpop.permute.xlu0 %2711
      %2713 = vrot.lane.b32.xlu0 %v2709, 110
      %v2714 = vpop.permute.xlu0 %2713
      %2715 = vrot.lane.b32.xlu0 %v2710, 110
      %v2716 = vpop.permute.xlu0 %2715
      %v2717 = vsel %vm1167, %v2712, %v2714
      %v2718 = vsel %vm1167, %v2714, %v2716
      %v2721 = vunpack.c.l.b16 %v2482
      %v2722 = vunpack.c.h.b16 %v2482
      %v2723 = vunpack.c.l.b16 %v2483
      %v2724 = vpack.c.b16 %v2721, %v2721
      %v2725 = vpack.c.b16 %v2722, %v2722
      %v2726 = vpack.c.b16 %v2723, %v2723
      %v2727 = vrot.slane %v2724, 2
      %v2728 = vrot.slane %v2725, 2
      %v2729 = vrot.slane %v2726, 2
      %2730 = vrot.lane.b32.xlu0 %v2727, 110
      %v2731 = vpop.permute.xlu0 %2730
      %2732 = vrot.lane.b32.xlu0 %v2728, 110
      %v2733 = vpop.permute.xlu0 %2732
      %2734 = vrot.lane.b32.xlu0 %v2729, 110
      %v2735 = vpop.permute.xlu0 %2734
      %v2736 = vsel %vm1167, %v2731, %v2733
      %v2737 = vsel %vm1167, %v2733, %v2735
      %v2740 = vunpack.c.l.b16 %v2500
      %v2741 = vunpack.c.h.b16 %v2500
      %v2742 = vunpack.c.l.b16 %v2501
      %v2743 = vpack.c.b16 %v2740, %v2740
      %v2744 = vpack.c.b16 %v2741, %v2741
      %v2745 = vpack.c.b16 %v2742, %v2742
      %2746 = vrot.lane.b32.xlu0 %v2743, 96
      %v2747 = vpop.permute.xlu0 %2746
      %2748 = vrot.lane.b32.xlu0 %v2744, 96
      %v2749 = vpop.permute.xlu0 %2748
      %2750 = vrot.lane.b32.xlu0 %v2745, 96
      %v2751 = vpop.permute.xlu0 %2750
      %v2752 = vsel %vm1184, %v2747, %v2749
      %v2753 = vsel %vm1184, %v2749, %v2751
      %v2756 = vunpack.c.l.b16 %v2518
      %v2757 = vunpack.c.h.b16 %v2518
      %v2758 = vunpack.c.l.b16 %v2519
      %v2759 = vpack.c.b16 %v2756, %v2756
      %v2760 = vpack.c.b16 %v2757, %v2757
      %v2761 = vpack.c.b16 %v2758, %v2758
      %v2762 = vrot.slane %v2759, 6
      %v2763 = vrot.slane %v2760, 6
      %v2764 = vrot.slane %v2761, 6
      %2765 = vrot.lane.b32.xlu0 %v2762, 96
      %v2766 = vpop.permute.xlu0 %2765
      %2767 = vrot.lane.b32.xlu0 %v2763, 96
      %v2768 = vpop.permute.xlu0 %2767
      %2769 = vrot.lane.b32.xlu0 %v2764, 96
      %v2770 = vpop.permute.xlu0 %2769
      %v2771 = vsel %vm1184, %v2766, %v2768
      %v2772 = vsel %vm1184, %v2768, %v2770
      %s2774 = scalar_lea.vmem [#allocation1], 2
      %2775 = vst [vmem:[%s2774] ss:$4 sm:$0xff] %v2520
      %v2776 = vld.sshfl [vmem:[#allocation1] sm:$0xff pattern:$0x73625140]
      %v2778 = vld.sshfl [vmem:[#allocation1 + $0x8] sm:$0xff pattern:$0x73625140]
      %v2780 = vld.sshfl [vmem:[#allocation1 + $0x10] sm:$0xff pattern:$0x73625140]
      %2782 = vrot.lane.b32.xlu0 %v2776, 95
      %v2783 = vpop.permute.xlu0 %2782
      %2784 = vrot.lane.b32.xlu0 %v2778, 95
      %v2785 = vpop.permute.xlu0 %2784
      %2786 = vrot.lane.b32.xlu0 %v2780, 95
      %v2787 = vpop.permute.xlu0 %2786
      %v2788 = vsel %vm1202, %v2783, %v2785
      %v2789 = vsel %vm1202, %v2785, %v2787
      %s2791 = scalar_lea.vmem [#allocation1], 3
      %2792 = vst [vmem:[%s2791] ss:$4 sm:$0xff] %v2521
      %v2793 = vld.sshfl [vmem:[#allocation1] sm:$0xff pattern:$0x73625140]
      %v2795 = vld.sshfl [vmem:[#allocation1 + $0x8] sm:$0xff pattern:$0x73625140]
      %v2797 = vld.sshfl [vmem:[#allocation1 + $0x10] sm:$0xff pattern:$0x73625140]
      %2799 = vrot.lane.b32.xlu0 %v2793, 95
      %v2800 = vpop.permute.xlu0 %2799
      %2801 = vrot.lane.b32.xlu0 %v2795, 95
      %v2802 = vpop.permute.xlu0 %2801
      %2803 = vrot.lane.b32.xlu0 %v2797, 95
      %v2804 = vpop.permute.xlu0 %2803
      %v2805 = vsel %vm1202, %v2800, %v2802
      %v2806 = vsel %vm1202, %v2802, %v2804
      %v2809 = vsel %vm668, %v2562, %v2573
      %v2812 = vsel %vm668, %v2563, %v2574
      %v2815 = vsel %vm668, %v2564, %v2575
      %v2817 = vsel %vm676, %v2809, %v2591
      %v2819 = vsel %vm676, %v2812, %v2592
      %v2821 = vsel %vm676, %v2815, %v2590
      %v2823 = vsel %vm787, %v2817, %v2608
      %v2825 = vsel %vm787, %v2819, %v2609
      %v2827 = vsel %vm787, %v2821, %v2607
      %v2830 = vsel %vm668, %v2624, %v2643
      %v2833 = vsel %vm668, %v2625, %v2644
      %v2836 = vsel %vm668, %v2623, %v2642
      %v2838 = vsel %vm676, %v2830, %v2659
      %v2840 = vsel %vm676, %v2833, %v2660
      %v2842 = vsel %vm676, %v2836, %v2658
      %v2844 = vsel %vm787, %v2838, %v2678
      %v2846 = vsel %vm787, %v2840, %v2679
      %v2848 = vsel %vm787, %v2842, %v2677
      %v2851 = vsel %vm668, %v2687, %v2699
      %v2854 = vsel %vm668, %v2690, %v2702
      %v2857 = vsel %vm668, %v2689, %v2701
      %v2859 = vsel %vm676, %v2851, %v2712
      %v2861 = vsel %vm676, %v2854, %v2717
      %v2863 = vsel %vm676, %v2857, %v2718
      %v2865 = vsel %vm787, %v2859, %v2731
      %v2867 = vsel %vm787, %v2861, %v2736
      %v2869 = vsel %vm787, %v2863, %v2737
      %v2872 = vsel %vm668, %v2747, %v2766
      %v2875 = vsel %vm668, %v2752, %v2771
      %v2878 = vsel %vm668, %v2753, %v2772
      %v2880 = vsel %vm676, %v2872, %v2783
      %v2882 = vsel %vm676, %v2875, %v2788
      %v2884 = vsel %vm676, %v2878, %v2789
      %v2886 = vsel %vm787, %v2880, %v2800
      %v2888 = vsel %vm787, %v2882, %v2805
      %v2890 = vsel %vm787, %v2884, %v2806
      %v2893 = vunpack.c.l.b16 %v2537
      %v2894 = vunpack.c.h.b16 %v2537
      %v2895 = vunpack.c.l.b16 %v2538
      %v2896 = vpack.c.b16 %v2893, %v2893
      %v2897 = vpack.c.b16 %v2894, %v2894
      %v2898 = vpack.c.b16 %v2895, %v2895
      %v2901 = vunpack.c.l.b16 %v2555
      %v2902 = vunpack.c.h.b16 %v2555
      %v2903 = vunpack.c.l.b16 %v2556
      %v2904 = vpack.c.b16 %v2901, %v2901
      %v2905 = vpack.c.b16 %v2902, %v2902
      %v2906 = vpack.c.b16 %v2903, %v2903
      %v2907 = vrot.slane %v2904, 6
      %v2908 = vrot.slane %v2905, 6
      %v2909 = vrot.slane %v2906, 6
      %v2912 = vsel %vm668, %v2896, %v2907
      %v2915 = vsel %vm668, %v2897, %v2908
      %v2918 = vsel %vm668, %v2898, %v2909
      %2922 = vrot.lane.b32.xlu0 %v2912, 94
      %v2923 = vpop.permute.xlu0 %2922
      %2924 = vrot.lane.b32.xlu0 %v2915, 94
      %v2925 = vpop.permute.xlu0 %2924
      %2926 = vrot.lane.b32.xlu0 %v2918, 94
      %v2927 = vpop.permute.xlu0 %2926
      %v2928 = vsel %vm1219, %v2923, %v2925
      %v2929 = vsel %vm1219, %v2925, %v2927
      %2931 = vset.pattern.permute.xlu0 0
      %2932 = vperm.xlu0 %2931, %v2336
      %v2933 = vpop.permute.xlu0 %2932
      %2947 = vrot.lane.b32.xlu0 %v2823, 17
      %v2948 = vpop.permute.xlu0 %2947
      %2949 = vrot.lane.b32.xlu0 %v2825, 17
      %v2950 = vpop.permute.xlu0 %2949
      %2951 = vrot.lane.b32.xlu0 %v2827, 17
      %v2952 = vpop.permute.xlu0 %2951
      %2953 = vrot.lane.b32.xlu0 %v2844, 17
      %v2954 = vpop.permute.xlu0 %2953
      %2955 = vrot.lane.b32.xlu0 %v2846, 17
      %v2956 = vpop.permute.xlu0 %2955
      %2957 = vrot.lane.b32.xlu0 %v2848, 17
      %v2958 = vpop.permute.xlu0 %2957
      %2959 = vrot.lane.b32.xlu0 %v2865, 17
      %v2960 = vpop.permute.xlu0 %2959
      %2961 = vrot.lane.b32.xlu0 %v2867, 17
      %v2962 = vpop.permute.xlu0 %2961
      %2963 = vrot.lane.b32.xlu0 %v2869, 17
      %v2964 = vpop.permute.xlu0 %2963
      %2965 = vrot.lane.b32.xlu0 %v2886, 17
      %v2966 = vpop.permute.xlu0 %2965
      %2967 = vrot.lane.b32.xlu0 %v2888, 17
      %v2968 = vpop.permute.xlu0 %2967
      %2969 = vrot.lane.b32.xlu0 %v2890, 17
      %v2970 = vpop.permute.xlu0 %2969
      %2971 = vrot.lane.b32.xlu0 %v2923, 17
      %v2972 = vpop.permute.xlu0 %2971
      %2973 = vrot.lane.b32.xlu0 %v2928, 17
      %v2974 = vpop.permute.xlu0 %2973
      %2975 = vrot.lane.b32.xlu0 %v2929, 17
      %v2976 = vpop.permute.xlu0 %2975
      %v2977 = vsel %vm1793, %v2948, %v2950
      %v2978 = vsel %vm1793, %v2950, %v2952
      %v2979 = vsel %vm1793, %v2954, %v2956
      %v2980 = vsel %vm1793, %v2956, %v2958
      %v2981 = vsel %vm1793, %v2960, %v2962
      %v2982 = vsel %vm1793, %v2962, %v2964
      %v2983 = vsel %vm1793, %v2966, %v2968
      %v2984 = vsel %vm1793, %v2968, %v2970
      %v2985 = vsel %vm1793, %v2972, %v2974
      %v2986 = vsel %vm1793, %v2974, %v2976
      %vm2995 = vcmask 588800
      %v2997 = vsel %vm2995, %v2335, 0
      %v3000 = vsel %vm676, %v2985, 0
      %v3003 = vsel %vm676, %v2986, 0
      %3005 = vmatpush.bf16.msra.mxu0 0
      %3006 = vmatpush.bf16.msra.mxu0 0
      %3007 = vmatpush.bf16.msra.mxu0 0
      %3008 = vmatpush.bf16.msra.mxu0 %v3000
      %3009 = vmatpush.bf16.msra.mxu0 %v2983
      %3010 = vmatpush.bf16.msra.mxu0 %v2981
      %3011 = vmatpush.bf16.msra.mxu0 %v2979
      %3012 = vmatpush.bf16.msra.mxu0 %v2977
      %3013 = vmatmul.bf16.gmra.mxu0 %v2997
      %v3014 = vpop.f32.mrf.mxu0
      %v3015 = vadd.f32 %v2933, %v3014
      %v3016 = vpop.f32.mrf.mxu0
      %3017 = vdwg.mxu0
      %3018 = vmatpush.bf16.msra.mxu0 0
      %3019 = vmatpush.bf16.msra.mxu0 0
      %3020 = vmatpush.bf16.msra.mxu0 0
      %3021 = vmatpush.bf16.msra.mxu0 %v3003
      %3022 = vmatpush.bf16.msra.mxu0 %v2984
      %3023 = vmatpush.bf16.msra.mxu0 %v2982
      %3024 = vmatpush.bf16.msra.mxu0 %v2980
      %3025 = vmatpush.bf16.msra.mxu0 %v2978
      %3026 = vmatmul.bf16.gmra.mxu0 %v2997
      %v3027 = vpop.f32.mrf.mxu0
      %v3028 = vadd.f32 %v2933, %v3027
      %v3029 = vpop.f32.mrf.mxu0
      %3030 = vdwg.mxu0
      %v3031 = vmax.f32 %v3015, 0.0
      %v3032 = vmax.f32 %v3028, 0.0
      %v3033 = vsel %vm676, %v3031, -inf
      %v3034 = vrot.slane %v3033, 4
      %v3035 = vmax.f32 %v3033, %v3034
      %v3036 = vrot.slane %v3035, 2
      %v3037 = vmax.f32 %v3035, %v3036
      %v3038 = vrot.slane %v3037, 1
      %v3039 = vmax.f32 %v3037, %v3038
      %v3040 = vsel %vm676, %v3032, -inf
      %v3041 = vrot.slane %v3040, 4
      %v3042 = vmax.f32 %v3040, %v3041
      %v3043 = vrot.slane %v3042, 2
      %v3044 = vmax.f32 %v3042, %v3043
      %v3045 = vrot.slane %v3044, 1
      %v3046 = vmax.f32 %v3044, %v3045
      %v3047 = vsub.f32 %v3031, %v3039
      %v3048 = vsub.f32 %v3032, %v3046
      %v3049 = vmul.f32 %v3047, 1.442695
      %v3050 = vpow.pop %v3049
      %v3051 = vmul.f32 %v3048, 1.442695
      %v3052 = vpow.pop %v3051
      %v3053 = vsel %vm676, %v3050, 0.0
      %v3054 = vrot.slane %v3053, 4
      %v3055 = vadd.f32 %v3053, %v3054
      %v3056 = vrot.slane %v3055, 2
      %v3057 = vadd.f32 %v3055, %v3056
      %v3058 = vrot.slane %v3057, 1
      %v3059 = vadd.f32 %v3057, %v3058
      %v3060 = vsel %vm676, %v3052, 0.0
      %v3061 = vrot.slane %v3060, 4
      %v3062 = vadd.f32 %v3060, %v3061
      %v3063 = vrot.slane %v3062, 2
      %v3064 = vadd.f32 %v3062, %v3063
      %v3065 = vrot.slane %v3064, 1
      %v3066 = vadd.f32 %v3064, %v3065
      %v3067 = vrcp.pop %v3059
      %v3068 = vmul.f32 %v3059, %v3067
      %v3069 = vsub.f32 1.0, %v3068
      %v3070 = vmul.f32 %v3067, %v3069
      %v3071 = vadd.f32 %v3067, %v3070
      %vm3072 = vweird.f32 %v3059
      %vm3073 = vweird.f32 %v3067
      %vm3074 = vmor %vm3072, %vm3073
      %v3075 = vsel %vm3074, %v3067, %v3071
      %v3076 = vand.u32 2147483647, %v3059
      %vm3077 = vcmp.eq.f32.partialorder %v3076, 8.507059e+37
      %v3078 = vand.u32 %v3059, 2147483648
      %v3079 = vor.u32 1.1754944e-38, %v3078
      %v3080 = vsel %vm3077, %v3079, %v3075
      %v3081 = vrcp.pop %v3066
      %v3082 = vmul.f32 %v3066, %v3081
      %v3083 = vsub.f32 1.0, %v3082
      %v3084 = vmul.f32 %v3081, %v3083
      %v3085 = vadd.f32 %v3081, %v3084
      %vm3086 = vweird.f32 %v3066
      %vm3087 = vweird.f32 %v3081
      %vm3088 = vmor %vm3086, %vm3087
      %v3089 = vsel %vm3088, %v3081, %v3085
      %v3090 = vand.u32 2147483647, %v3066
      %vm3091 = vcmp.eq.f32.partialorder %v3090, 8.507059e+37
      %v3092 = vand.u32 %v3066, 2147483648
      %v3093 = vor.u32 1.1754944e-38, %v3092
      %v3094 = vsel %vm3091, %v3093, %v3089
      %v3095 = vmul.f32 %v3050, %v3080
      %v3096 = vmul.f32 %v3052, %v3094
      %v3099 = vrot.slane %v3096, 4
      %v3100 = vsel %vm676, %v3095, %v3099
      %3102 = vst [vmem:[%s646] sm:$0xff] %v3100
      %p3103 = scmp.lt.s32.totalorder %s31, 1
      %s3104 = scalar_select %p3103, %s31, 1
      %s3105 = smul.addr %s3104, 2
      %s3106 = smul.addr %s3105, 4
      %s3107 = scalar_lea.vmem %s20, %s3106
      // Predicated region
      $region101: #{bede_forward.1} parent=99 // pred_check
        %p3108 = pneg %p479
      $region102: #{bede_forward.1} parent=99 // pred_check_branch
        %3110 = sbr.rel (%p3108) target = $region104
      $region103: #{bede_forward.1} parent=99 // pred_region
        _
      $region104: #{bede_forward.1} parent=99 // pred_fallthru
        _
    $region100: #{bede_forward.1} parent=5 // pred_fallthru
      _
    %p3111 = scmp.le.s32.totalorder 2, %s26
    // Predicated region
    $region105: #{bede_forward.1} parent=5 // pred_check
      %p3112 = pneg %p3111
    $region106: #{bede_forward.1} parent=5 // pred_check_branch
      %3114 = sbr.rel (%p3112) target = $region108
    $region107: #{bede_forward.1} parent=5 // pred_region
      %s3115 = ssub.s32 %s26, 2
      // Predicated region
      $region109: #{bede_forward.1} parent=107 // pred_check
        %p3116 = pneg %p485
      $region110: #{bede_forward.1} parent=107 // pred_check_branch
        %3118 = sbr.rel (%p3116) target = $region112
      $region111: #{bede_forward.1} parent=107 // pred_region
        %p3119 = scmp.lt.s32.totalorder %s32, 1
        %s3120 = scalar_select %p3119, %s32, 1
        %s3121 = smul.addr %s3120, 2
        %s3122 = smul.addr %s3121, 4
        %s3123 = scalar_lea.vmem %s20, %s3122
      $region112: #{bede_forward.1} parent=107 // pred_fallthru
        _
    $region108: #{bede_forward.1} parent=5 // pred_fallthru
      _
  $region6: #{bede_forward.1} parent=0 // loop_footer
    %s30 = sadd.s32 1, %s26
  $region7: #{bede_forward.1} parent=0 // loop_footer_branch
    %25 = sbr.rel target = $region3
  $region8: #{bede_forward.1} parent=0 // loop_exit
    _

</llo_original>
